<compile_context>
chip_gen: v7x
topology: tpu7x:2x2x1
jax: 0.10.0
libtpu: 0.0.40
codegen_flags: <defaults>
</compile_context>

<pallas_src>
from math import ceil, floor

import numpy as np
import jax
import jax.numpy as jnp
from jax import lax
from jax.experimental import pallas as pl
from jax.experimental.pallas import tpu as pltpu

_EPS = 1e-5


# ----------------------------------------------------------------------------
# Fused encoder kernel: conv stack + optional label branch + fc_e, all in VMEM.
# ----------------------------------------------------------------------------
def _apply_last_nl(y, nl):
    if nl == "sigmoid":
        return jax.nn.sigmoid(y)
    if nl == "relu":
        return jnp.maximum(y, 0.0)
    if nl == "tanh":
        return jnp.tanh(y)
    return y


def _make_encoder_kernel(n_conv, has_label, last_nl):
    def kernel(*refs):
        o_ref = refs[-1]
        idx = 1
        lab_ref = None
        if has_label:
            lab_ref = refs[1]
            idx = 2

        # Cast once inside the kernel (input arrives as f32, no wrapper astype).
        h = refs[0][...].astype(jnp.bfloat16)            # (TB, H*W*C)

        # Conv stack: one lane-dense bf16 matmul per layer (BN scale already
        # folded into the weights), f32 accumulate, +shift, LeakyReLU(0.2).
        for l in range(n_conv):
            w_ref = refs[idx + 2 * l]
            s_ref = refs[idx + 2 * l + 1]
            acc = jnp.dot(h, w_ref[...], preferred_element_type=jnp.float32)
            acc = acc + s_ref[...]
            # LeakyReLU(0.2): max(x, 0.2x) == where(x>0, x, 0.2x)
            h = jnp.maximum(acc, 0.2 * acc).astype(jnp.bfloat16)
        idx += 2 * n_conv

        if has_label:
            wl_ref, sl_ref, wfi_ref, wfl_ref, sf_ref = refs[idx:idx + 5]
            # label_enc = relu(BN(fc_label(label)))  (BN folded into wl/sl)
            le = jnp.dot(lab_ref[...].astype(jnp.bfloat16), wl_ref[...],
                         preferred_element_type=jnp.float32) + sl_ref[...]
            le = jnp.maximum(le, 0.0).astype(jnp.bfloat16)
            # fc_e split by rows -> no in-kernel concatenate needed.
            y = (jnp.dot(h, wfi_ref[...], preferred_element_type=jnp.float32)
                 + jnp.dot(le, wfl_ref[...], preferred_element_type=jnp.float32)
                 + sf_ref[...])
        else:
            wfi_ref, sf_ref = refs[idx:idx + 2]
            y = jnp.dot(h, wfi_ref[...],
                        preferred_element_type=jnp.float32) + sf_ref[...]

        o_ref[...] = _apply_last_nl(y, last_nl).astype(o_ref.dtype)

    return kernel


# ----------------------------------------------------------------------------
# Generation-aware tiling / VMEM limits.
# ----------------------------------------------------------------------------
def _vmem_capacity_bytes():
    try:
        info = pltpu.get_tpu_info()
        cap = int(getattr(info, "vmem_capacity_bytes", 0)) or (64 << 20)
    except Exception:
        cap = 64 << 20            # conservative (v7x-sized) fallback
    return cap


def _vmem_limit_bytes(cap):
    # Leave headroom; 96 MiB on 128-MiB parts (v5e/v6e), 48 MiB on v7x.
    return int(min(max(cap - (16 << 20), 32 << 20), 96 << 20))


def _pick_batch_tile(batch, vmem_cap):
    """Batch tile: padded-to-tile policy. >=2 grid steps for batch >= 32
    (so megacore 'parallel' sharding has work on both TCs), tile capped by
    generation (bigger tiles on 128-MiB VMEM parts)."""
    cap = 512 if vmem_cap >= (96 << 20) else 256
    if batch < 32:
        return batch              # single step; padding/splitting buys nothing
    half = -(-batch // 2)         # ceil(batch / 2)
    return min(cap, ((half + 7) // 8) * 8)


# ----------------------------------------------------------------------------
# Wrapper: single fused pallas_call for the whole encoder forward pass.
# ----------------------------------------------------------------------------
def encoder_forward(prep, data_nchw, label=None, last_non_linearity=None):
    batch = data_nchw.shape[0]
    x = data_nchw.reshape(batch, -1)                     # NCHW flatten, keep f32
    has_label = label is not None

    vmem_cap = _vmem_capacity_bytes()
    tb = _pick_batch_tile(batch, vmem_cap)
    padded = int(pl.cdiv(batch, tb)) * tb
    if padded != batch:
        x = jnp.pad(x, ((0, padded - batch), (0, 0)))
    grid = (padded // tb,)

    operands = [x]
    data_specs = [pl.BlockSpec((tb, x.shape[1]), lambda i: (i, 0))]
    if has_label:
        lab = label
        if padded != batch:
            lab = jnp.pad(lab, ((0, padded - batch), (0, 0)))
        operands.append(lab)
        data_specs.append(pl.BlockSpec((tb, lab.shape[1]), lambda i: (i, 0)))

    weights = []
    for w, s in zip(prep["conv_w"], prep["conv_shift"]):
        weights += [w, s]
    if has_label:
        weights += [prep["label_w"], prep["label_shift"],
                    prep["fc_w_img"], prep["fc_w_label"], prep["fc_shift"]]
    else:
        weights += [prep["fc_w_img"], prep["fc_shift"]]
    operands += weights

    latent = prep["latent"]
    latent_pad = prep["fc_shift"].shape[1]               # 128-lane padded head
    kernel = _make_encoder_kernel(len(prep["conv_w"]), has_label,
                                  last_non_linearity)

    # Advisory cost estimate for XLA scheduling around the custom call.
    flops = 0
    for w in prep["conv_w"]:
        flops += 2 * padded * w.shape[0] * w.shape[1]
    flops += 2 * padded * prep["fc_w_img"].shape[0] * prep["fc_w_img"].shape[1]
    if has_label:
        flops += 2 * padded * prep["label_w"].shape[0] * prep["label_w"].shape[1]
        flops += (2 * padded * prep["fc_w_label"].shape[0]
                  * prep["fc_w_label"].shape[1])
    transc = padded * latent_pad if last_non_linearity in ("sigmoid", "tanh") else 0
    bytes_accessed = padded * latent_pad * 4 + sum(
        int(np.prod(op.shape)) * op.dtype.itemsize for op in operands)
    cost = pl.CostEstimate(flops=int(flops), transcendentals=int(transc),
                           bytes_accessed=int(bytes_accessed))

    def _call(single_buffer_weights):
        if single_buffer_weights:
            # Constant index_map -> weights never refetched; single-buffer them
            # to halve weight VMEM (matters once conv matrices grow / on v7x).
            w_specs = [pl.BlockSpec(w.shape, lambda i: (0, 0),
                                    pipeline_mode=pl.Buffered(1))
                       for w in weights]
        else:
            w_specs = [pl.BlockSpec(w.shape, lambda i: (0, 0)) for w in weights]
        return pl.pallas_call(
            kernel,
            out_shape=jax.ShapeDtypeStruct((padded, latent_pad), jnp.float32),
            grid=grid,
            in_specs=data_specs + w_specs,
            out_specs=pl.BlockSpec((tb, latent_pad), lambda i: (i, 0)),
            compiler_params=pltpu.CompilerParams(
                dimension_semantics=("parallel",),
                vmem_limit_bytes=_vmem_limit_bytes(vmem_cap)),
            cost_estimate=cost,
        )(*operands)

    try:
        out = _call(True)
    except Exception:
        # pipeline_mode=pl.Buffered(1) unsupported in this build -> default
        # double-buffered weights (correctness identical).
        out = _call(False)
    return out[:batch, :latent]


# ----------------------------------------------------------------------------
# Init-time lowering of pad + conv + BN to dense matmul operands (plain numpy).
# ----------------------------------------------------------------------------
def _padding_from_kernel(kernel_size):
    # Mirrors the module exactly: ConstantPad2d((ceil((k0-1)/2), floor((k0-1)/2),
    # ceil((k1-1)/2), floor((k1-1)/2))) -> (left,right) pad W from kernel_size[0],
    # (top,bottom) pad H from kernel_size[1] (the module's own quirk; identical
    # for square kernels).
    k0, k1 = kernel_size
    pad_l, pad_r = ceil((k0 - 1) / 2), floor((k0 - 1) / 2)
    pad_t, pad_b = ceil((k1 - 1) / 2), floor((k1 - 1) / 2)
    return pad_l, pad_r, pad_t, pad_b


def _conv_bn_to_dense(w_oihw, gamma, beta, rm, rv, h_in, w_in, stride, pads):
    """Lower ConstantPad2d + Conv2d(stride, bias=False) + BatchNorm2d(eval)
    to a dense matrix on the NCHW-flattened feature map plus a shift vector."""
    w_oihw = np.asarray(w_oihw, np.float32)
    gamma, beta = np.asarray(gamma, np.float32), np.asarray(beta, np.float32)
    rm, rv = np.asarray(rm, np.float32), np.asarray(rv, np.float32)
    c_out, c_in, k_h, k_w = w_oihw.shape
    pad_l, pad_r, pad_t, pad_b = pads
    h_p, w_p = h_in + pad_t + pad_b, w_in + pad_l + pad_r
    h_out, w_out = (h_p - k_h) // stride + 1, (w_p - k_w) // stride + 1

    scale = gamma / np.sqrt(rv + _EPS)                  # BN scale -> weights
    w_sc = w_oihw * scale[:, None, None, None]
    shift_c = beta - rm * scale                         # per-channel BN shift

    mat = np.zeros((h_in * w_in * c_in, h_out * w_out * c_out), np.float32)
    ci = np.arange(c_in)
    co = np.arange(c_out)
    for a in range(k_h):
        for b in range(k_w):
            tap = w_sc[:, :, a, b].T                    # (c_in, c_out)
            for ho in range(h_out):
                hi = stride * ho + a - pad_t
                if hi < 0 or hi >= h_in:
                    continue
                for wo in range(w_out):
                    wi = stride * wo + b - pad_l
                    if wi < 0 or wi >= w_in:
                        continue
                    rows = ci * (h_in * w_in) + hi * w_in + wi   # NCHW flatten
                    cols = co * (h_out * w_out) + ho * w_out + wo
                    mat[np.ix_(rows, cols)] += tap
    shift = np.repeat(shift_c, h_out * w_out)           # NCHW flatten order
    return mat, shift, (h_out, w_out)


def prepare_encoder_operands(params, data_shape, kernel_size):
    """Fold padding / conv / BN (eval) into bf16 matmul weights + f32 shifts.
    The fc_e head is zero-padded to a 128-lane output for lane-dense stores."""
    pads = _padding_from_kernel(kernel_size)
    h, w = data_shape[1], data_shape[2]
    conv_w, conv_shift = [], []
    for lp in params["conv"]:
        mat, shift, (h, w) = _conv_bn_to_dense(
            lp["w"], lp["gamma"], lp["beta"], lp["rm"], lp["rv"],
            h, w, 2, pads)
        conv_w.append(jnp.asarray(mat, jnp.bfloat16))
        conv_shift.append(jnp.asarray(shift[None, :], jnp.float32))

    prep = dict(conv_w=conv_w, conv_shift=conv_shift)
    flat_dim = params["flat_dim"]
    fc_w = np.asarray(params["fc_e_w"], np.float32)
    fc_b = np.asarray(params["fc_e_b"], np.float32)
    latent = fc_w.shape[1]
    latent_pad = ((latent + 127) // 128) * 128
    prep["latent"] = latent

    w_img = np.zeros((flat_dim, latent_pad), np.float32)
    w_img[:, :latent] = fc_w[:flat_dim]
    prep["fc_w_img"] = jnp.asarray(w_img, jnp.bfloat16)
    b_pad = np.zeros((1, latent_pad), np.float32)
    b_pad[0, :latent] = fc_b
    prep["fc_shift"] = jnp.asarray(b_pad, jnp.float32)

    if "fc_label_w" in params:
        s = np.asarray(params["bn_l_gamma"], np.float32) / np.sqrt(
            np.asarray(params["bn_l_rv"], np.float32) + _EPS)
        t = (np.asarray(params["bn_l_beta"], np.float32)
             - np.asarray(params["bn_l_rm"], np.float32) * s)
        prep["label_w"] = jnp.asarray(
            np.asarray(params["fc_label_w"], np.float32) * s[None, :],
            jnp.bfloat16)
        prep["label_shift"] = jnp.asarray(
            (np.asarray(params["fc_label_b"], np.float32) * s + t)[None, :],
            jnp.float32)
        w_lab = np.zeros((fc_w.shape[0] - flat_dim, latent_pad), np.float32)
        w_lab[:, :latent] = fc_w[flat_dim:]
        prep["fc_w_label"] = jnp.asarray(w_lab, jnp.bfloat16)
    return prep


# ----------------------------------------------------------------------------
# Synthetic parameters in the PyTorch layout (conv OIHW, per-channel BN stats).
# ----------------------------------------------------------------------------
def init_encoder_params(key, latent_dim_size, data_shape, label_shape,
                        layer_count, base_filters, kernel_size,
                        label_resize_shape):
    kh, kw = kernel_size
    keys = list(jax.random.split(key, 5 * layer_count + 8))
    ki = iter(keys)

    conv = []
    for layer_i in range(layer_count):
        prev_f = base_filters * 2 ** (layer_i - 1) if layer_i > 0 else 3
        next_f = base_filters * 2 ** layer_i
        w = 0.05 * jax.random.normal(next(ki), (next_f, prev_f, kh, kw),
                                     jnp.float32)
        gamma = 1.0 + 0.1 * jax.random.normal(next(ki), (next_f,), jnp.float32)
        beta = 0.1 * jax.random.normal(next(ki), (next_f,), jnp.float32)
        rm = 0.1 * jax.random.normal(next(ki), (next_f,), jnp.float32)
        rv = 0.5 + jax.random.uniform(next(ki), (next_f,), jnp.float32)
        conv.append(dict(w=w, gamma=gamma, beta=beta, rm=rm, rv=rv))

    w_sp = data_shape[1] // 2 ** layer_count
    h_sp = data_shape[2] // 2 ** layer_count
    c = base_filters * 2 ** (layer_count - 1)
    flat_dim = w_sp * h_sp * c

    params = dict(conv=conv, flat_dim=flat_dim)
    fc_in = flat_dim
    if label_shape is not None:
        params["fc_label_w"] = 0.05 * jax.random.normal(
            next(ki), (label_shape, label_resize_shape), jnp.float32)
        params["fc_label_b"] = 0.05 * jax.random.normal(
            next(ki), (label_resize_shape,), jnp.float32)
        params["bn_l_gamma"] = 1.0 + 0.1 * jax.random.normal(
            next(ki), (label_resize_shape,), jnp.float32)
        params["bn_l_beta"] = 0.1 * jax.random.normal(
            next(ki), (label_resize_shape,), jnp.float32)
        params["bn_l_rm"] = 0.1 * jax.random.normal(
            next(ki), (label_resize_shape,), jnp.float32)
        params["bn_l_rv"] = 0.5 + jax.random.uniform(
            next(ki), (label_resize_shape,), jnp.float32)
        fc_in += label_resize_shape
    params["fc_e_w"] = 0.05 * jax.random.normal(
        next(ki), (fc_in, latent_dim_size), jnp.float32)
    params["fc_e_b"] = 0.05 * jax.random.normal(
        next(ki), (latent_dim_size,), jnp.float32)
    return params


# ----------------------------------------------------------------------------
# Pure-JAX f32 reference (mirrors the torch module in eval mode).
# ----------------------------------------------------------------------------
def reference_forward(params, data, label=None, kernel_size=(5, 5),
                      last_non_linearity=None):
    pad_l, pad_r, pad_t, pad_b = _padding_from_kernel(kernel_size)
    x = data
    for lp in params["conv"]:
        x = jnp.pad(x, ((0, 0), (0, 0), (pad_t, pad_b), (pad_l, pad_r)))
        x = lax.conv_general_dilated(
            x, lp["w"], window_strides=(2, 2), padding="VALID",
            dimension_numbers=("NCHW", "OIHW", "NCHW"),
            precision=lax.Precision.HIGHEST)
        s = lp["gamma"] / jnp.sqrt(lp["rv"] + _EPS)
        t = lp["beta"] - lp["rm"] * s
        x = x * s[None, :, None, None] + t[None, :, None, None]
        x = jnp.where(x > 0, x, 0.2 * x)
    feats = x.reshape(x.shape[0], -1)                    # torch.flatten on NCHW
    if label is not None:
        y = jnp.dot(label, params["fc_label_w"],
                    precision=lax.Precision.HIGHEST) + params["fc_label_b"]
        s = params["bn_l_gamma"] / jnp.sqrt(params["bn_l_rv"] + _EPS)
        t = params["bn_l_beta"] - params["bn_l_rm"] * s
        y = jnp.maximum(y * s + t, 0.0)
        feats = jnp.concatenate([feats, y], axis=1)
    out = jnp.dot(feats, params["fc_e_w"],
                  precision=lax.Precision.HIGHEST) + params["fc_e_b"]
    return _apply_last_nl(out, last_non_linearity)


if __name__ == "__main__":
    latent_dim_size = 16
    data_shape = (3, 16, 16)        # (C, H, W)
    label_shape = 6
    layer_count = 3
    base_filters = 8
    kernel_size = (5, 5)
    label_resize_shape = 16
    batch = 2

    key = jax.random.PRNGKey(0)
    kp, kd, kl = jax.random.split(key, 3)
    params = init_encoder_params(kp, latent_dim_size, data_shape, label_shape,
                                 layer_count, base_filters, kernel_size,
                                 label_resize_shape)
    prep = prepare_encoder_operands(params, data_shape, kernel_size)

    data = jax.random.normal(kd, (batch,) + data_shape, jnp.float32)
    label = jax.random.normal(kl, (batch, label_shape), jnp.float32)

    out = encoder_forward(prep, data, label, last_non_linearity="tanh")
    out = jax.block_until_ready(out)
    assert out.shape == (batch, latent_dim_size), out.shape
    assert bool(jnp.all(jnp.isfinite(out)))

    # Correctness check against the pure-JAX f32 reference (bf16 MXU path
    # introduces ~1e-2-level differences at most at these magnitudes).
    ref = reference_forward(params, data, label, kernel_size=kernel_size,
                            last_non_linearity="tanh")
    max_err = float(jnp.max(jnp.abs(out - ref)))
    assert max_err < 5e-2, f"max |err| = {max_err}"
    print("KERNEL_OK")
</pallas_src>

<mosaic_0001>
module attributes {stable_mosaic.version = 11 : i64} {
  func.func @kernel(%arg0: i32, %arg1: memref<2x768xf32, #tpu.memory_space<vmem>>, %arg2: memref<2x6xf32, #tpu.memory_space<vmem>>, %arg3: memref<768x512xbf16, #tpu.memory_space<vmem>>, %arg4: memref<1x512xf32, #tpu.memory_space<vmem>>, %arg5: memref<512x256xbf16, #tpu.memory_space<vmem>>, %arg6: memref<1x256xf32, #tpu.memory_space<vmem>>, %arg7: memref<256x128xbf16, #tpu.memory_space<vmem>>, %arg8: memref<1x128xf32, #tpu.memory_space<vmem>>, %arg9: memref<6x16xbf16, #tpu.memory_space<vmem>>, %arg10: memref<1x16xf32, #tpu.memory_space<vmem>>, %arg11: memref<128x128xbf16, #tpu.memory_space<vmem>>, %arg12: memref<16x128xbf16, #tpu.memory_space<vmem>>, %arg13: memref<1x128xf32, #tpu.memory_space<vmem>>, %arg14: memref<2x128xf32, #tpu.memory_space<vmem>>) attributes {dimension_semantics = [#tpu.dimension_semantics<parallel>], iteration_bounds = array<i64: 1>, scalar_prefetch = 0 : i64, scratch_operands = 0 : i64, tpu.core_type = #tpu.core_type<tc>, window_params = [{transform_indices = @transform_0, window_bounds = array<i64: 2, 768>}, {transform_indices = @transform_1, window_bounds = array<i64: 2, 6>}, {pipeline_mode = #tpu.pipeline_mode<synchronous>, transform_indices = @transform_2, window_bounds = array<i64: 768, 512>}, {pipeline_mode = #tpu.pipeline_mode<synchronous>, transform_indices = @transform_3, window_bounds = array<i64: 1, 512>}, {pipeline_mode = #tpu.pipeline_mode<synchronous>, transform_indices = @transform_4, window_bounds = array<i64: 512, 256>}, {pipeline_mode = #tpu.pipeline_mode<synchronous>, transform_indices = @transform_5, window_bounds = array<i64: 1, 256>}, {pipeline_mode = #tpu.pipeline_mode<synchronous>, transform_indices = @transform_6, window_bounds = array<i64: 256, 128>}, {pipeline_mode = #tpu.pipeline_mode<synchronous>, transform_indices = @transform_7, window_bounds = array<i64: 1, 128>}, {pipeline_mode = #tpu.pipeline_mode<synchronous>, transform_indices = @transform_8, window_bounds = array<i64: 6, 16>}, {pipeline_mode = #tpu.pipeline_mode<synchronous>, transform_indices = @transform_9, window_bounds = array<i64: 1, 16>}, {pipeline_mode = #tpu.pipeline_mode<synchronous>, transform_indices = @transform_10, window_bounds = array<i64: 128, 128>}, {pipeline_mode = #tpu.pipeline_mode<synchronous>, transform_indices = @transform_11, window_bounds = array<i64: 16, 128>}, {pipeline_mode = #tpu.pipeline_mode<synchronous>, transform_indices = @transform_12, window_bounds = array<i64: 1, 128>}, {transform_indices = @transform_13, window_bounds = array<i64: 2, 128>}]} {
    %c0 = arith.constant 0 : index
    %c0_0 = arith.constant 0 : index
    %0 = vector.load %arg1[%c0, %c0_0] : memref<2x768xf32, #tpu.memory_space<vmem>>, vector<2x768xf32>
    %1 = arith.truncf %0 : vector<2x768xf32> to vector<2x768xbf16>
    %c0_1 = arith.constant 0 : index
    %c0_2 = arith.constant 0 : index
    %2 = vector.load %arg3[%c0_1, %c0_2] : memref<768x512xbf16, #tpu.memory_space<vmem>>, vector<768x512xbf16>
    %cst = arith.constant dense<0.000000e+00> : vector<2x512xf32>
    %3 = tpu.matmul %1, %2, %cst {dimension_numbers = #tpu.dot_dimension_numbers<[1], [0], [0], [1], [0, 0, 1, 1], [], []>} : vector<2x768xbf16>, vector<768x512xbf16>, vector<2x512xf32> -> vector<2x512xf32>
    %c0_3 = arith.constant 0 : index
    %c0_4 = arith.constant 0 : index
    %4 = vector.load %arg4[%c0_3, %c0_4] : memref<1x512xf32, #tpu.memory_space<vmem>>, vector<1x512xf32>
    %5 = vector.broadcast %4 : vector<1x512xf32> to vector<2x512xf32>
    %6 = arith.addf %3, %5 : vector<2x512xf32>
    %cst_5 = arith.constant 2.000000e-01 : f32
    %7 = vector.broadcast %cst_5 : f32 to vector<2x512xf32>
    %8 = arith.mulf %7, %6 : vector<2x512xf32>
    %9 = arith.maximumf %6, %8 : vector<2x512xf32>
    %10 = arith.truncf %9 : vector<2x512xf32> to vector<2x512xbf16>
    %c0_6 = arith.constant 0 : index
    %c0_7 = arith.constant 0 : index
    %11 = vector.load %arg5[%c0_6, %c0_7] : memref<512x256xbf16, #tpu.memory_space<vmem>>, vector<512x256xbf16>
    %cst_8 = arith.constant dense<0.000000e+00> : vector<2x256xf32>
    %12 = tpu.matmul %10, %11, %cst_8 {dimension_numbers = #tpu.dot_dimension_numbers<[1], [0], [0], [1], [0, 0, 1, 1], [], []>} : vector<2x512xbf16>, vector<512x256xbf16>, vector<2x256xf32> -> vector<2x256xf32>
    %c0_9 = arith.constant 0 : index
    %c0_10 = arith.constant 0 : index
    %13 = vector.load %arg6[%c0_9, %c0_10] : memref<1x256xf32, #tpu.memory_space<vmem>>, vector<1x256xf32>
    %14 = vector.broadcast %13 : vector<1x256xf32> to vector<2x256xf32>
    %15 = arith.addf %12, %14 : vector<2x256xf32>
    %cst_11 = arith.constant 2.000000e-01 : f32
    %16 = vector.broadcast %cst_11 : f32 to vector<2x256xf32>
    %17 = arith.mulf %16, %15 : vector<2x256xf32>
    %18 = arith.maximumf %15, %17 : vector<2x256xf32>
    %19 = arith.truncf %18 : vector<2x256xf32> to vector<2x256xbf16>
    %c0_12 = arith.constant 0 : index
    %c0_13 = arith.constant 0 : index
    %20 = vector.load %arg7[%c0_12, %c0_13] : memref<256x128xbf16, #tpu.memory_space<vmem>>, vector<256x128xbf16>
    %cst_14 = arith.constant dense<0.000000e+00> : vector<2x128xf32>
    %21 = tpu.matmul %19, %20, %cst_14 {dimension_numbers = #tpu.dot_dimension_numbers<[1], [0], [0], [1], [0, 0, 1, 1], [], []>} : vector<2x256xbf16>, vector<256x128xbf16>, vector<2x128xf32> -> vector<2x128xf32>
    %c0_15 = arith.constant 0 : index
    %c0_16 = arith.constant 0 : index
    %22 = vector.load %arg8[%c0_15, %c0_16] : memref<1x128xf32, #tpu.memory_space<vmem>>, vector<1x128xf32>
    %23 = vector.broadcast %22 : vector<1x128xf32> to vector<2x128xf32>
    %24 = arith.addf %21, %23 : vector<2x128xf32>
    %cst_17 = arith.constant 2.000000e-01 : f32
    %25 = vector.broadcast %cst_17 : f32 to vector<2x128xf32>
    %26 = arith.mulf %25, %24 : vector<2x128xf32>
    %27 = arith.maximumf %24, %26 : vector<2x128xf32>
    %28 = arith.truncf %27 : vector<2x128xf32> to vector<2x128xbf16>
    %c0_18 = arith.constant 0 : index
    %c0_19 = arith.constant 0 : index
    %29 = vector.load %arg2[%c0_18, %c0_19] : memref<2x6xf32, #tpu.memory_space<vmem>>, vector<2x6xf32>
    %30 = arith.truncf %29 : vector<2x6xf32> to vector<2x6xbf16>
    %c0_20 = arith.constant 0 : index
    %c0_21 = arith.constant 0 : index
    %31 = vector.load %arg9[%c0_20, %c0_21] : memref<6x16xbf16, #tpu.memory_space<vmem>>, vector<6x16xbf16>
    %cst_22 = arith.constant dense<0.000000e+00> : vector<2x16xf32>
    %32 = tpu.matmul %30, %31, %cst_22 {dimension_numbers = #tpu.dot_dimension_numbers<[1], [0], [0], [1], [0, 0, 1, 1], [], []>} : vector<2x6xbf16>, vector<6x16xbf16>, vector<2x16xf32> -> vector<2x16xf32>
    %c0_23 = arith.constant 0 : index
    %c0_24 = arith.constant 0 : index
    %33 = vector.load %arg10[%c0_23, %c0_24] : memref<1x16xf32, #tpu.memory_space<vmem>>, vector<1x16xf32>
    %34 = vector.broadcast %33 : vector<1x16xf32> to vector<2x16xf32>
    %35 = arith.addf %32, %34 : vector<2x16xf32>
    %cst_25 = arith.constant 0.000000e+00 : f32
    %36 = vector.broadcast %cst_25 : f32 to vector<2x16xf32>
    %37 = arith.maximumf %35, %36 : vector<2x16xf32>
    %38 = arith.truncf %37 : vector<2x16xf32> to vector<2x16xbf16>
    %c0_26 = arith.constant 0 : index
    %c0_27 = arith.constant 0 : index
    %39 = vector.load %arg11[%c0_26, %c0_27] : memref<128x128xbf16, #tpu.memory_space<vmem>>, vector<128x128xbf16>
    %cst_28 = arith.constant dense<0.000000e+00> : vector<2x128xf32>
    %40 = tpu.matmul %28, %39, %cst_28 {dimension_numbers = #tpu.dot_dimension_numbers<[1], [0], [0], [1], [0, 0, 1, 1], [], []>} : vector<2x128xbf16>, vector<128x128xbf16>, vector<2x128xf32> -> vector<2x128xf32>
    %c0_29 = arith.constant 0 : index
    %c0_30 = arith.constant 0 : index
    %41 = vector.load %arg12[%c0_29, %c0_30] : memref<16x128xbf16, #tpu.memory_space<vmem>>, vector<16x128xbf16>
    %cst_31 = arith.constant dense<0.000000e+00> : vector<2x128xf32>
    %42 = tpu.matmul %38, %41, %cst_31 {dimension_numbers = #tpu.dot_dimension_numbers<[1], [0], [0], [1], [0, 0, 1, 1], [], []>} : vector<2x16xbf16>, vector<16x128xbf16>, vector<2x128xf32> -> vector<2x128xf32>
    %43 = arith.addf %40, %42 : vector<2x128xf32>
    %c0_32 = arith.constant 0 : index
    %c0_33 = arith.constant 0 : index
    %44 = vector.load %arg13[%c0_32, %c0_33] : memref<1x128xf32, #tpu.memory_space<vmem>>, vector<1x128xf32>
    %45 = vector.broadcast %44 : vector<1x128xf32> to vector<2x128xf32>
    %46 = arith.addf %43, %45 : vector<2x128xf32>
    %47 = math.tanh %46 : vector<2x128xf32>
    %c0_34 = arith.constant 0 : index
    %c0_35 = arith.constant 0 : index
    %48 = vector.load %arg14[%c0_34, %c0_35] : memref<2x128xf32, #tpu.memory_space<vmem>>, vector<2x128xf32>
    tpu.vector_store %arg14[%c0_34, %c0_35], %47 {strides = array<i32>} : memref<2x128xf32, #tpu.memory_space<vmem>>, vector<2x128xf32>,
    return
  }
  func.func @transform_0(%arg0: i32) -> (i32, i32) {
    %c0_i32 = arith.constant 0 : i32
    %c0_i32_0 = arith.constant 0 : i32
    return %arg0, %c0_i32 : i32, i32
  }
  func.func @transform_1(%arg0: i32) -> (i32, i32) {
    %c0_i32 = arith.constant 0 : i32
    %c0_i32_0 = arith.constant 0 : i32
    return %arg0, %c0_i32 : i32, i32
  }
  func.func @transform_2(%arg0: i32) -> (i32, i32) {
    %c0_i32 = arith.constant 0 : i32
    %c0_i32_0 = arith.constant 0 : i32
    %c0_i32_1 = arith.constant 0 : i32
    return %c0_i32, %c0_i32_0 : i32, i32
  }
  func.func @transform_3(%arg0: i32) -> (i32, i32) {
    %c0_i32 = arith.constant 0 : i32
    %c0_i32_0 = arith.constant 0 : i32
    %c0_i32_1 = arith.constant 0 : i32
    return %c0_i32, %c0_i32_0 : i32, i32
  }
  func.func @transform_4(%arg0: i32) -> (i32, i32) {
    %c0_i32 = arith.constant 0 : i32
    %c0_i32_0 = arith.constant 0 : i32
    %c0_i32_1 = arith.constant 0 : i32
    return %c0_i32, %c0_i32_0 : i32, i32
  }
  func.func @transform_5(%arg0: i32) -> (i32, i32) {
    %c0_i32 = arith.constant 0 : i32
    %c0_i32_0 = arith.constant 0 : i32
    %c0_i32_1 = arith.constant 0 : i32
    return %c0_i32, %c0_i32_0 : i32, i32
  }
  func.func @transform_6(%arg0: i32) -> (i32, i32) {
    %c0_i32 = arith.constant 0 : i32
    %c0_i32_0 = arith.constant 0 : i32
    %c0_i32_1 = arith.constant 0 : i32
    return %c0_i32, %c0_i32_0 : i32, i32
  }
  func.func @transform_7(%arg0: i32) -> (i32, i32) {
    %c0_i32 = arith.constant 0 : i32
    %c0_i32_0 = arith.constant 0 : i32
    %c0_i32_1 = arith.constant 0 : i32
    return %c0_i32, %c0_i32_0 : i32, i32
  }
  func.func @transform_8(%arg0: i32) -> (i32, i32) {
    %c0_i32 = arith.constant 0 : i32
    %c0_i32_0 = arith.constant 0 : i32
    %c0_i32_1 = arith.constant 0 : i32
    return %c0_i32, %c0_i32_0 : i32, i32
  }
  func.func @transform_9(%arg0: i32) -> (i32, i32) {
    %c0_i32 = arith.constant 0 : i32
    %c0_i32_0 = arith.constant 0 : i32
    %c0_i32_1 = arith.constant 0 : i32
    return %c0_i32, %c0_i32_0 : i32, i32
  }
  func.func @transform_10(%arg0: i32) -> (i32, i32) {
    %c0_i32 = arith.constant 0 : i32
    %c0_i32_0 = arith.constant 0 : i32
    %c0_i32_1 = arith.constant 0 : i32
    return %c0_i32, %c0_i32_0 : i32, i32
  }
  func.func @transform_11(%arg0: i32) -> (i32, i32) {
    %c0_i32 = arith.constant 0 : i32
    %c0_i32_0 = arith.constant 0 : i32
    %c0_i32_1 = arith.constant 0 : i32
    return %c0_i32, %c0_i32_0 : i32, i32
  }
  func.func @transform_12(%arg0: i32) -> (i32, i32) {
    %c0_i32 = arith.constant 0 : i32
    %c0_i32_0 = arith.constant 0 : i32
    %c0_i32_1 = arith.constant 0 : i32
    return %c0_i32, %c0_i32_0 : i32, i32
  }
  func.func @transform_13(%arg0: i32) -> (i32, i32) {
    %c0_i32 = arith.constant 0 : i32
    %c0_i32_0 = arith.constant 0 : i32
    return %arg0, %c0_i32 : i32, i32
  }
}

module attributes {stable_mosaic.version = 11 : i64} {
  func.func @kernel(%arg0: i32, %arg1: memref<2x768xf32, #tpu.memory_space<vmem>>, %arg2: memref<2x6xf32, #tpu.memory_space<vmem>>, %arg3: memref<768x512xbf16, #tpu.memory_space<vmem>>, %arg4: memref<1x512xf32, #tpu.memory_space<vmem>>, %arg5: memref<512x256xbf16, #tpu.memory_space<vmem>>, %arg6: memref<1x256xf32, #tpu.memory_space<vmem>>, %arg7: memref<256x128xbf16, #tpu.memory_space<vmem>>, %arg8: memref<1x128xf32, #tpu.memory_space<vmem>>, %arg9: memref<6x16xbf16, #tpu.memory_space<vmem>>, %arg10: memref<1x16xf32, #tpu.memory_space<vmem>>, %arg11: memref<128x128xbf16, #tpu.memory_space<vmem>>, %arg12: memref<16x128xbf16, #tpu.memory_space<vmem>>, %arg13: memref<1x128xf32, #tpu.memory_space<vmem>>, %arg14: memref<2x128xf32, #tpu.memory_space<vmem>>) attributes {dimension_semantics = [#tpu.dimension_semantics<parallel>], iteration_bounds = array<i64: 1>, scalar_prefetch = 0 : i64, scratch_operands = 0 : i64, tpu.core_type = #tpu.core_type<tc>, window_params = [{transform_indices = @transform_0, window_bounds = array<i64: 2, 768>}, {transform_indices = @transform_1, window_bounds = array<i64: 2, 6>}, {pipeline_mode = #tpu.pipeline_mode<synchronous>, transform_indices = @transform_2, window_bounds = array<i64: 768, 512>}, {pipeline_mode = #tpu.pipeline_mode<synchronous>, transform_indices = @transform_3, window_bounds = array<i64: 1, 512>}, {pipeline_mode = #tpu.pipeline_mode<synchronous>, transform_indices = @transform_4, window_bounds = array<i64: 512, 256>}, {pipeline_mode = #tpu.pipeline_mode<synchronous>, transform_indices = @transform_5, window_bounds = array<i64: 1, 256>}, {pipeline_mode = #tpu.pipeline_mode<synchronous>, transform_indices = @transform_6, window_bounds = array<i64: 256, 128>}, {pipeline_mode = #tpu.pipeline_mode<synchronous>, transform_indices = @transform_7, window_bounds = array<i64: 1, 128>}, {pipeline_mode = #tpu.pipeline_mode<synchronous>, transform_indices = @transform_8, window_bounds = array<i64: 6, 16>}, {pipeline_mode = #tpu.pipeline_mode<synchronous>, transform_indices = @transform_9, window_bounds = array<i64: 1, 16>}, {pipeline_mode = #tpu.pipeline_mode<synchronous>, transform_indices = @transform_10, window_bounds = array<i64: 128, 128>}, {pipeline_mode = #tpu.pipeline_mode<synchronous>, transform_indices = @transform_11, window_bounds = array<i64: 16, 128>}, {pipeline_mode = #tpu.pipeline_mode<synchronous>, transform_indices = @transform_12, window_bounds = array<i64: 1, 128>}, {transform_indices = @transform_13, window_bounds = array<i64: 2, 128>}]} {
    %c0 = arith.constant 0 : index
    %c0_0 = arith.constant 0 : index
    %0 = vector.load %arg1[%c0, %c0_0] : memref<2x768xf32, #tpu.memory_space<vmem>>, vector<2x768xf32>
    %1 = arith.truncf %0 : vector<2x768xf32> to vector<2x768xbf16>
    %c0_1 = arith.constant 0 : index
    %c0_2 = arith.constant 0 : index
    %2 = vector.load %arg3[%c0_1, %c0_2] : memref<768x512xbf16, #tpu.memory_space<vmem>>, vector<768x512xbf16>
    %cst = arith.constant dense<0.000000e+00> : vector<2x512xf32>
    %3 = tpu.matmul %1, %2, %cst {dimension_numbers = #tpu.dot_dimension_numbers<[1], [0], [0], [1], [0, 0, 1, 1], [], []>} : vector<2x768xbf16>, vector<768x512xbf16>, vector<2x512xf32> -> vector<2x512xf32>
    %c0_3 = arith.constant 0 : index
    %c0_4 = arith.constant 0 : index
    %4 = vector.load %arg4[%c0_3, %c0_4] : memref<1x512xf32, #tpu.memory_space<vmem>>, vector<1x512xf32>
    %5 = vector.broadcast %4 : vector<1x512xf32> to vector<2x512xf32>
    %6 = arith.addf %3, %5 : vector<2x512xf32>
    %cst_5 = arith.constant 2.000000e-01 : f32
    %7 = vector.broadcast %cst_5 : f32 to vector<2x512xf32>
    %8 = arith.mulf %7, %6 : vector<2x512xf32>
    %9 = arith.maximumf %6, %8 : vector<2x512xf32>
    %10 = arith.truncf %9 : vector<2x512xf32> to vector<2x512xbf16>
    %c0_6 = arith.constant 0 : index
    %c0_7 = arith.constant 0 : index
    %11 = vector.load %arg5[%c0_6, %c0_7] : memref<512x256xbf16, #tpu.memory_space<vmem>>, vector<512x256xbf16>
    %cst_8 = arith.constant dense<0.000000e+00> : vector<2x256xf32>
    %12 = tpu.matmul %10, %11, %cst_8 {dimension_numbers = #tpu.dot_dimension_numbers<[1], [0], [0], [1], [0, 0, 1, 1], [], []>} : vector<2x512xbf16>, vector<512x256xbf16>, vector<2x256xf32> -> vector<2x256xf32>
    %c0_9 = arith.constant 0 : index
    %c0_10 = arith.constant 0 : index
    %13 = vector.load %arg6[%c0_9, %c0_10] : memref<1x256xf32, #tpu.memory_space<vmem>>, vector<1x256xf32>
    %14 = vector.broadcast %13 : vector<1x256xf32> to vector<2x256xf32>
    %15 = arith.addf %12, %14 : vector<2x256xf32>
    %cst_11 = arith.constant 2.000000e-01 : f32
    %16 = vector.broadcast %cst_11 : f32 to vector<2x256xf32>
    %17 = arith.mulf %16, %15 : vector<2x256xf32>
    %18 = arith.maximumf %15, %17 : vector<2x256xf32>
    %19 = arith.truncf %18 : vector<2x256xf32> to vector<2x256xbf16>
    %c0_12 = arith.constant 0 : index
    %c0_13 = arith.constant 0 : index
    %20 = vector.load %arg7[%c0_12, %c0_13] : memref<256x128xbf16, #tpu.memory_space<vmem>>, vector<256x128xbf16>
    %cst_14 = arith.constant dense<0.000000e+00> : vector<2x128xf32>
    %21 = tpu.matmul %19, %20, %cst_14 {dimension_numbers = #tpu.dot_dimension_numbers<[1], [0], [0], [1], [0, 0, 1, 1], [], []>} : vector<2x256xbf16>, vector<256x128xbf16>, vector<2x128xf32> -> vector<2x128xf32>
    %c0_15 = arith.constant 0 : index
    %c0_16 = arith.constant 0 : index
    %22 = vector.load %arg8[%c0_15, %c0_16] : memref<1x128xf32, #tpu.memory_space<vmem>>, vector<1x128xf32>
    %23 = vector.broadcast %22 : vector<1x128xf32> to vector<2x128xf32>
    %24 = arith.addf %21, %23 : vector<2x128xf32>
    %cst_17 = arith.constant 2.000000e-01 : f32
    %25 = vector.broadcast %cst_17 : f32 to vector<2x128xf32>
    %26 = arith.mulf %25, %24 : vector<2x128xf32>
    %27 = arith.maximumf %24, %26 : vector<2x128xf32>
    %28 = arith.truncf %27 : vector<2x128xf32> to vector<2x128xbf16>
    %c0_18 = arith.constant 0 : index
    %c0_19 = arith.constant 0 : index
    %29 = vector.load %arg2[%c0_18, %c0_19] : memref<2x6xf32, #tpu.memory_space<vmem>>, vector<2x6xf32>
    %30 = arith.truncf %29 : vector<2x6xf32> to vector<2x6xbf16>
    %c0_20 = arith.constant 0 : index
    %c0_21 = arith.constant 0 : index
    %31 = vector.load %arg9[%c0_20, %c0_21] : memref<6x16xbf16, #tpu.memory_space<vmem>>, vector<6x16xbf16>
    %cst_22 = arith.constant dense<0.000000e+00> : vector<2x16xf32>
    %32 = tpu.matmul %30, %31, %cst_22 {dimension_numbers = #tpu.dot_dimension_numbers<[1], [0], [0], [1], [0, 0, 1, 1], [], []>} : vector<2x6xbf16>, vector<6x16xbf16>, vector<2x16xf32> -> vector<2x16xf32>
    %c0_23 = arith.constant 0 : index
    %c0_24 = arith.constant 0 : index
    %33 = vector.load %arg10[%c0_23, %c0_24] : memref<1x16xf32, #tpu.memory_space<vmem>>, vector<1x16xf32>
    %34 = vector.broadcast %33 : vector<1x16xf32> to vector<2x16xf32>
    %35 = arith.addf %32, %34 : vector<2x16xf32>
    %cst_25 = arith.constant 0.000000e+00 : f32
    %36 = vector.broadcast %cst_25 : f32 to vector<2x16xf32>
    %37 = arith.maximumf %35, %36 : vector<2x16xf32>
    %38 = arith.truncf %37 : vector<2x16xf32> to vector<2x16xbf16>
    %c0_26 = arith.constant 0 : index
    %c0_27 = arith.constant 0 : index
    %39 = vector.load %arg11[%c0_26, %c0_27] : memref<128x128xbf16, #tpu.memory_space<vmem>>, vector<128x128xbf16>
    %cst_28 = arith.constant dense<0.000000e+00> : vector<2x128xf32>
    %40 = tpu.matmul %28, %39, %cst_28 {dimension_numbers = #tpu.dot_dimension_numbers<[1], [0], [0], [1], [0, 0, 1, 1], [], []>} : vector<2x128xbf16>, vector<128x128xbf16>, vector<2x128xf32> -> vector<2x128xf32>
    %c0_29 = arith.constant 0 : index
    %c0_30 = arith.constant 0 : index
    %41 = vector.load %arg12[%c0_29, %c0_30] : memref<16x128xbf16, #tpu.memory_space<vmem>>, vector<16x128xbf16>
    %cst_31 = arith.constant dense<0.000000e+00> : vector<2x128xf32>
    %42 = tpu.matmul %38, %41, %cst_31 {dimension_numbers = #tpu.dot_dimension_numbers<[1], [0], [0], [1], [0, 0, 1, 1], [], []>} : vector<2x16xbf16>, vector<16x128xbf16>, vector<2x128xf32> -> vector<2x128xf32>
    %43 = arith.addf %40, %42 : vector<2x128xf32>
    %c0_32 = arith.constant 0 : index
    %c0_33 = arith.constant 0 : index
    %44 = vector.load %arg13[%c0_32, %c0_33] : memref<1x128xf32, #tpu.memory_space<vmem>>, vector<1x128xf32>
    %45 = vector.broadcast %44 : vector<1x128xf32> to vector<2x128xf32>
    %46 = arith.addf %43, %45 : vector<2x128xf32>
    %47 = math.tanh %46 : vector<2x128xf32>
    %c0_34 = arith.constant 0 : index
    %c0_35 = arith.constant 0 : index
    %48 = vector.load %arg14[%c0_34, %c0_35] : memref<2x128xf32, #tpu.memory_space<vmem>>, vector<2x128xf32>
    tpu.vector_store %arg14[%c0_34, %c0_35], %47 {strides = array<i32>} : memref<2x128xf32, #tpu.memory_space<vmem>>, vector<2x128xf32>,
    return
  }
  func.func @transform_0(%arg0: i32) -> (i32, i32) {
    %c0_i32 = arith.constant 0 : i32
    %c0_i32_0 = arith.constant 0 : i32
    return %arg0, %c0_i32 : i32, i32
  }
  func.func @transform_1(%arg0: i32) -> (i32, i32) {
    %c0_i32 = arith.constant 0 : i32
    %c0_i32_0 = arith.constant 0 : i32
    return %arg0, %c0_i32 : i32, i32
  }
  func.func @transform_2(%arg0: i32) -> (i32, i32) {
    %c0_i32 = arith.constant 0 : i32
    %c0_i32_0 = arith.constant 0 : i32
    %c0_i32_1 = arith.constant 0 : i32
    return %c0_i32, %c0_i32_0 : i32, i32
  }
  func.func @transform_3(%arg0: i32) -> (i32, i32) {
    %c0_i32 = arith.constant 0 : i32
    %c0_i32_0 = arith.constant 0 : i32
    %c0_i32_1 = arith.constant 0 : i32
    return %c0_i32, %c0_i32_0 : i32, i32
  }
  func.func @transform_4(%arg0: i32) -> (i32, i32) {
    %c0_i32 = arith.constant 0 : i32
    %c0_i32_0 = arith.constant 0 : i32
    %c0_i32_1 = arith.constant 0 : i32
    return %c0_i32, %c0_i32_0 : i32, i32
  }
  func.func @transform_5(%arg0: i32) -> (i32, i32) {
    %c0_i32 = arith.constant 0 : i32
    %c0_i32_0 = arith.constant 0 : i32
    %c0_i32_1 = arith.constant 0 : i32
    return %c0_i32, %c0_i32_0 : i32, i32
  }
  func.func @transform_6(%arg0: i32) -> (i32, i32) {
    %c0_i32 = arith.constant 0 : i32
    %c0_i32_0 = arith.constant 0 : i32
    %c0_i32_1 = arith.constant 0 : i32
    return %c0_i32, %c0_i32_0 : i32, i32
  }
  func.func @transform_7(%arg0: i32) -> (i32, i32) {
    %c0_i32 = arith.constant 0 : i32
    %c0_i32_0 = arith.constant 0 : i32
    %c0_i32_1 = arith.constant 0 : i32
    return %c0_i32, %c0_i32_0 : i32, i32
  }
  func.func @transform_8(%arg0: i32) -> (i32, i32) {
    %c0_i32 = arith.constant 0 : i32
    %c0_i32_0 = arith.constant 0 : i32
    %c0_i32_1 = arith.constant 0 : i32
    return %c0_i32, %c0_i32_0 : i32, i32
  }
  func.func @transform_9(%arg0: i32) -> (i32, i32) {
    %c0_i32 = arith.constant 0 : i32
    %c0_i32_0 = arith.constant 0 : i32
    %c0_i32_1 = arith.constant 0 : i32
    return %c0_i32, %c0_i32_0 : i32, i32
  }
  func.func @transform_10(%arg0: i32) -> (i32, i32) {
    %c0_i32 = arith.constant 0 : i32
    %c0_i32_0 = arith.constant 0 : i32
    %c0_i32_1 = arith.constant 0 : i32
    return %c0_i32, %c0_i32_0 : i32, i32
  }
  func.func @transform_11(%arg0: i32) -> (i32, i32) {
    %c0_i32 = arith.constant 0 : i32
    %c0_i32_0 = arith.constant 0 : i32
    %c0_i32_1 = arith.constant 0 : i32
    return %c0_i32, %c0_i32_0 : i32, i32
  }
  func.func @transform_12(%arg0: i32) -> (i32, i32) {
    %c0_i32 = arith.constant 0 : i32
    %c0_i32_0 = arith.constant 0 : i32
    %c0_i32_1 = arith.constant 0 : i32
    return %c0_i32, %c0_i32_0 : i32, i32
  }
  func.func @transform_13(%arg0: i32) -> (i32, i32) {
    %c0_i32 = arith.constant 0 : i32
    %c0_i32_0 = arith.constant 0 : i32
    return %arg0, %c0_i32 : i32, i32
  }
}

</mosaic_0001>

<llo_original>
// kernel: tpu_custom_call.1
$region0: #{tpu_custom_call.1}
  #allocation0 [shape = 'u32[]', space=smem, size = 0x4, offset = 0x4, fixed_abs, tag = 'smem constant byte address 0x4 - core index']
  #allocation1 [shape = 'u32[144,128]{1,0:T(1,128)}', space=vmem, size = 0x12000, scoped, tag = 'internal scratch']
  %s0 = inlined_call_operand.hbm [shape: f32[2,768], index: 0, kind: input, shape index: {}]
  %s1 = inlined_call_operand.vmem [shape: f32[2,6], index: 1, kind: input, shape index: {}]
  %s2 = inlined_call_operand.hbm [shape: bf16[768,512], index: 2, kind: input, shape index: {}]
  %s3 = inlined_call_operand.vmem [shape: f32[1,512], index: 3, kind: input, shape index: {}]
  %s4 = inlined_call_operand.hbm [shape: bf16[512,256], index: 4, kind: input, shape index: {}]
  %s5 = inlined_call_operand.hbm [shape: f32[1,256], index: 5, kind: input, shape index: {}]
  %s6 = inlined_call_operand.hbm [shape: bf16[256,128], index: 6, kind: input, shape index: {}]
  %s7 = inlined_call_operand.vmem [shape: f32[1,128], index: 7, kind: input, shape index: {}]
  %s8 = inlined_call_operand.vmem [shape: bf16[6,16], index: 8, kind: input, shape index: {}]
  %s9 = inlined_call_operand.vmem [shape: f32[1,16], index: 9, kind: input, shape index: {}]
  %s10 = inlined_call_operand.hbm [shape: bf16[128,128], index: 10, kind: input, shape index: {}]
  %s11 = inlined_call_operand.vmem [shape: bf16[16,128], index: 11, kind: input, shape index: {}]
  %s12 = inlined_call_operand.vmem [shape: f32[1,128], index: 12, kind: input, shape index: {}]
  %s13 = inlined_call_operand.hbm [shape: f32[2,128], index: 13, kind: output, shape index: {}]
  %s14 = sld [smem:[#allocation0]]
  $region86: #{tpu_custom_call.1} parent=0
    _
  %s16 = ssub.s32 1, %s14
  %s17 = scalar_select 0, %s16, %s14
  $region1: #{tpu_custom_call.1} parent=0
    #allocation2 [shape = 'u8[6144]{0}', space=vmem, size = 0x1800, scoped, tag = 'input window, operand 0, single buffered']
    #allocation3 [shape = 's32[1]{0}', space=sflag, size = 0x4, scoped, tag = 'scoped memory for tpu_custom_call.1']
    #allocation4 [shape = 's32[1]{0}', space=sflag, size = 0x4, scoped, tag = 'scoped memory for tpu_custom_call.1']
    #allocation5 [shape = 'u8[786432]{0}', space=vmem, size = 0xc0000, scoped, tag = 'input window, operand 2, single buffered']
    #allocation6 [shape = 's32[1]{0}', space=sflag, size = 0x4, scoped, tag = 'scoped memory for tpu_custom_call.1']
    #allocation7 [shape = 'u8[262144]{0}', space=vmem, size = 0x40000, scoped, tag = 'input window, operand 4, single buffered']
    #allocation8 [shape = 'u8[1024]{0}', space=vmem, size = 0x400, scoped, tag = 'input window, operand 5, single buffered']
    #allocation9 [shape = 's32[1]{0}', space=sflag, size = 0x4, scoped, tag = 'scoped memory for tpu_custom_call.1']
    #allocation10 [shape = 'u8[65536]{0}', space=vmem, size = 0x10000, scoped, tag = 'input window, operand 6, single buffered']
    #allocation11 [shape = 'u8[32768]{0}', space=vmem, size = 0x8000, scoped, tag = 'input window, operand 10, single buffered']
    #allocation12 [shape = 's32[1]{0}', space=sflag, size = 0x4, scoped, tag = 'scoped memory for tpu_custom_call.1']
    #allocation13 [shape = 'u8[1024]{0}', space=vmem, size = 0x400, scoped, tag = 'output window, operand 0, single buffered']
    %18 = vsyncpa [#allocation3], 0
    %19 = vsyncpa [#allocation6], 0
    %20 = vsyncpa [#allocation9], 0
    %21 = vsyncpa [#allocation12], 0
    %22 = vsyncpa [#allocation4], 0
    // Predicated region
    $region2: #{tpu_custom_call.1} parent=1 // pred_check
      _
    $region3: #{tpu_custom_call.1} parent=1 // pred_check_branch
      %24 = sbr.rel (0) target = $region5
    $region4: #{tpu_custom_call.1} parent=1 // pred_region
      %s26 = ssub.s32 192, 192
      %27 = vsyncadd [#allocation3], %s26
      %s29 = sshll.u32 [#allocation2], 4
      %s30 = int_to_ptr.vmem [resolvable:$true] %s29
      %32 = dma.hbm_to_vmem [thread:$0]  %s0, 192, %s30, [#allocation3]
    $region5: #{tpu_custom_call.1} parent=1 // pred_fallthru
      _
    // Predicated region
    $region6: #{tpu_custom_call.1} parent=1 // pred_check
      _
    $region7: #{tpu_custom_call.1} parent=1 // pred_check_branch
      %34 = sbr.rel (0) target = $region9
    $region8: #{tpu_custom_call.1} parent=1 // pred_region
      _
    $region9: #{tpu_custom_call.1} parent=1 // pred_fallthru
      _
    // Predicated region
    $region10: #{tpu_custom_call.1} parent=1 // pred_check
      _
    $region11: #{tpu_custom_call.1} parent=1 // pred_check_branch
      %36 = sbr.rel (0) target = $region13
    $region12: #{tpu_custom_call.1} parent=1 // pred_region
      %s38 = ssub.s32 24576, 24576
      %39 = vsyncadd [#allocation6], %s38
      %s40 = sshll.u32 [#allocation5], 4
      %s41 = int_to_ptr.vmem [resolvable:$true] %s40
      %46 = dma.hbm_to_vmem [thread:$0]  %s2, 24576, %s41, [#allocation6], 256, 256, 16
    $region13: #{tpu_custom_call.1} parent=1 // pred_fallthru
      _
    // Predicated region
    $region14: #{tpu_custom_call.1} parent=1 // pred_check
      _
    $region15: #{tpu_custom_call.1} parent=1 // pred_check_branch
      %48 = sbr.rel (0) target = $region17
    $region16: #{tpu_custom_call.1} parent=1 // pred_region
      _
    $region17: #{tpu_custom_call.1} parent=1 // pred_fallthru
      _
    // Predicated region
    $region18: #{tpu_custom_call.1} parent=1 // pred_check
      _
    $region19: #{tpu_custom_call.1} parent=1 // pred_check_branch
      %50 = sbr.rel (0) target = $region21
    $region20: #{tpu_custom_call.1} parent=1 // pred_region
      %s52 = ssub.s32 8192, 8192
      %53 = vsyncadd [#allocation6], %s52
      %s54 = sshll.u32 [#allocation7], 4
      %s55 = int_to_ptr.vmem [resolvable:$true] %s54
      %60 = dma.hbm_to_vmem [thread:$0]  %s4, 8192, %s55, [#allocation6], 128, 128, 8
    $region21: #{tpu_custom_call.1} parent=1 // pred_fallthru
      _
    // Predicated region
    $region22: #{tpu_custom_call.1} parent=1 // pred_check
      _
    $region23: #{tpu_custom_call.1} parent=1 // pred_check_branch
      %62 = sbr.rel (0) target = $region25
    $region24: #{tpu_custom_call.1} parent=1 // pred_region
      %s64 = ssub.s32 32, 32
      %65 = vsyncadd [#allocation9], %s64
      %s67 = sshll.u32 [#allocation8], 4
      %s68 = int_to_ptr.vmem [resolvable:$true] %s67
      %70 = dma.hbm_to_vmem [thread:$0]  %s5, 32, %s68, [#allocation9]
    $region25: #{tpu_custom_call.1} parent=1 // pred_fallthru
      _
    // Predicated region
    $region26: #{tpu_custom_call.1} parent=1 // pred_check
      _
    $region27: #{tpu_custom_call.1} parent=1 // pred_check_branch
      %72 = sbr.rel (0) target = $region29
    $region28: #{tpu_custom_call.1} parent=1 // pred_region
      %s74 = ssub.s32 2048, 2048
      %75 = vsyncadd [#allocation9], %s74
      %s76 = sshll.u32 [#allocation10], 4
      %s77 = int_to_ptr.vmem [resolvable:$true] %s76
      %82 = dma.hbm_to_vmem [thread:$0]  %s6, 2048, %s77, [#allocation9], 64, 64, 4
    $region29: #{tpu_custom_call.1} parent=1 // pred_fallthru
      _
    // Predicated region
    $region30: #{tpu_custom_call.1} parent=1 // pred_check
      _
    $region31: #{tpu_custom_call.1} parent=1 // pred_check_branch
      %84 = sbr.rel (0) target = $region33
    $region32: #{tpu_custom_call.1} parent=1 // pred_region
      _
    $region33: #{tpu_custom_call.1} parent=1 // pred_fallthru
      _
    // Predicated region
    $region34: #{tpu_custom_call.1} parent=1 // pred_check
      _
    $region35: #{tpu_custom_call.1} parent=1 // pred_check_branch
      %86 = sbr.rel (0) target = $region37
    $region36: #{tpu_custom_call.1} parent=1 // pred_region
      _
    $region37: #{tpu_custom_call.1} parent=1 // pred_fallthru
      _
    // Predicated region
    $region38: #{tpu_custom_call.1} parent=1 // pred_check
      _
    $region39: #{tpu_custom_call.1} parent=1 // pred_check_branch
      %88 = sbr.rel (0) target = $region41
    $region40: #{tpu_custom_call.1} parent=1 // pred_region
      _
    $region41: #{tpu_custom_call.1} parent=1 // pred_fallthru
      _
    // Predicated region
    $region42: #{tpu_custom_call.1} parent=1 // pred_check
      _
    $region43: #{tpu_custom_call.1} parent=1 // pred_check_branch
      %90 = sbr.rel (0) target = $region45
    $region44: #{tpu_custom_call.1} parent=1 // pred_region
      %s92 = ssub.s32 1024, 1024
      %93 = vsyncadd [#allocation12], %s92
      %s94 = sshll.u32 [#allocation11], 4
      %s95 = int_to_ptr.vmem [resolvable:$true] %s94
      %100 = dma.hbm_to_vmem [thread:$0]  %s10, 1024, %s95, [#allocation12], 64, 64, 4
    $region45: #{tpu_custom_call.1} parent=1 // pred_fallthru
      _
    // Predicated region
    $region46: #{tpu_custom_call.1} parent=1 // pred_check
      _
    $region47: #{tpu_custom_call.1} parent=1 // pred_check_branch
      %102 = sbr.rel (0) target = $region49
    $region48: #{tpu_custom_call.1} parent=1 // pred_region
      _
    $region49: #{tpu_custom_call.1} parent=1 // pred_fallthru
      _
    // Predicated region
    $region50: #{tpu_custom_call.1} parent=1 // pred_check
      _
    $region51: #{tpu_custom_call.1} parent=1 // pred_check_branch
      %104 = sbr.rel (0) target = $region53
    $region52: #{tpu_custom_call.1} parent=1 // pred_region
      _
    $region53: #{tpu_custom_call.1} parent=1 // pred_fallthru
      _
    // Predicated region
    $region54: #{tpu_custom_call.1} parent=1 // pred_check
      _
    $region55: #{tpu_custom_call.1} parent=1 // pred_check_branch
      %106 = sbr.rel (0) target = $region57
    $region56: #{tpu_custom_call.1} parent=1 // pred_region
      %107 = dma.done [#allocation3], 192
    $region57: #{tpu_custom_call.1} parent=1 // pred_fallthru
      _
    // Predicated region
    $region58: #{tpu_custom_call.1} parent=1 // pred_check
      _
    $region59: #{tpu_custom_call.1} parent=1 // pred_check_branch
      %109 = sbr.rel (0) target = $region61
    $region60: #{tpu_custom_call.1} parent=1 // pred_region
      %110 = dma.done [#allocation6], 24576
    $region61: #{tpu_custom_call.1} parent=1 // pred_fallthru
      _
    // Predicated region
    $region62: #{tpu_custom_call.1} parent=1 // pred_check
      _
    $region63: #{tpu_custom_call.1} parent=1 // pred_check_branch
      %112 = sbr.rel (0) target = $region65
    $region64: #{tpu_custom_call.1} parent=1 // pred_region
      %113 = dma.done [#allocation6], 8192
    $region65: #{tpu_custom_call.1} parent=1 // pred_fallthru
      _
    // Predicated region
    $region66: #{tpu_custom_call.1} parent=1 // pred_check
      _
    $region67: #{tpu_custom_call.1} parent=1 // pred_check_branch
      %115 = sbr.rel (0) target = $region69
    $region68: #{tpu_custom_call.1} parent=1 // pred_region
      %116 = dma.done [#allocation9], 32
    $region69: #{tpu_custom_call.1} parent=1 // pred_fallthru
      _
    // Predicated region
    $region70: #{tpu_custom_call.1} parent=1 // pred_check
      _
    $region71: #{tpu_custom_call.1} parent=1 // pred_check_branch
      %118 = sbr.rel (0) target = $region73
    $region72: #{tpu_custom_call.1} parent=1 // pred_region
      %119 = dma.done [#allocation9], 2048
    $region73: #{tpu_custom_call.1} parent=1 // pred_fallthru
      _
    // Predicated region
    $region74: #{tpu_custom_call.1} parent=1 // pred_check
      _
    $region75: #{tpu_custom_call.1} parent=1 // pred_check_branch
      %121 = sbr.rel (0) target = $region77
    $region76: #{tpu_custom_call.1} parent=1 // pred_region
      %122 = dma.done [#allocation12], 1024
    $region77: #{tpu_custom_call.1} parent=1 // pred_fallthru
      _
    %v124 = vld [vmem:[#allocation2] sm:$0xff]
    %v125 = vld [vmem:[#allocation2 + $0x8] sm:$0xf]
    %v128 = vcombine.high %v124, %v124
    %v130 = vunpack.c.l.s4 1983009808
    %v131 = vunpack.c.0.s8 %v130
    %v132 = vlaneseq
    %v133 = vshrl.u32 %v132, 7
    %v134 = vsub.s32 %v131, %v133
    %v135 = vrot.slane %v124, %v134
    %v137 = vunpack.c.l.s4 1983009808
    %v138 = vunpack.c.0.s8 %v137
    %v139 = vlaneseq
    %v140 = vshrl.u32 %v139, 7
    %v141 = vsub.s32 %v138, %v140
    %v142 = vrot.slane %v128, %v141
    %v143 = vcombine.high %v135, %v135
    %v144 = vcombine.high %v142, %v142
    %v146 = vunpack.c.l.s4 1983009808
    %v147 = vunpack.c.0.s8 %v146
    %v148 = vlaneseq
    %v149 = vshrl.u32 %v148, 7
    %v150 = vsub.s32 %v147, %v149
    %v151 = vrot.slane %v125, %v150
    %v152 = vcombine.high %v151, %v151
    %v159 = vpack.c.bf16 %v135, %v135
    %v160 = vpack.c.bf16 %v143, %v143
    %v161 = vpack.c.bf16 %v142, %v142
    %v162 = vpack.c.bf16 %v144, %v144
    %v163 = vpack.c.bf16 %v151, %v151
    %v164 = vpack.c.bf16 %v152, %v152
    %v165 = vld [vmem:[#allocation5] sm:$0xff]
    %v166 = vld [vmem:[#allocation5 + $0x8] sm:$0xff]
    %v167 = vld [vmem:[#allocation5 + $0x10] sm:$0xff]
    %v168 = vld [vmem:[#allocation5 + $0x18] sm:$0xff]
    %v169 = vld [vmem:[#allocation5 + $0x20] sm:$0xff]
    %v170 = vld [vmem:[#allocation5 + $0x28] sm:$0xff]
    %v171 = vld [vmem:[#allocation5 + $0x30] sm:$0xff]
    %v172 = vld [vmem:[#allocation5 + $0x38] sm:$0xff]
    %v173 = vld [vmem:[#allocation5 + $0x40] sm:$0xff]
    %v174 = vld [vmem:[#allocation5 + $0x48] sm:$0xff]
    %v175 = vld [vmem:[#allocation5 + $0x50] sm:$0xff]
    %v176 = vld [vmem:[#allocation5 + $0x58] sm:$0xff]
    %v177 = vld [vmem:[#allocation5 + $0x60] sm:$0xff]
    %v178 = vld [vmem:[#allocation5 + $0x68] sm:$0xff]
    %v179 = vld [vmem:[#allocation5 + $0x70] sm:$0xff]
    %v180 = vld [vmem:[#allocation5 + $0x78] sm:$0xff]
    %v181 = vld [vmem:[#allocation5 + $0x80] sm:$0xff]
    %v182 = vld [vmem:[#allocation5 + $0x88] sm:$0xff]
    %v183 = vld [vmem:[#allocation5 + $0x90] sm:$0xff]
    %v184 = vld [vmem:[#allocation5 + $0x98] sm:$0xff]
    %v185 = vld [vmem:[#allocation5 + $0xa0] sm:$0xff]
    %v186 = vld [vmem:[#allocation5 + $0xa8] sm:$0xff]
    %v187 = vld [vmem:[#allocation5 + $0xb0] sm:$0xff]
    %v188 = vld [vmem:[#allocation5 + $0xb8] sm:$0xff]
    %v189 = vld [vmem:[#allocation5 + $0xc0] sm:$0xff]
    %v190 = vld [vmem:[#allocation5 + $0xc8] sm:$0xff]
    %v191 = vld [vmem:[#allocation5 + $0xd0] sm:$0xff]
    %v192 = vld [vmem:[#allocation5 + $0xd8] sm:$0xff]
    %v193 = vld [vmem:[#allocation5 + $0xe0] sm:$0xff]
    %v194 = vld [vmem:[#allocation5 + $0xe8] sm:$0xff]
    %v195 = vld [vmem:[#allocation5 + $0xf0] sm:$0xff]
    %v196 = vld [vmem:[#allocation5 + $0xf8] sm:$0xff]
    %v197 = vld [vmem:[#allocation5 + $0x100] sm:$0xff]
    %v198 = vld [vmem:[#allocation5 + $0x108] sm:$0xff]
    %v199 = vld [vmem:[#allocation5 + $0x110] sm:$0xff]
    %v200 = vld [vmem:[#allocation5 + $0x118] sm:$0xff]
    %v201 = vld [vmem:[#allocation5 + $0x120] sm:$0xff]
    %v202 = vld [vmem:[#allocation5 + $0x128] sm:$0xff]
    %v203 = vld [vmem:[#allocation5 + $0x130] sm:$0xff]
    %v204 = vld [vmem:[#allocation5 + $0x138] sm:$0xff]
    %v205 = vld [vmem:[#allocation5 + $0x140] sm:$0xff]
    %v206 = vld [vmem:[#allocation5 + $0x148] sm:$0xff]
    %v207 = vld [vmem:[#allocation5 + $0x150] sm:$0xff]
    %v208 = vld [vmem:[#allocation5 + $0x158] sm:$0xff]
    %v209 = vld [vmem:[#allocation5 + $0x160] sm:$0xff]
    %v210 = vld [vmem:[#allocation5 + $0x168] sm:$0xff]
    %v211 = vld [vmem:[#allocation5 + $0x170] sm:$0xff]
    %v212 = vld [vmem:[#allocation5 + $0x178] sm:$0xff]
    %v213 = vld [vmem:[#allocation5 + $0x180] sm:$0xff]
    %v214 = vld [vmem:[#allocation5 + $0x188] sm:$0xff]
    %v215 = vld [vmem:[#allocation5 + $0x190] sm:$0xff]
    %v216 = vld [vmem:[#allocation5 + $0x198] sm:$0xff]
    %v217 = vld [vmem:[#allocation5 + $0x1a0] sm:$0xff]
    %v218 = vld [vmem:[#allocation5 + $0x1a8] sm:$0xff]
    %v219 = vld [vmem:[#allocation5 + $0x1b0] sm:$0xff]
    %v220 = vld [vmem:[#allocation5 + $0x1b8] sm:$0xff]
    %v221 = vld [vmem:[#allocation5 + $0x1c0] sm:$0xff]
    %v222 = vld [vmem:[#allocation5 + $0x1c8] sm:$0xff]
    %v223 = vld [vmem:[#allocation5 + $0x1d0] sm:$0xff]
    %v224 = vld [vmem:[#allocation5 + $0x1d8] sm:$0xff]
    %v225 = vld [vmem:[#allocation5 + $0x1e0] sm:$0xff]
    %v226 = vld [vmem:[#allocation5 + $0x1e8] sm:$0xff]
    %v227 = vld [vmem:[#allocation5 + $0x1f0] sm:$0xff]
    %v228 = vld [vmem:[#allocation5 + $0x1f8] sm:$0xff]
    %v229 = vld [vmem:[#allocation5 + $0x200] sm:$0xff]
    %v230 = vld [vmem:[#allocation5 + $0x208] sm:$0xff]
    %v231 = vld [vmem:[#allocation5 + $0x210] sm:$0xff]
    %v232 = vld [vmem:[#allocation5 + $0x218] sm:$0xff]
    %v233 = vld [vmem:[#allocation5 + $0x220] sm:$0xff]
    %v234 = vld [vmem:[#allocation5 + $0x228] sm:$0xff]
    %v235 = vld [vmem:[#allocation5 + $0x230] sm:$0xff]
    %v236 = vld [vmem:[#allocation5 + $0x238] sm:$0xff]
    %v237 = vld [vmem:[#allocation5 + $0x240] sm:$0xff]
    %v238 = vld [vmem:[#allocation5 + $0x248] sm:$0xff]
    %v239 = vld [vmem:[#allocation5 + $0x250] sm:$0xff]
    %v240 = vld [vmem:[#allocation5 + $0x258] sm:$0xff]
    %v241 = vld [vmem:[#allocation5 + $0x260] sm:$0xff]
    %v242 = vld [vmem:[#allocation5 + $0x268] sm:$0xff]
    %v243 = vld [vmem:[#allocation5 + $0x270] sm:$0xff]
    %v244 = vld [vmem:[#allocation5 + $0x278] sm:$0xff]
    %v245 = vld [vmem:[#allocation5 + $0x280] sm:$0xff]
    %v246 = vld [vmem:[#allocation5 + $0x288] sm:$0xff]
    %v247 = vld [vmem:[#allocation5 + $0x290] sm:$0xff]
    %v248 = vld [vmem:[#allocation5 + $0x298] sm:$0xff]
    %v249 = vld [vmem:[#allocation5 + $0x2a0] sm:$0xff]
    %v250 = vld [vmem:[#allocation5 + $0x2a8] sm:$0xff]
    %v251 = vld [vmem:[#allocation5 + $0x2b0] sm:$0xff]
    %v252 = vld [vmem:[#allocation5 + $0x2b8] sm:$0xff]
    %v253 = vld [vmem:[#allocation5 + $0x2c0] sm:$0xff]
    %v254 = vld [vmem:[#allocation5 + $0x2c8] sm:$0xff]
    %v255 = vld [vmem:[#allocation5 + $0x2d0] sm:$0xff]
    %v256 = vld [vmem:[#allocation5 + $0x2d8] sm:$0xff]
    %v257 = vld [vmem:[#allocation5 + $0x2e0] sm:$0xff]
    %v258 = vld [vmem:[#allocation5 + $0x2e8] sm:$0xff]
    %v259 = vld [vmem:[#allocation5 + $0x2f0] sm:$0xff]
    %v260 = vld [vmem:[#allocation5 + $0x2f8] sm:$0xff]
    %v261 = vld [vmem:[#allocation5 + $0x300] sm:$0xff]
    %v262 = vld [vmem:[#allocation5 + $0x308] sm:$0xff]
    %v263 = vld [vmem:[#allocation5 + $0x310] sm:$0xff]
    %v264 = vld [vmem:[#allocation5 + $0x318] sm:$0xff]
    %v265 = vld [vmem:[#allocation5 + $0x320] sm:$0xff]
    %v266 = vld [vmem:[#allocation5 + $0x328] sm:$0xff]
    %v267 = vld [vmem:[#allocation5 + $0x330] sm:$0xff]
    %v268 = vld [vmem:[#allocation5 + $0x338] sm:$0xff]
    %v269 = vld [vmem:[#allocation5 + $0x340] sm:$0xff]
    %v270 = vld [vmem:[#allocation5 + $0x348] sm:$0xff]
    %v271 = vld [vmem:[#allocation5 + $0x350] sm:$0xff]
    %v272 = vld [vmem:[#allocation5 + $0x358] sm:$0xff]
    %v273 = vld [vmem:[#allocation5 + $0x360] sm:$0xff]
    %v274 = vld [vmem:[#allocation5 + $0x368] sm:$0xff]
    %v275 = vld [vmem:[#allocation5 + $0x370] sm:$0xff]
    %v276 = vld [vmem:[#allocation5 + $0x378] sm:$0xff]
    %v277 = vld [vmem:[#allocation5 + $0x380] sm:$0xff]
    %v278 = vld [vmem:[#allocation5 + $0x388] sm:$0xff]
    %v279 = vld [vmem:[#allocation5 + $0x390] sm:$0xff]
    %v280 = vld [vmem:[#allocation5 + $0x398] sm:$0xff]
    %v281 = vld [vmem:[#allocation5 + $0x3a0] sm:$0xff]
    %v282 = vld [vmem:[#allocation5 + $0x3a8] sm:$0xff]
    %v283 = vld [vmem:[#allocation5 + $0x3b0] sm:$0xff]
    %v284 = vld [vmem:[#allocation5 + $0x3b8] sm:$0xff]
    %v285 = vld [vmem:[#allocation5 + $0x3c0] sm:$0xff]
    %v286 = vld [vmem:[#allocation5 + $0x3c8] sm:$0xff]
    %v287 = vld [vmem:[#allocation5 + $0x3d0] sm:$0xff]
    %v288 = vld [vmem:[#allocation5 + $0x3d8] sm:$0xff]
    %v289 = vld [vmem:[#allocation5 + $0x3e0] sm:$0xff]
    %v290 = vld [vmem:[#allocation5 + $0x3e8] sm:$0xff]
    %v291 = vld [vmem:[#allocation5 + $0x3f0] sm:$0xff]
    %v292 = vld [vmem:[#allocation5 + $0x3f8] sm:$0xff]
    %v293 = vld [vmem:[#allocation5 + $0x400] sm:$0xff]
    %v294 = vld [vmem:[#allocation5 + $0x408] sm:$0xff]
    %v295 = vld [vmem:[#allocation5 + $0x410] sm:$0xff]
    %v296 = vld [vmem:[#allocation5 + $0x418] sm:$0xff]
    %v297 = vld [vmem:[#allocation5 + $0x420] sm:$0xff]
    %v298 = vld [vmem:[#allocation5 + $0x428] sm:$0xff]
    %v299 = vld [vmem:[#allocation5 + $0x430] sm:$0xff]
    %v300 = vld [vmem:[#allocation5 + $0x438] sm:$0xff]
    %v301 = vld [vmem:[#allocation5 + $0x440] sm:$0xff]
    %v302 = vld [vmem:[#allocation5 + $0x448] sm:$0xff]
    %v303 = vld [vmem:[#allocation5 + $0x450] sm:$0xff]
    %v304 = vld [vmem:[#allocation5 + $0x458] sm:$0xff]
    %v305 = vld [vmem:[#allocation5 + $0x460] sm:$0xff]
    %v306 = vld [vmem:[#allocation5 + $0x468] sm:$0xff]
    %v307 = vld [vmem:[#allocation5 + $0x470] sm:$0xff]
    %v308 = vld [vmem:[#allocation5 + $0x478] sm:$0xff]
    %v309 = vld [vmem:[#allocation5 + $0x480] sm:$0xff]
    %v310 = vld [vmem:[#allocation5 + $0x488] sm:$0xff]
    %v311 = vld [vmem:[#allocation5 + $0x490] sm:$0xff]
    %v312 = vld [vmem:[#allocation5 + $0x498] sm:$0xff]
    %v313 = vld [vmem:[#allocation5 + $0x4a0] sm:$0xff]
    %v314 = vld [vmem:[#allocation5 + $0x4a8] sm:$0xff]
    %v315 = vld [vmem:[#allocation5 + $0x4b0] sm:$0xff]
    %v316 = vld [vmem:[#allocation5 + $0x4b8] sm:$0xff]
    %v317 = vld [vmem:[#allocation5 + $0x4c0] sm:$0xff]
    %v318 = vld [vmem:[#allocation5 + $0x4c8] sm:$0xff]
    %v319 = vld [vmem:[#allocation5 + $0x4d0] sm:$0xff]
    %v320 = vld [vmem:[#allocation5 + $0x4d8] sm:$0xff]
    %v321 = vld [vmem:[#allocation5 + $0x4e0] sm:$0xff]
    %v322 = vld [vmem:[#allocation5 + $0x4e8] sm:$0xff]
    %v323 = vld [vmem:[#allocation5 + $0x4f0] sm:$0xff]
    %v324 = vld [vmem:[#allocation5 + $0x4f8] sm:$0xff]
    %v325 = vld [vmem:[#allocation5 + $0x500] sm:$0xff]
    %v326 = vld [vmem:[#allocation5 + $0x508] sm:$0xff]
    %v327 = vld [vmem:[#allocation5 + $0x510] sm:$0xff]
    %v328 = vld [vmem:[#allocation5 + $0x518] sm:$0xff]
    %v329 = vld [vmem:[#allocation5 + $0x520] sm:$0xff]
    %v330 = vld [vmem:[#allocation5 + $0x528] sm:$0xff]
    %v331 = vld [vmem:[#allocation5 + $0x530] sm:$0xff]
    %v332 = vld [vmem:[#allocation5 + $0x538] sm:$0xff]
    %v333 = vld [vmem:[#allocation5 + $0x540] sm:$0xff]
    %v334 = vld [vmem:[#allocation5 + $0x548] sm:$0xff]
    %v335 = vld [vmem:[#allocation5 + $0x550] sm:$0xff]
    %v336 = vld [vmem:[#allocation5 + $0x558] sm:$0xff]
    %v337 = vld [vmem:[#allocation5 + $0x560] sm:$0xff]
    %v338 = vld [vmem:[#allocation5 + $0x568] sm:$0xff]
    %v339 = vld [vmem:[#allocation5 + $0x570] sm:$0xff]
    %v340 = vld [vmem:[#allocation5 + $0x578] sm:$0xff]
    %v341 = vld [vmem:[#allocation5 + $0x580] sm:$0xff]
    %v342 = vld [vmem:[#allocation5 + $0x588] sm:$0xff]
    %v343 = vld [vmem:[#allocation5 + $0x590] sm:$0xff]
    %v344 = vld [vmem:[#allocation5 + $0x598] sm:$0xff]
    %v345 = vld [vmem:[#allocation5 + $0x5a0] sm:$0xff]
    %v346 = vld [vmem:[#allocation5 + $0x5a8] sm:$0xff]
    %v347 = vld [vmem:[#allocation5 + $0x5b0] sm:$0xff]
    %v348 = vld [vmem:[#allocation5 + $0x5b8] sm:$0xff]
    %v349 = vld [vmem:[#allocation5 + $0x5c0] sm:$0xff]
    %v350 = vld [vmem:[#allocation5 + $0x5c8] sm:$0xff]
    %v351 = vld [vmem:[#allocation5 + $0x5d0] sm:$0xff]
    %v352 = vld [vmem:[#allocation5 + $0x5d8] sm:$0xff]
    %v353 = vld [vmem:[#allocation5 + $0x5e0] sm:$0xff]
    %v354 = vld [vmem:[#allocation5 + $0x5e8] sm:$0xff]
    %v355 = vld [vmem:[#allocation5 + $0x5f0] sm:$0xff]
    %v356 = vld [vmem:[#allocation5 + $0x5f8] sm:$0xff]
    %v357 = vld [vmem:[%s3] sm:$0xf]
    %v359 = vlaneseq
    %v360 = vshrl.u32 %v359, 7
    %v361 = vsub.s32 0, %v360
    %v362 = vrot.slane %v357, %v361
    %v363 = vlaneseq
    %v364 = vshrl.u32 %v363, 7
    %v365 = vsub.s32 1, %v364
    %v366 = vrot.slane %v357, %v365
    %v367 = vlaneseq
    %v368 = vshrl.u32 %v367, 7
    %v369 = vsub.s32 2, %v368
    %v370 = vrot.slane %v357, %v369
    %v371 = vlaneseq
    %v372 = vshrl.u32 %v371, 7
    %v373 = vsub.s32 3, %v372
    %v374 = vrot.slane %v357, %v373
    %v571 = vunpack.c.l.b16 %v165
    %v572 = vunpack.c.h.b16 %v165
    %v573 = vunpack.c.l.b16 %v166
    %v574 = vunpack.c.h.b16 %v166
    %v575 = vunpack.c.l.b16 %v167
    %v576 = vunpack.c.h.b16 %v167
    %v577 = vunpack.c.l.b16 %v168
    %v578 = vunpack.c.h.b16 %v168
    %v579 = vunpack.c.l.b16 %v169
    %v580 = vunpack.c.h.b16 %v169
    %v581 = vunpack.c.l.b16 %v170
    %v582 = vunpack.c.h.b16 %v170
    %v583 = vunpack.c.l.b16 %v171
    %v584 = vunpack.c.h.b16 %v171
    %v585 = vunpack.c.l.b16 %v172
    %v586 = vunpack.c.h.b16 %v172
    %v587 = vunpack.c.l.b16 %v173
    %v588 = vunpack.c.h.b16 %v173
    %v589 = vunpack.c.l.b16 %v174
    %v590 = vunpack.c.h.b16 %v174
    %v591 = vunpack.c.l.b16 %v175
    %v592 = vunpack.c.h.b16 %v175
    %v593 = vunpack.c.l.b16 %v176
    %v594 = vunpack.c.h.b16 %v176
    %v595 = vunpack.c.l.b16 %v177
    %v596 = vunpack.c.h.b16 %v177
    %v597 = vunpack.c.l.b16 %v178
    %v598 = vunpack.c.h.b16 %v178
    %v599 = vunpack.c.l.b16 %v179
    %v600 = vunpack.c.h.b16 %v179
    %v601 = vunpack.c.l.b16 %v180
    %v602 = vunpack.c.h.b16 %v180
    %v603 = vunpack.c.l.b16 %v181
    %v604 = vunpack.c.h.b16 %v181
    %v605 = vunpack.c.l.b16 %v182
    %v606 = vunpack.c.h.b16 %v182
    %v607 = vunpack.c.l.b16 %v183
    %v608 = vunpack.c.h.b16 %v183
    %v609 = vunpack.c.l.b16 %v184
    %v610 = vunpack.c.h.b16 %v184
    %v611 = vunpack.c.l.b16 %v185
    %v612 = vunpack.c.h.b16 %v185
    %v613 = vunpack.c.l.b16 %v186
    %v614 = vunpack.c.h.b16 %v186
    %v615 = vunpack.c.l.b16 %v187
    %v616 = vunpack.c.h.b16 %v187
    %v617 = vunpack.c.l.b16 %v188
    %v618 = vunpack.c.h.b16 %v188
    %v619 = vunpack.c.l.b16 %v189
    %v620 = vunpack.c.h.b16 %v189
    %v621 = vunpack.c.l.b16 %v190
    %v622 = vunpack.c.h.b16 %v190
    %v623 = vunpack.c.l.b16 %v191
    %v624 = vunpack.c.h.b16 %v191
    %v625 = vunpack.c.l.b16 %v192
    %v626 = vunpack.c.h.b16 %v192
    %v627 = vunpack.c.l.b16 %v193
    %v628 = vunpack.c.h.b16 %v193
    %v629 = vunpack.c.l.b16 %v194
    %v630 = vunpack.c.h.b16 %v194
    %v631 = vunpack.c.l.b16 %v195
    %v632 = vunpack.c.h.b16 %v195
    %v633 = vunpack.c.l.b16 %v196
    %v634 = vunpack.c.h.b16 %v196
    %v635 = vunpack.c.l.b16 %v197
    %v636 = vunpack.c.h.b16 %v197
    %v637 = vunpack.c.l.b16 %v198
    %v638 = vunpack.c.h.b16 %v198
    %v639 = vunpack.c.l.b16 %v199
    %v640 = vunpack.c.h.b16 %v199
    %v641 = vunpack.c.l.b16 %v200
    %v642 = vunpack.c.h.b16 %v200
    %v643 = vunpack.c.l.b16 %v201
    %v644 = vunpack.c.h.b16 %v201
    %v645 = vunpack.c.l.b16 %v202
    %v646 = vunpack.c.h.b16 %v202
    %v647 = vunpack.c.l.b16 %v203
    %v648 = vunpack.c.h.b16 %v203
    %v649 = vunpack.c.l.b16 %v204
    %v650 = vunpack.c.h.b16 %v204
    %v651 = vunpack.c.l.b16 %v205
    %v652 = vunpack.c.h.b16 %v205
    %v653 = vunpack.c.l.b16 %v206
    %v654 = vunpack.c.h.b16 %v206
    %v655 = vunpack.c.l.b16 %v207
    %v656 = vunpack.c.h.b16 %v207
    %v657 = vunpack.c.l.b16 %v208
    %v658 = vunpack.c.h.b16 %v208
    %v659 = vunpack.c.l.b16 %v209
    %v660 = vunpack.c.h.b16 %v209
    %v661 = vunpack.c.l.b16 %v210
    %v662 = vunpack.c.h.b16 %v210
    %v663 = vunpack.c.l.b16 %v211
    %v664 = vunpack.c.h.b16 %v211
    %v665 = vunpack.c.l.b16 %v212
    %v666 = vunpack.c.h.b16 %v212
    %v667 = vunpack.c.l.b16 %v213
    %v668 = vunpack.c.h.b16 %v213
    %v669 = vunpack.c.l.b16 %v214
    %v670 = vunpack.c.h.b16 %v214
    %v671 = vunpack.c.l.b16 %v215
    %v672 = vunpack.c.h.b16 %v215
    %v673 = vunpack.c.l.b16 %v216
    %v674 = vunpack.c.h.b16 %v216
    %v675 = vunpack.c.l.b16 %v217
    %v676 = vunpack.c.h.b16 %v217
    %v677 = vunpack.c.l.b16 %v218
    %v678 = vunpack.c.h.b16 %v218
    %v679 = vunpack.c.l.b16 %v219
    %v680 = vunpack.c.h.b16 %v219
    %v681 = vunpack.c.l.b16 %v220
    %v682 = vunpack.c.h.b16 %v220
    %v683 = vunpack.c.l.b16 %v221
    %v684 = vunpack.c.h.b16 %v221
    %v685 = vunpack.c.l.b16 %v222
    %v686 = vunpack.c.h.b16 %v222
    %v687 = vunpack.c.l.b16 %v223
    %v688 = vunpack.c.h.b16 %v223
    %v689 = vunpack.c.l.b16 %v224
    %v690 = vunpack.c.h.b16 %v224
    %v691 = vunpack.c.l.b16 %v225
    %v692 = vunpack.c.h.b16 %v225
    %v693 = vunpack.c.l.b16 %v226
    %v694 = vunpack.c.h.b16 %v226
    %v695 = vunpack.c.l.b16 %v227
    %v696 = vunpack.c.h.b16 %v227
    %v697 = vunpack.c.l.b16 %v228
    %v698 = vunpack.c.h.b16 %v228
    %v699 = vunpack.c.l.b16 %v229
    %v700 = vunpack.c.h.b16 %v229
    %v701 = vunpack.c.l.b16 %v230
    %v702 = vunpack.c.h.b16 %v230
    %v703 = vunpack.c.l.b16 %v231
    %v704 = vunpack.c.h.b16 %v231
    %v705 = vunpack.c.l.b16 %v232
    %v706 = vunpack.c.h.b16 %v232
    %v707 = vunpack.c.l.b16 %v233
    %v708 = vunpack.c.h.b16 %v233
    %v709 = vunpack.c.l.b16 %v234
    %v710 = vunpack.c.h.b16 %v234
    %v711 = vunpack.c.l.b16 %v235
    %v712 = vunpack.c.h.b16 %v235
    %v713 = vunpack.c.l.b16 %v236
    %v714 = vunpack.c.h.b16 %v236
    %v715 = vunpack.c.l.b16 %v237
    %v716 = vunpack.c.h.b16 %v237
    %v717 = vunpack.c.l.b16 %v238
    %v718 = vunpack.c.h.b16 %v238
    %v719 = vunpack.c.l.b16 %v239
    %v720 = vunpack.c.h.b16 %v239
    %v721 = vunpack.c.l.b16 %v240
    %v722 = vunpack.c.h.b16 %v240
    %v723 = vunpack.c.l.b16 %v241
    %v724 = vunpack.c.h.b16 %v241
    %v725 = vunpack.c.l.b16 %v242
    %v726 = vunpack.c.h.b16 %v242
    %v727 = vunpack.c.l.b16 %v243
    %v728 = vunpack.c.h.b16 %v243
    %v729 = vunpack.c.l.b16 %v244
    %v730 = vunpack.c.h.b16 %v244
    %v731 = vunpack.c.l.b16 %v245
    %v732 = vunpack.c.h.b16 %v245
    %v733 = vunpack.c.l.b16 %v246
    %v734 = vunpack.c.h.b16 %v246
    %v735 = vunpack.c.l.b16 %v247
    %v736 = vunpack.c.h.b16 %v247
    %v737 = vunpack.c.l.b16 %v248
    %v738 = vunpack.c.h.b16 %v248
    %v739 = vunpack.c.l.b16 %v249
    %v740 = vunpack.c.h.b16 %v249
    %v741 = vunpack.c.l.b16 %v250
    %v742 = vunpack.c.h.b16 %v250
    %v743 = vunpack.c.l.b16 %v251
    %v744 = vunpack.c.h.b16 %v251
    %v745 = vunpack.c.l.b16 %v252
    %v746 = vunpack.c.h.b16 %v252
    %v747 = vunpack.c.l.b16 %v253
    %v748 = vunpack.c.h.b16 %v253
    %v749 = vunpack.c.l.b16 %v254
    %v750 = vunpack.c.h.b16 %v254
    %v751 = vunpack.c.l.b16 %v255
    %v752 = vunpack.c.h.b16 %v255
    %v753 = vunpack.c.l.b16 %v256
    %v754 = vunpack.c.h.b16 %v256
    %v755 = vunpack.c.l.b16 %v257
    %v756 = vunpack.c.h.b16 %v257
    %v757 = vunpack.c.l.b16 %v258
    %v758 = vunpack.c.h.b16 %v258
    %v759 = vunpack.c.l.b16 %v259
    %v760 = vunpack.c.h.b16 %v259
    %v761 = vunpack.c.l.b16 %v260
    %v762 = vunpack.c.h.b16 %v260
    %v763 = vunpack.c.l.b16 %v261
    %v764 = vunpack.c.h.b16 %v261
    %v765 = vunpack.c.l.b16 %v262
    %v766 = vunpack.c.h.b16 %v262
    %v767 = vunpack.c.l.b16 %v263
    %v768 = vunpack.c.h.b16 %v263
    %v769 = vunpack.c.l.b16 %v264
    %v770 = vunpack.c.h.b16 %v264
    %v771 = vunpack.c.l.b16 %v265
    %v772 = vunpack.c.h.b16 %v265
    %v773 = vunpack.c.l.b16 %v266
    %v774 = vunpack.c.h.b16 %v266
    %v775 = vunpack.c.l.b16 %v267
    %v776 = vunpack.c.h.b16 %v267
    %v777 = vunpack.c.l.b16 %v268
    %v778 = vunpack.c.h.b16 %v268
    %v779 = vunpack.c.l.b16 %v269
    %v780 = vunpack.c.h.b16 %v269
    %v781 = vunpack.c.l.b16 %v270
    %v782 = vunpack.c.h.b16 %v270
    %v783 = vunpack.c.l.b16 %v271
    %v784 = vunpack.c.h.b16 %v271
    %v785 = vunpack.c.l.b16 %v272
    %v786 = vunpack.c.h.b16 %v272
    %v787 = vunpack.c.l.b16 %v273
    %v788 = vunpack.c.h.b16 %v273
    %v789 = vunpack.c.l.b16 %v274
    %v790 = vunpack.c.h.b16 %v274
    %v791 = vunpack.c.l.b16 %v275
    %v792 = vunpack.c.h.b16 %v275
    %v793 = vunpack.c.l.b16 %v276
    %v794 = vunpack.c.h.b16 %v276
    %v795 = vunpack.c.l.b16 %v277
    %v796 = vunpack.c.h.b16 %v277
    %v797 = vunpack.c.l.b16 %v278
    %v798 = vunpack.c.h.b16 %v278
    %v799 = vunpack.c.l.b16 %v279
    %v800 = vunpack.c.h.b16 %v279
    %v801 = vunpack.c.l.b16 %v280
    %v802 = vunpack.c.h.b16 %v280
    %v803 = vunpack.c.l.b16 %v281
    %v804 = vunpack.c.h.b16 %v281
    %v805 = vunpack.c.l.b16 %v282
    %v806 = vunpack.c.h.b16 %v282
    %v807 = vunpack.c.l.b16 %v283
    %v808 = vunpack.c.h.b16 %v283
    %v809 = vunpack.c.l.b16 %v284
    %v810 = vunpack.c.h.b16 %v284
    %v811 = vunpack.c.l.b16 %v285
    %v812 = vunpack.c.h.b16 %v285
    %v813 = vunpack.c.l.b16 %v286
    %v814 = vunpack.c.h.b16 %v286
    %v815 = vunpack.c.l.b16 %v287
    %v816 = vunpack.c.h.b16 %v287
    %v817 = vunpack.c.l.b16 %v288
    %v818 = vunpack.c.h.b16 %v288
    %v819 = vunpack.c.l.b16 %v289
    %v820 = vunpack.c.h.b16 %v289
    %v821 = vunpack.c.l.b16 %v290
    %v822 = vunpack.c.h.b16 %v290
    %v823 = vunpack.c.l.b16 %v291
    %v824 = vunpack.c.h.b16 %v291
    %v825 = vunpack.c.l.b16 %v292
    %v826 = vunpack.c.h.b16 %v292
    %v827 = vunpack.c.l.b16 %v293
    %v828 = vunpack.c.h.b16 %v293
    %v829 = vunpack.c.l.b16 %v294
    %v830 = vunpack.c.h.b16 %v294
    %v831 = vunpack.c.l.b16 %v295
    %v832 = vunpack.c.h.b16 %v295
    %v833 = vunpack.c.l.b16 %v296
    %v834 = vunpack.c.h.b16 %v296
    %v835 = vunpack.c.l.b16 %v297
    %v836 = vunpack.c.h.b16 %v297
    %v837 = vunpack.c.l.b16 %v298
    %v838 = vunpack.c.h.b16 %v298
    %v839 = vunpack.c.l.b16 %v299
    %v840 = vunpack.c.h.b16 %v299
    %v841 = vunpack.c.l.b16 %v300
    %v842 = vunpack.c.h.b16 %v300
    %v843 = vunpack.c.l.b16 %v301
    %v844 = vunpack.c.h.b16 %v301
    %v845 = vunpack.c.l.b16 %v302
    %v846 = vunpack.c.h.b16 %v302
    %v847 = vunpack.c.l.b16 %v303
    %v848 = vunpack.c.h.b16 %v303
    %v849 = vunpack.c.l.b16 %v304
    %v850 = vunpack.c.h.b16 %v304
    %v851 = vunpack.c.l.b16 %v305
    %v852 = vunpack.c.h.b16 %v305
    %v853 = vunpack.c.l.b16 %v306
    %v854 = vunpack.c.h.b16 %v306
    %v855 = vunpack.c.l.b16 %v307
    %v856 = vunpack.c.h.b16 %v307
    %v857 = vunpack.c.l.b16 %v308
    %v858 = vunpack.c.h.b16 %v308
    %v859 = vunpack.c.l.b16 %v309
    %v860 = vunpack.c.h.b16 %v309
    %v861 = vunpack.c.l.b16 %v310
    %v862 = vunpack.c.h.b16 %v310
    %v863 = vunpack.c.l.b16 %v311
    %v864 = vunpack.c.h.b16 %v311
    %v865 = vunpack.c.l.b16 %v312
    %v866 = vunpack.c.h.b16 %v312
    %v867 = vunpack.c.l.b16 %v313
    %v868 = vunpack.c.h.b16 %v313
    %v869 = vunpack.c.l.b16 %v314
    %v870 = vunpack.c.h.b16 %v314
    %v871 = vunpack.c.l.b16 %v315
    %v872 = vunpack.c.h.b16 %v315
    %v873 = vunpack.c.l.b16 %v316
    %v874 = vunpack.c.h.b16 %v316
    %v875 = vunpack.c.l.b16 %v317
    %v876 = vunpack.c.h.b16 %v317
    %v877 = vunpack.c.l.b16 %v318
    %v878 = vunpack.c.h.b16 %v318
    %v879 = vunpack.c.l.b16 %v319
    %v880 = vunpack.c.h.b16 %v319
    %v881 = vunpack.c.l.b16 %v320
    %v882 = vunpack.c.h.b16 %v320
    %v883 = vunpack.c.l.b16 %v321
    %v884 = vunpack.c.h.b16 %v321
    %v885 = vunpack.c.l.b16 %v322
    %v886 = vunpack.c.h.b16 %v322
    %v887 = vunpack.c.l.b16 %v323
    %v888 = vunpack.c.h.b16 %v323
    %v889 = vunpack.c.l.b16 %v324
    %v890 = vunpack.c.h.b16 %v324
    %v891 = vunpack.c.l.b16 %v325
    %v892 = vunpack.c.h.b16 %v325
    %v893 = vunpack.c.l.b16 %v326
    %v894 = vunpack.c.h.b16 %v326
    %v895 = vunpack.c.l.b16 %v327
    %v896 = vunpack.c.h.b16 %v327
    %v897 = vunpack.c.l.b16 %v328
    %v898 = vunpack.c.h.b16 %v328
    %v899 = vunpack.c.l.b16 %v329
    %v900 = vunpack.c.h.b16 %v329
    %v901 = vunpack.c.l.b16 %v330
    %v902 = vunpack.c.h.b16 %v330
    %v903 = vunpack.c.l.b16 %v331
    %v904 = vunpack.c.h.b16 %v331
    %v905 = vunpack.c.l.b16 %v332
    %v906 = vunpack.c.h.b16 %v332
    %v907 = vunpack.c.l.b16 %v333
    %v908 = vunpack.c.h.b16 %v333
    %v909 = vunpack.c.l.b16 %v334
    %v910 = vunpack.c.h.b16 %v334
    %v911 = vunpack.c.l.b16 %v335
    %v912 = vunpack.c.h.b16 %v335
    %v913 = vunpack.c.l.b16 %v336
    %v914 = vunpack.c.h.b16 %v336
    %v915 = vunpack.c.l.b16 %v337
    %v916 = vunpack.c.h.b16 %v337
    %v917 = vunpack.c.l.b16 %v338
    %v918 = vunpack.c.h.b16 %v338
    %v919 = vunpack.c.l.b16 %v339
    %v920 = vunpack.c.h.b16 %v339
    %v921 = vunpack.c.l.b16 %v340
    %v922 = vunpack.c.h.b16 %v340
    %v923 = vunpack.c.l.b16 %v341
    %v924 = vunpack.c.h.b16 %v341
    %v925 = vunpack.c.l.b16 %v342
    %v926 = vunpack.c.h.b16 %v342
    %v927 = vunpack.c.l.b16 %v343
    %v928 = vunpack.c.h.b16 %v343
    %v929 = vunpack.c.l.b16 %v344
    %v930 = vunpack.c.h.b16 %v344
    %v931 = vunpack.c.l.b16 %v345
    %v932 = vunpack.c.h.b16 %v345
    %v933 = vunpack.c.l.b16 %v346
    %v934 = vunpack.c.h.b16 %v346
    %v935 = vunpack.c.l.b16 %v347
    %v936 = vunpack.c.h.b16 %v347
    %v937 = vunpack.c.l.b16 %v348
    %v938 = vunpack.c.h.b16 %v348
    %v939 = vunpack.c.l.b16 %v349
    %v940 = vunpack.c.h.b16 %v349
    %v941 = vunpack.c.l.b16 %v350
    %v942 = vunpack.c.h.b16 %v350
    %v943 = vunpack.c.l.b16 %v351
    %v944 = vunpack.c.h.b16 %v351
    %v945 = vunpack.c.l.b16 %v352
    %v946 = vunpack.c.h.b16 %v352
    %v947 = vunpack.c.l.b16 %v353
    %v948 = vunpack.c.h.b16 %v353
    %v949 = vunpack.c.l.b16 %v354
    %v950 = vunpack.c.h.b16 %v354
    %v951 = vunpack.c.l.b16 %v355
    %v952 = vunpack.c.h.b16 %v355
    %v953 = vunpack.c.l.b16 %v356
    %v954 = vunpack.c.h.b16 %v356
    %v955 = vpack.c.b16 %v575, %v571
    %v956 = vpack.c.b16 %v576, %v572
    %v957 = vpack.c.b16 %v577, %v573
    %v958 = vpack.c.b16 %v578, %v574
    %v959 = vpack.c.b16 %v583, %v579
    %v960 = vpack.c.b16 %v584, %v580
    %v961 = vpack.c.b16 %v585, %v581
    %v962 = vpack.c.b16 %v586, %v582
    %v963 = vpack.c.b16 %v591, %v587
    %v964 = vpack.c.b16 %v592, %v588
    %v965 = vpack.c.b16 %v593, %v589
    %v966 = vpack.c.b16 %v594, %v590
    %v967 = vpack.c.b16 %v599, %v595
    %v968 = vpack.c.b16 %v600, %v596
    %v969 = vpack.c.b16 %v601, %v597
    %v970 = vpack.c.b16 %v602, %v598
    %v971 = vpack.c.b16 %v607, %v603
    %v972 = vpack.c.b16 %v608, %v604
    %v973 = vpack.c.b16 %v609, %v605
    %v974 = vpack.c.b16 %v610, %v606
    %v975 = vpack.c.b16 %v615, %v611
    %v976 = vpack.c.b16 %v616, %v612
    %v977 = vpack.c.b16 %v617, %v613
    %v978 = vpack.c.b16 %v618, %v614
    %v979 = vpack.c.b16 %v623, %v619
    %v980 = vpack.c.b16 %v624, %v620
    %v981 = vpack.c.b16 %v625, %v621
    %v982 = vpack.c.b16 %v626, %v622
    %v983 = vpack.c.b16 %v631, %v627
    %v984 = vpack.c.b16 %v632, %v628
    %v985 = vpack.c.b16 %v633, %v629
    %v986 = vpack.c.b16 %v634, %v630
    %v987 = vpack.c.b16 %v639, %v635
    %v988 = vpack.c.b16 %v640, %v636
    %v989 = vpack.c.b16 %v641, %v637
    %v990 = vpack.c.b16 %v642, %v638
    %v991 = vpack.c.b16 %v647, %v643
    %v992 = vpack.c.b16 %v648, %v644
    %v993 = vpack.c.b16 %v649, %v645
    %v994 = vpack.c.b16 %v650, %v646
    %v995 = vpack.c.b16 %v655, %v651
    %v996 = vpack.c.b16 %v656, %v652
    %v997 = vpack.c.b16 %v657, %v653
    %v998 = vpack.c.b16 %v658, %v654
    %v999 = vpack.c.b16 %v663, %v659
    %v1000 = vpack.c.b16 %v664, %v660
    %v1001 = vpack.c.b16 %v665, %v661
    %v1002 = vpack.c.b16 %v666, %v662
    %v1003 = vpack.c.b16 %v671, %v667
    %v1004 = vpack.c.b16 %v672, %v668
    %v1005 = vpack.c.b16 %v673, %v669
    %v1006 = vpack.c.b16 %v674, %v670
    %v1007 = vpack.c.b16 %v679, %v675
    %v1008 = vpack.c.b16 %v680, %v676
    %v1009 = vpack.c.b16 %v681, %v677
    %v1010 = vpack.c.b16 %v682, %v678
    %v1011 = vpack.c.b16 %v687, %v683
    %v1012 = vpack.c.b16 %v688, %v684
    %v1013 = vpack.c.b16 %v689, %v685
    %v1014 = vpack.c.b16 %v690, %v686
    %v1015 = vpack.c.b16 %v695, %v691
    %v1016 = vpack.c.b16 %v696, %v692
    %v1017 = vpack.c.b16 %v697, %v693
    %v1018 = vpack.c.b16 %v698, %v694
    %v1019 = vpack.c.b16 %v703, %v699
    %v1020 = vpack.c.b16 %v704, %v700
    %v1021 = vpack.c.b16 %v705, %v701
    %v1022 = vpack.c.b16 %v706, %v702
    %v1023 = vpack.c.b16 %v711, %v707
    %v1024 = vpack.c.b16 %v712, %v708
    %v1025 = vpack.c.b16 %v713, %v709
    %v1026 = vpack.c.b16 %v714, %v710
    %v1027 = vpack.c.b16 %v719, %v715
    %v1028 = vpack.c.b16 %v720, %v716
    %v1029 = vpack.c.b16 %v721, %v717
    %v1030 = vpack.c.b16 %v722, %v718
    %v1031 = vpack.c.b16 %v727, %v723
    %v1032 = vpack.c.b16 %v728, %v724
    %v1033 = vpack.c.b16 %v729, %v725
    %v1034 = vpack.c.b16 %v730, %v726
    %v1035 = vpack.c.b16 %v735, %v731
    %v1036 = vpack.c.b16 %v736, %v732
    %v1037 = vpack.c.b16 %v737, %v733
    %v1038 = vpack.c.b16 %v738, %v734
    %v1039 = vpack.c.b16 %v743, %v739
    %v1040 = vpack.c.b16 %v744, %v740
    %v1041 = vpack.c.b16 %v745, %v741
    %v1042 = vpack.c.b16 %v746, %v742
    %v1043 = vpack.c.b16 %v751, %v747
    %v1044 = vpack.c.b16 %v752, %v748
    %v1045 = vpack.c.b16 %v753, %v749
    %v1046 = vpack.c.b16 %v754, %v750
    %v1047 = vpack.c.b16 %v759, %v755
    %v1048 = vpack.c.b16 %v760, %v756
    %v1049 = vpack.c.b16 %v761, %v757
    %v1050 = vpack.c.b16 %v762, %v758
    %v1051 = vpack.c.b16 %v767, %v763
    %v1052 = vpack.c.b16 %v768, %v764
    %v1053 = vpack.c.b16 %v769, %v765
    %v1054 = vpack.c.b16 %v770, %v766
    %v1055 = vpack.c.b16 %v775, %v771
    %v1056 = vpack.c.b16 %v776, %v772
    %v1057 = vpack.c.b16 %v777, %v773
    %v1058 = vpack.c.b16 %v778, %v774
    %v1059 = vpack.c.b16 %v783, %v779
    %v1060 = vpack.c.b16 %v784, %v780
    %v1061 = vpack.c.b16 %v785, %v781
    %v1062 = vpack.c.b16 %v786, %v782
    %v1063 = vpack.c.b16 %v791, %v787
    %v1064 = vpack.c.b16 %v792, %v788
    %v1065 = vpack.c.b16 %v793, %v789
    %v1066 = vpack.c.b16 %v794, %v790
    %v1067 = vpack.c.b16 %v799, %v795
    %v1068 = vpack.c.b16 %v800, %v796
    %v1069 = vpack.c.b16 %v801, %v797
    %v1070 = vpack.c.b16 %v802, %v798
    %v1071 = vpack.c.b16 %v807, %v803
    %v1072 = vpack.c.b16 %v808, %v804
    %v1073 = vpack.c.b16 %v809, %v805
    %v1074 = vpack.c.b16 %v810, %v806
    %v1075 = vpack.c.b16 %v815, %v811
    %v1076 = vpack.c.b16 %v816, %v812
    %v1077 = vpack.c.b16 %v817, %v813
    %v1078 = vpack.c.b16 %v818, %v814
    %v1079 = vpack.c.b16 %v823, %v819
    %v1080 = vpack.c.b16 %v824, %v820
    %v1081 = vpack.c.b16 %v825, %v821
    %v1082 = vpack.c.b16 %v826, %v822
    %v1083 = vpack.c.b16 %v831, %v827
    %v1084 = vpack.c.b16 %v832, %v828
    %v1085 = vpack.c.b16 %v833, %v829
    %v1086 = vpack.c.b16 %v834, %v830
    %v1087 = vpack.c.b16 %v839, %v835
    %v1088 = vpack.c.b16 %v840, %v836
    %v1089 = vpack.c.b16 %v841, %v837
    %v1090 = vpack.c.b16 %v842, %v838
    %v1091 = vpack.c.b16 %v847, %v843
    %v1092 = vpack.c.b16 %v848, %v844
    %v1093 = vpack.c.b16 %v849, %v845
    %v1094 = vpack.c.b16 %v850, %v846
    %v1095 = vpack.c.b16 %v855, %v851
    %v1096 = vpack.c.b16 %v856, %v852
    %v1097 = vpack.c.b16 %v857, %v853
    %v1098 = vpack.c.b16 %v858, %v854
    %v1099 = vpack.c.b16 %v863, %v859
    %v1100 = vpack.c.b16 %v864, %v860
    %v1101 = vpack.c.b16 %v865, %v861
    %v1102 = vpack.c.b16 %v866, %v862
    %v1103 = vpack.c.b16 %v871, %v867
    %v1104 = vpack.c.b16 %v872, %v868
    %v1105 = vpack.c.b16 %v873, %v869
    %v1106 = vpack.c.b16 %v874, %v870
    %v1107 = vpack.c.b16 %v879, %v875
    %v1108 = vpack.c.b16 %v880, %v876
    %v1109 = vpack.c.b16 %v881, %v877
    %v1110 = vpack.c.b16 %v882, %v878
    %v1111 = vpack.c.b16 %v887, %v883
    %v1112 = vpack.c.b16 %v888, %v884
    %v1113 = vpack.c.b16 %v889, %v885
    %v1114 = vpack.c.b16 %v890, %v886
    %v1115 = vpack.c.b16 %v895, %v891
    %v1116 = vpack.c.b16 %v896, %v892
    %v1117 = vpack.c.b16 %v897, %v893
    %v1118 = vpack.c.b16 %v898, %v894
    %v1119 = vpack.c.b16 %v903, %v899
    %v1120 = vpack.c.b16 %v904, %v900
    %v1121 = vpack.c.b16 %v905, %v901
    %v1122 = vpack.c.b16 %v906, %v902
    %v1123 = vpack.c.b16 %v911, %v907
    %v1124 = vpack.c.b16 %v912, %v908
    %v1125 = vpack.c.b16 %v913, %v909
    %v1126 = vpack.c.b16 %v914, %v910
    %v1127 = vpack.c.b16 %v919, %v915
    %v1128 = vpack.c.b16 %v920, %v916
    %v1129 = vpack.c.b16 %v921, %v917
    %v1130 = vpack.c.b16 %v922, %v918
    %v1131 = vpack.c.b16 %v927, %v923
    %v1132 = vpack.c.b16 %v928, %v924
    %v1133 = vpack.c.b16 %v929, %v925
    %v1134 = vpack.c.b16 %v930, %v926
    %v1135 = vpack.c.b16 %v935, %v931
    %v1136 = vpack.c.b16 %v936, %v932
    %v1137 = vpack.c.b16 %v937, %v933
    %v1138 = vpack.c.b16 %v938, %v934
    %v1139 = vpack.c.b16 %v943, %v939
    %v1140 = vpack.c.b16 %v944, %v940
    %v1141 = vpack.c.b16 %v945, %v941
    %v1142 = vpack.c.b16 %v946, %v942
    %v1143 = vpack.c.b16 %v951, %v947
    %v1144 = vpack.c.b16 %v952, %v948
    %v1145 = vpack.c.b16 %v953, %v949
    %v1146 = vpack.c.b16 %v954, %v950
    %1339 = vmatprep.subr.bf16.mxu0 %v956
    %1340 = vmatpush1.bf16.msra.mxu0 %v955
    %1341 = vmatprep.subr.bf16.mxu0 %v960
    %1342 = vmatpush1.bf16.msra.mxu0 %v959
    %1343 = vmatprep.subr.bf16.mxu0 %v964
    %1344 = vmatpush1.bf16.msra.mxu0 %v963
    %1345 = vmatprep.subr.bf16.mxu0 %v968
    %1346 = vmatpush1.bf16.msra.mxu0 %v967
    %1347 = vmatprep.subr.bf16.mxu0 %v972
    %1348 = vmatpush1.bf16.msra.mxu0 %v971
    %1349 = vmatprep.subr.bf16.mxu0 %v976
    %1350 = vmatpush1.bf16.msra.mxu0 %v975
    %1351 = vmatprep.subr.bf16.mxu0 %v980
    %1352 = vmatpush1.bf16.msra.mxu0 %v979
    %1353 = vmatprep.subr.bf16.mxu0 %v984
    %1354 = vmatpush1.bf16.msra.mxu0 %v983
    %1355 = vmatprep.subr.bf16.mxu0 %v988
    %1356 = vmatpush1.bf16.msra.mxu0 %v987
    %1357 = vmatprep.subr.bf16.mxu0 %v992
    %1358 = vmatpush1.bf16.msra.mxu0 %v991
    %1359 = vmatprep.subr.bf16.mxu0 %v996
    %1360 = vmatpush1.bf16.msra.mxu0 %v995
    %1361 = vmatprep.subr.bf16.mxu0 %v1000
    %1362 = vmatpush1.bf16.msra.mxu0 %v999
    %1363 = vmatprep.subr.bf16.mxu0 %v1004
    %1364 = vmatpush1.bf16.msra.mxu0 %v1003
    %1365 = vmatprep.subr.bf16.mxu0 %v1008
    %1366 = vmatpush1.bf16.msra.mxu0 %v1007
    %1367 = vmatprep.subr.bf16.mxu0 %v1012
    %1368 = vmatpush1.bf16.msra.mxu0 %v1011
    %1369 = vmatprep.subr.bf16.mxu0 %v1016
    %1370 = vmatpush1.bf16.msra.mxu0 %v1015
    %1371 = vmatprep.mubr.bf16.mxu0 %v160
    %1372 = vmatmul.mubr.bf16.gmra.mrb[0].mxu0 %v159
    %v1373 = vpop.f32.mrb[0].mxu0
    %v1374 = vadd.f32 %v362, %v1373
    %v1375 = vpop.f32.mrb[0].mxu0
    %v1376 = vadd.f32 %v366, %v1375
    %v1377 = vpop.f32.mrb[0].mxu0
    %v1378 = vpop.f32.mrb[0].mxu0
    %1379 = vdwg.mxu0
    %1380 = vmatprep.subr.bf16.mxu0 %v1020
    %1381 = vmatpush1.bf16.msra.mxu0 %v1019
    %1382 = vmatprep.subr.bf16.mxu0 %v1024
    %1383 = vmatpush1.bf16.msra.mxu0 %v1023
    %1384 = vmatprep.subr.bf16.mxu0 %v1028
    %1385 = vmatpush1.bf16.msra.mxu0 %v1027
    %1386 = vmatprep.subr.bf16.mxu0 %v1032
    %1387 = vmatpush1.bf16.msra.mxu0 %v1031
    %1388 = vmatprep.subr.bf16.mxu0 %v1036
    %1389 = vmatpush1.bf16.msra.mxu0 %v1035
    %1390 = vmatprep.subr.bf16.mxu0 %v1040
    %1391 = vmatpush1.bf16.msra.mxu0 %v1039
    %1392 = vmatprep.subr.bf16.mxu0 %v1044
    %1393 = vmatpush1.bf16.msra.mxu0 %v1043
    %1394 = vmatprep.subr.bf16.mxu0 %v1048
    %1395 = vmatpush1.bf16.msra.mxu0 %v1047
    %1396 = vmatprep.subr.bf16.mxu0 %v1052
    %1397 = vmatpush1.bf16.msra.mxu0 %v1051
    %1398 = vmatprep.subr.bf16.mxu0 %v1056
    %1399 = vmatpush1.bf16.msra.mxu0 %v1055
    %1400 = vmatprep.subr.bf16.mxu0 %v1060
    %1401 = vmatpush1.bf16.msra.mxu0 %v1059
    %1402 = vmatprep.subr.bf16.mxu0 %v1064
    %1403 = vmatpush1.bf16.msra.mxu0 %v1063
    %1404 = vmatprep.subr.bf16.mxu0 %v1068
    %1405 = vmatpush1.bf16.msra.mxu0 %v1067
    %1406 = vmatprep.subr.bf16.mxu0 %v1072
    %1407 = vmatpush1.bf16.msra.mxu0 %v1071
    %1408 = vmatprep.subr.bf16.mxu0 %v1076
    %1409 = vmatpush1.bf16.msra.mxu0 %v1075
    %1410 = vmatprep.subr.bf16.mxu0 %v1080
    %1411 = vmatpush1.bf16.msra.mxu0 %v1079
    %1412 = vmatprep.mubr.bf16.mxu0 %v162
    %1413 = vmatmul.mubr.bf16.gmra.mrb[0].mxu0 %v161
    %v1414 = vpop.f32.mrb[0].mxu0
    %v1415 = vadd.f32 %v1374, %v1414
    %v1416 = vpop.f32.mrb[0].mxu0
    %v1417 = vadd.f32 %v1376, %v1416
    %v1418 = vpop.f32.mrb[0].mxu0
    %v1419 = vpop.f32.mrb[0].mxu0
    %1420 = vdwg.mxu0
    %1421 = vmatprep.subr.bf16.mxu0 %v1084
    %1422 = vmatpush1.bf16.msra.mxu0 %v1083
    %1423 = vmatprep.subr.bf16.mxu0 %v1088
    %1424 = vmatpush1.bf16.msra.mxu0 %v1087
    %1425 = vmatprep.subr.bf16.mxu0 %v1092
    %1426 = vmatpush1.bf16.msra.mxu0 %v1091
    %1427 = vmatprep.subr.bf16.mxu0 %v1096
    %1428 = vmatpush1.bf16.msra.mxu0 %v1095
    %1429 = vmatprep.subr.bf16.mxu0 %v1100
    %1430 = vmatpush1.bf16.msra.mxu0 %v1099
    %1431 = vmatprep.subr.bf16.mxu0 %v1104
    %1432 = vmatpush1.bf16.msra.mxu0 %v1103
    %1433 = vmatprep.subr.bf16.mxu0 %v1108
    %1434 = vmatpush1.bf16.msra.mxu0 %v1107
    %1435 = vmatprep.subr.bf16.mxu0 %v1112
    %1436 = vmatpush1.bf16.msra.mxu0 %v1111
    %1437 = vmatprep.subr.bf16.mxu0 %v1116
    %1438 = vmatpush1.bf16.msra.mxu0 %v1115
    %1439 = vmatprep.subr.bf16.mxu0 %v1120
    %1440 = vmatpush1.bf16.msra.mxu0 %v1119
    %1441 = vmatprep.subr.bf16.mxu0 %v1124
    %1442 = vmatpush1.bf16.msra.mxu0 %v1123
    %1443 = vmatprep.subr.bf16.mxu0 %v1128
    %1444 = vmatpush1.bf16.msra.mxu0 %v1127
    %1445 = vmatprep.subr.bf16.mxu0 %v1132
    %1446 = vmatpush1.bf16.msra.mxu0 %v1131
    %1447 = vmatprep.subr.bf16.mxu0 %v1136
    %1448 = vmatpush1.bf16.msra.mxu0 %v1135
    %1449 = vmatprep.subr.bf16.mxu0 %v1140
    %1450 = vmatpush1.bf16.msra.mxu0 %v1139
    %1451 = vmatprep.subr.bf16.mxu0 %v1144
    %1452 = vmatpush1.bf16.msra.mxu0 %v1143
    %1453 = vmatprep.mubr.bf16.mxu0 %v164
    %1454 = vmatmul.mubr.bf16.gmra.mrb[0].mxu0 %v163
    %v1455 = vpop.f32.mrb[0].mxu0
    %v1456 = vadd.f32 %v1415, %v1455
    %v1457 = vpop.f32.mrb[0].mxu0
    %v1458 = vadd.f32 %v1417, %v1457
    %v1459 = vpop.f32.mrb[0].mxu0
    %v1460 = vpop.f32.mrb[0].mxu0
    %1461 = vdwg.mxu0
    %1462 = vmatprep.subr.bf16.mxu0 %v958
    %1463 = vmatpush1.bf16.msra.mxu0 %v957
    %1464 = vmatprep.subr.bf16.mxu0 %v962
    %1465 = vmatpush1.bf16.msra.mxu0 %v961
    %1466 = vmatprep.subr.bf16.mxu0 %v966
    %1467 = vmatpush1.bf16.msra.mxu0 %v965
    %1468 = vmatprep.subr.bf16.mxu0 %v970
    %1469 = vmatpush1.bf16.msra.mxu0 %v969
    %1470 = vmatprep.subr.bf16.mxu0 %v974
    %1471 = vmatpush1.bf16.msra.mxu0 %v973
    %1472 = vmatprep.subr.bf16.mxu0 %v978
    %1473 = vmatpush1.bf16.msra.mxu0 %v977
    %1474 = vmatprep.subr.bf16.mxu0 %v982
    %1475 = vmatpush1.bf16.msra.mxu0 %v981
    %1476 = vmatprep.subr.bf16.mxu0 %v986
    %1477 = vmatpush1.bf16.msra.mxu0 %v985
    %1478 = vmatprep.subr.bf16.mxu0 %v990
    %1479 = vmatpush1.bf16.msra.mxu0 %v989
    %1480 = vmatprep.subr.bf16.mxu0 %v994
    %1481 = vmatpush1.bf16.msra.mxu0 %v993
    %1482 = vmatprep.subr.bf16.mxu0 %v998
    %1483 = vmatpush1.bf16.msra.mxu0 %v997
    %1484 = vmatprep.subr.bf16.mxu0 %v1002
    %1485 = vmatpush1.bf16.msra.mxu0 %v1001
    %1486 = vmatprep.subr.bf16.mxu0 %v1006
    %1487 = vmatpush1.bf16.msra.mxu0 %v1005
    %1488 = vmatprep.subr.bf16.mxu0 %v1010
    %1489 = vmatpush1.bf16.msra.mxu0 %v1009
    %1490 = vmatprep.subr.bf16.mxu0 %v1014
    %1491 = vmatpush1.bf16.msra.mxu0 %v1013
    %1492 = vmatprep.subr.bf16.mxu0 %v1018
    %1493 = vmatpush1.bf16.msra.mxu0 %v1017
    %1494 = vmatprep.mubr.bf16.mxu0 %v160
    %1495 = vmatmul.mubr.bf16.gmra.mrb[0].mxu0 %v159
    %v1496 = vpop.f32.mrb[0].mxu0
    %v1497 = vadd.f32 %v370, %v1496
    %v1498 = vpop.f32.mrb[0].mxu0
    %v1499 = vadd.f32 %v374, %v1498
    %v1500 = vpop.f32.mrb[0].mxu0
    %v1501 = vpop.f32.mrb[0].mxu0
    %1502 = vdwg.mxu0
    %1503 = vmatprep.subr.bf16.mxu0 %v1022
    %1504 = vmatpush1.bf16.msra.mxu0 %v1021
    %1505 = vmatprep.subr.bf16.mxu0 %v1026
    %1506 = vmatpush1.bf16.msra.mxu0 %v1025
    %1507 = vmatprep.subr.bf16.mxu0 %v1030
    %1508 = vmatpush1.bf16.msra.mxu0 %v1029
    %1509 = vmatprep.subr.bf16.mxu0 %v1034
    %1510 = vmatpush1.bf16.msra.mxu0 %v1033
    %1511 = vmatprep.subr.bf16.mxu0 %v1038
    %1512 = vmatpush1.bf16.msra.mxu0 %v1037
    %1513 = vmatprep.subr.bf16.mxu0 %v1042
    %1514 = vmatpush1.bf16.msra.mxu0 %v1041
    %1515 = vmatprep.subr.bf16.mxu0 %v1046
    %1516 = vmatpush1.bf16.msra.mxu0 %v1045
    %1517 = vmatprep.subr.bf16.mxu0 %v1050
    %1518 = vmatpush1.bf16.msra.mxu0 %v1049
    %1519 = vmatprep.subr.bf16.mxu0 %v1054
    %1520 = vmatpush1.bf16.msra.mxu0 %v1053
    %1521 = vmatprep.subr.bf16.mxu0 %v1058
    %1522 = vmatpush1.bf16.msra.mxu0 %v1057
    %1523 = vmatprep.subr.bf16.mxu0 %v1062
    %1524 = vmatpush1.bf16.msra.mxu0 %v1061
    %1525 = vmatprep.subr.bf16.mxu0 %v1066
    %1526 = vmatpush1.bf16.msra.mxu0 %v1065
    %1527 = vmatprep.subr.bf16.mxu0 %v1070
    %1528 = vmatpush1.bf16.msra.mxu0 %v1069
    %1529 = vmatprep.subr.bf16.mxu0 %v1074
    %1530 = vmatpush1.bf16.msra.mxu0 %v1073
    %1531 = vmatprep.subr.bf16.mxu0 %v1078
    %1532 = vmatpush1.bf16.msra.mxu0 %v1077
    %1533 = vmatprep.subr.bf16.mxu0 %v1082
    %1534 = vmatpush1.bf16.msra.mxu0 %v1081
    %1535 = vmatprep.mubr.bf16.mxu0 %v162
    %1536 = vmatmul.mubr.bf16.gmra.mrb[0].mxu0 %v161
    %v1537 = vpop.f32.mrb[0].mxu0
    %v1538 = vadd.f32 %v1497, %v1537
    %v1539 = vpop.f32.mrb[0].mxu0
    %v1540 = vadd.f32 %v1499, %v1539
    %v1541 = vpop.f32.mrb[0].mxu0
    %v1542 = vpop.f32.mrb[0].mxu0
    %1543 = vdwg.mxu0
    %1544 = vmatprep.subr.bf16.mxu0 %v1086
    %1545 = vmatpush1.bf16.msra.mxu0 %v1085
    %1546 = vmatprep.subr.bf16.mxu0 %v1090
    %1547 = vmatpush1.bf16.msra.mxu0 %v1089
    %1548 = vmatprep.subr.bf16.mxu0 %v1094
    %1549 = vmatpush1.bf16.msra.mxu0 %v1093
    %1550 = vmatprep.subr.bf16.mxu0 %v1098
    %1551 = vmatpush1.bf16.msra.mxu0 %v1097
    %1552 = vmatprep.subr.bf16.mxu0 %v1102
    %1553 = vmatpush1.bf16.msra.mxu0 %v1101
    %1554 = vmatprep.subr.bf16.mxu0 %v1106
    %1555 = vmatpush1.bf16.msra.mxu0 %v1105
    %1556 = vmatprep.subr.bf16.mxu0 %v1110
    %1557 = vmatpush1.bf16.msra.mxu0 %v1109
    %1558 = vmatprep.subr.bf16.mxu0 %v1114
    %1559 = vmatpush1.bf16.msra.mxu0 %v1113
    %1560 = vmatprep.subr.bf16.mxu0 %v1118
    %1561 = vmatpush1.bf16.msra.mxu0 %v1117
    %1562 = vmatprep.subr.bf16.mxu0 %v1122
    %1563 = vmatpush1.bf16.msra.mxu0 %v1121
    %1564 = vmatprep.subr.bf16.mxu0 %v1126
    %1565 = vmatpush1.bf16.msra.mxu0 %v1125
    %1566 = vmatprep.subr.bf16.mxu0 %v1130
    %1567 = vmatpush1.bf16.msra.mxu0 %v1129
    %1568 = vmatprep.subr.bf16.mxu0 %v1134
    %1569 = vmatpush1.bf16.msra.mxu0 %v1133
    %1570 = vmatprep.subr.bf16.mxu0 %v1138
    %1571 = vmatpush1.bf16.msra.mxu0 %v1137
    %1572 = vmatprep.subr.bf16.mxu0 %v1142
    %1573 = vmatpush1.bf16.msra.mxu0 %v1141
    %1574 = vmatprep.subr.bf16.mxu0 %v1146
    %1575 = vmatpush1.bf16.msra.mxu0 %v1145
    %1576 = vmatprep.mubr.bf16.mxu0 %v164
    %1577 = vmatmul.mubr.bf16.gmra.mrb[0].mxu0 %v163
    %v1578 = vpop.f32.mrb[0].mxu0
    %v1579 = vadd.f32 %v1538, %v1578
    %v1580 = vpop.f32.mrb[0].mxu0
    %v1581 = vadd.f32 %v1540, %v1580
    %v1582 = vpop.f32.mrb[0].mxu0
    %v1583 = vpop.f32.mrb[0].mxu0
    %1584 = vdwg.mxu0
    %v1585 = vmul.f32 %v1456, 0.2
    %v1586 = vmul.f32 %v1458, 0.2
    %v1587 = vmul.f32 %v1579, 0.2
    %v1588 = vmul.f32 %v1581, 0.2
    %v1589 = vmax.f32 %v1456, %v1585
    %v1590 = vmax.f32 %v1458, %v1586
    %v1591 = vmax.f32 %v1579, %v1587
    %v1592 = vmax.f32 %v1581, %v1588
    %v1593 = vpack.c.bf16 %v1589, %v1589
    %v1594 = vpack.c.bf16 %v1590, %v1590
    %v1595 = vpack.c.bf16 %v1591, %v1591
    %v1596 = vpack.c.bf16 %v1592, %v1592
    %v1597 = vld [vmem:[#allocation7] sm:$0xff]
    %v1598 = vld [vmem:[#allocation7 + $0x8] sm:$0xff]
    %v1599 = vld [vmem:[#allocation7 + $0x10] sm:$0xff]
    %v1600 = vld [vmem:[#allocation7 + $0x18] sm:$0xff]
    %v1601 = vld [vmem:[#allocation7 + $0x20] sm:$0xff]
    %v1602 = vld [vmem:[#allocation7 + $0x28] sm:$0xff]
    %v1603 = vld [vmem:[#allocation7 + $0x30] sm:$0xff]
    %v1604 = vld [vmem:[#allocation7 + $0x38] sm:$0xff]
    %v1605 = vld [vmem:[#allocation7 + $0x40] sm:$0xff]
    %v1606 = vld [vmem:[#allocation7 + $0x48] sm:$0xff]
    %v1607 = vld [vmem:[#allocation7 + $0x50] sm:$0xff]
    %v1608 = vld [vmem:[#allocation7 + $0x58] sm:$0xff]
    %v1609 = vld [vmem:[#allocation7 + $0x60] sm:$0xff]
    %v1610 = vld [vmem:[#allocation7 + $0x68] sm:$0xff]
    %v1611 = vld [vmem:[#allocation7 + $0x70] sm:$0xff]
    %v1612 = vld [vmem:[#allocation7 + $0x78] sm:$0xff]
    %v1613 = vld [vmem:[#allocation7 + $0x80] sm:$0xff]
    %v1614 = vld [vmem:[#allocation7 + $0x88] sm:$0xff]
    %v1615 = vld [vmem:[#allocation7 + $0x90] sm:$0xff]
    %v1616 = vld [vmem:[#allocation7 + $0x98] sm:$0xff]
    %v1617 = vld [vmem:[#allocation7 + $0xa0] sm:$0xff]
    %v1618 = vld [vmem:[#allocation7 + $0xa8] sm:$0xff]
    %v1619 = vld [vmem:[#allocation7 + $0xb0] sm:$0xff]
    %v1620 = vld [vmem:[#allocation7 + $0xb8] sm:$0xff]
    %v1621 = vld [vmem:[#allocation7 + $0xc0] sm:$0xff]
    %v1622 = vld [vmem:[#allocation7 + $0xc8] sm:$0xff]
    %v1623 = vld [vmem:[#allocation7 + $0xd0] sm:$0xff]
    %v1624 = vld [vmem:[#allocation7 + $0xd8] sm:$0xff]
    %v1625 = vld [vmem:[#allocation7 + $0xe0] sm:$0xff]
    %v1626 = vld [vmem:[#allocation7 + $0xe8] sm:$0xff]
    %v1627 = vld [vmem:[#allocation7 + $0xf0] sm:$0xff]
    %v1628 = vld [vmem:[#allocation7 + $0xf8] sm:$0xff]
    %v1629 = vld [vmem:[#allocation7 + $0x100] sm:$0xff]
    %v1630 = vld [vmem:[#allocation7 + $0x108] sm:$0xff]
    %v1631 = vld [vmem:[#allocation7 + $0x110] sm:$0xff]
    %v1632 = vld [vmem:[#allocation7 + $0x118] sm:$0xff]
    %v1633 = vld [vmem:[#allocation7 + $0x120] sm:$0xff]
    %v1634 = vld [vmem:[#allocation7 + $0x128] sm:$0xff]
    %v1635 = vld [vmem:[#allocation7 + $0x130] sm:$0xff]
    %v1636 = vld [vmem:[#allocation7 + $0x138] sm:$0xff]
    %v1637 = vld [vmem:[#allocation7 + $0x140] sm:$0xff]
    %v1638 = vld [vmem:[#allocation7 + $0x148] sm:$0xff]
    %v1639 = vld [vmem:[#allocation7 + $0x150] sm:$0xff]
    %v1640 = vld [vmem:[#allocation7 + $0x158] sm:$0xff]
    %v1641 = vld [vmem:[#allocation7 + $0x160] sm:$0xff]
    %v1642 = vld [vmem:[#allocation7 + $0x168] sm:$0xff]
    %v1643 = vld [vmem:[#allocation7 + $0x170] sm:$0xff]
    %v1644 = vld [vmem:[#allocation7 + $0x178] sm:$0xff]
    %v1645 = vld [vmem:[#allocation7 + $0x180] sm:$0xff]
    %v1646 = vld [vmem:[#allocation7 + $0x188] sm:$0xff]
    %v1647 = vld [vmem:[#allocation7 + $0x190] sm:$0xff]
    %v1648 = vld [vmem:[#allocation7 + $0x198] sm:$0xff]
    %v1649 = vld [vmem:[#allocation7 + $0x1a0] sm:$0xff]
    %v1650 = vld [vmem:[#allocation7 + $0x1a8] sm:$0xff]
    %v1651 = vld [vmem:[#allocation7 + $0x1b0] sm:$0xff]
    %v1652 = vld [vmem:[#allocation7 + $0x1b8] sm:$0xff]
    %v1653 = vld [vmem:[#allocation7 + $0x1c0] sm:$0xff]
    %v1654 = vld [vmem:[#allocation7 + $0x1c8] sm:$0xff]
    %v1655 = vld [vmem:[#allocation7 + $0x1d0] sm:$0xff]
    %v1656 = vld [vmem:[#allocation7 + $0x1d8] sm:$0xff]
    %v1657 = vld [vmem:[#allocation7 + $0x1e0] sm:$0xff]
    %v1658 = vld [vmem:[#allocation7 + $0x1e8] sm:$0xff]
    %v1659 = vld [vmem:[#allocation7 + $0x1f0] sm:$0xff]
    %v1660 = vld [vmem:[#allocation7 + $0x1f8] sm:$0xff]
    %v1661 = vld [vmem:[#allocation8] sm:$0x3]
    %v1663 = vlaneseq
    %v1664 = vshrl.u32 %v1663, 7
    %v1665 = vsub.s32 0, %v1664
    %v1666 = vrot.slane %v1661, %v1665
    %v1667 = vlaneseq
    %v1668 = vshrl.u32 %v1667, 7
    %v1669 = vsub.s32 1, %v1668
    %v1670 = vrot.slane %v1661, %v1669
    %v1737 = vunpack.c.l.b16 %v1597
    %v1738 = vunpack.c.h.b16 %v1597
    %v1739 = vunpack.c.l.b16 %v1598
    %v1740 = vunpack.c.h.b16 %v1598
    %v1741 = vunpack.c.l.b16 %v1599
    %v1742 = vunpack.c.h.b16 %v1599
    %v1743 = vunpack.c.l.b16 %v1600
    %v1744 = vunpack.c.h.b16 %v1600
    %v1745 = vunpack.c.l.b16 %v1601
    %v1746 = vunpack.c.h.b16 %v1601
    %v1747 = vunpack.c.l.b16 %v1602
    %v1748 = vunpack.c.h.b16 %v1602
    %v1749 = vunpack.c.l.b16 %v1603
    %v1750 = vunpack.c.h.b16 %v1603
    %v1751 = vunpack.c.l.b16 %v1604
    %v1752 = vunpack.c.h.b16 %v1604
    %v1753 = vunpack.c.l.b16 %v1605
    %v1754 = vunpack.c.h.b16 %v1605
    %v1755 = vunpack.c.l.b16 %v1606
    %v1756 = vunpack.c.h.b16 %v1606
    %v1757 = vunpack.c.l.b16 %v1607
    %v1758 = vunpack.c.h.b16 %v1607
    %v1759 = vunpack.c.l.b16 %v1608
    %v1760 = vunpack.c.h.b16 %v1608
    %v1761 = vunpack.c.l.b16 %v1609
    %v1762 = vunpack.c.h.b16 %v1609
    %v1763 = vunpack.c.l.b16 %v1610
    %v1764 = vunpack.c.h.b16 %v1610
    %v1765 = vunpack.c.l.b16 %v1611
    %v1766 = vunpack.c.h.b16 %v1611
    %v1767 = vunpack.c.l.b16 %v1612
    %v1768 = vunpack.c.h.b16 %v1612
    %v1769 = vunpack.c.l.b16 %v1613
    %v1770 = vunpack.c.h.b16 %v1613
    %v1771 = vunpack.c.l.b16 %v1614
    %v1772 = vunpack.c.h.b16 %v1614
    %v1773 = vunpack.c.l.b16 %v1615
    %v1774 = vunpack.c.h.b16 %v1615
    %v1775 = vunpack.c.l.b16 %v1616
    %v1776 = vunpack.c.h.b16 %v1616
    %v1777 = vunpack.c.l.b16 %v1617
    %v1778 = vunpack.c.h.b16 %v1617
    %v1779 = vunpack.c.l.b16 %v1618
    %v1780 = vunpack.c.h.b16 %v1618
    %v1781 = vunpack.c.l.b16 %v1619
    %v1782 = vunpack.c.h.b16 %v1619
    %v1783 = vunpack.c.l.b16 %v1620
    %v1784 = vunpack.c.h.b16 %v1620
    %v1785 = vunpack.c.l.b16 %v1621
    %v1786 = vunpack.c.h.b16 %v1621
    %v1787 = vunpack.c.l.b16 %v1622
    %v1788 = vunpack.c.h.b16 %v1622
    %v1789 = vunpack.c.l.b16 %v1623
    %v1790 = vunpack.c.h.b16 %v1623
    %v1791 = vunpack.c.l.b16 %v1624
    %v1792 = vunpack.c.h.b16 %v1624
    %v1793 = vunpack.c.l.b16 %v1625
    %v1794 = vunpack.c.h.b16 %v1625
    %v1795 = vunpack.c.l.b16 %v1626
    %v1796 = vunpack.c.h.b16 %v1626
    %v1797 = vunpack.c.l.b16 %v1627
    %v1798 = vunpack.c.h.b16 %v1627
    %v1799 = vunpack.c.l.b16 %v1628
    %v1800 = vunpack.c.h.b16 %v1628
    %v1801 = vunpack.c.l.b16 %v1629
    %v1802 = vunpack.c.h.b16 %v1629
    %v1803 = vunpack.c.l.b16 %v1630
    %v1804 = vunpack.c.h.b16 %v1630
    %v1805 = vunpack.c.l.b16 %v1631
    %v1806 = vunpack.c.h.b16 %v1631
    %v1807 = vunpack.c.l.b16 %v1632
    %v1808 = vunpack.c.h.b16 %v1632
    %v1809 = vunpack.c.l.b16 %v1633
    %v1810 = vunpack.c.h.b16 %v1633
    %v1811 = vunpack.c.l.b16 %v1634
    %v1812 = vunpack.c.h.b16 %v1634
    %v1813 = vunpack.c.l.b16 %v1635
    %v1814 = vunpack.c.h.b16 %v1635
    %v1815 = vunpack.c.l.b16 %v1636
    %v1816 = vunpack.c.h.b16 %v1636
    %v1817 = vunpack.c.l.b16 %v1637
    %v1818 = vunpack.c.h.b16 %v1637
    %v1819 = vunpack.c.l.b16 %v1638
    %v1820 = vunpack.c.h.b16 %v1638
    %v1821 = vunpack.c.l.b16 %v1639
    %v1822 = vunpack.c.h.b16 %v1639
    %v1823 = vunpack.c.l.b16 %v1640
    %v1824 = vunpack.c.h.b16 %v1640
    %v1825 = vunpack.c.l.b16 %v1641
    %v1826 = vunpack.c.h.b16 %v1641
    %v1827 = vunpack.c.l.b16 %v1642
    %v1828 = vunpack.c.h.b16 %v1642
    %v1829 = vunpack.c.l.b16 %v1643
    %v1830 = vunpack.c.h.b16 %v1643
    %v1831 = vunpack.c.l.b16 %v1644
    %v1832 = vunpack.c.h.b16 %v1644
    %v1833 = vunpack.c.l.b16 %v1645
    %v1834 = vunpack.c.h.b16 %v1645
    %v1835 = vunpack.c.l.b16 %v1646
    %v1836 = vunpack.c.h.b16 %v1646
    %v1837 = vunpack.c.l.b16 %v1647
    %v1838 = vunpack.c.h.b16 %v1647
    %v1839 = vunpack.c.l.b16 %v1648
    %v1840 = vunpack.c.h.b16 %v1648
    %v1841 = vunpack.c.l.b16 %v1649
    %v1842 = vunpack.c.h.b16 %v1649
    %v1843 = vunpack.c.l.b16 %v1650
    %v1844 = vunpack.c.h.b16 %v1650
    %v1845 = vunpack.c.l.b16 %v1651
    %v1846 = vunpack.c.h.b16 %v1651
    %v1847 = vunpack.c.l.b16 %v1652
    %v1848 = vunpack.c.h.b16 %v1652
    %v1849 = vunpack.c.l.b16 %v1653
    %v1850 = vunpack.c.h.b16 %v1653
    %v1851 = vunpack.c.l.b16 %v1654
    %v1852 = vunpack.c.h.b16 %v1654
    %v1853 = vunpack.c.l.b16 %v1655
    %v1854 = vunpack.c.h.b16 %v1655
    %v1855 = vunpack.c.l.b16 %v1656
    %v1856 = vunpack.c.h.b16 %v1656
    %v1857 = vunpack.c.l.b16 %v1657
    %v1858 = vunpack.c.h.b16 %v1657
    %v1859 = vunpack.c.l.b16 %v1658
    %v1860 = vunpack.c.h.b16 %v1658
    %v1861 = vunpack.c.l.b16 %v1659
    %v1862 = vunpack.c.h.b16 %v1659
    %v1863 = vunpack.c.l.b16 %v1660
    %v1864 = vunpack.c.h.b16 %v1660
    %v1865 = vpack.c.b16 %v1739, %v1737
    %v1866 = vpack.c.b16 %v1740, %v1738
    %v1867 = vpack.c.b16 %v1743, %v1741
    %v1868 = vpack.c.b16 %v1744, %v1742
    %v1869 = vpack.c.b16 %v1747, %v1745
    %v1870 = vpack.c.b16 %v1748, %v1746
    %v1871 = vpack.c.b16 %v1751, %v1749
    %v1872 = vpack.c.b16 %v1752, %v1750
    %v1873 = vpack.c.b16 %v1755, %v1753
    %v1874 = vpack.c.b16 %v1756, %v1754
    %v1875 = vpack.c.b16 %v1759, %v1757
    %v1876 = vpack.c.b16 %v1760, %v1758
    %v1877 = vpack.c.b16 %v1763, %v1761
    %v1878 = vpack.c.b16 %v1764, %v1762
    %v1879 = vpack.c.b16 %v1767, %v1765
    %v1880 = vpack.c.b16 %v1768, %v1766
    %v1881 = vpack.c.b16 %v1771, %v1769
    %v1882 = vpack.c.b16 %v1772, %v1770
    %v1883 = vpack.c.b16 %v1775, %v1773
    %v1884 = vpack.c.b16 %v1776, %v1774
    %v1885 = vpack.c.b16 %v1779, %v1777
    %v1886 = vpack.c.b16 %v1780, %v1778
    %v1887 = vpack.c.b16 %v1783, %v1781
    %v1888 = vpack.c.b16 %v1784, %v1782
    %v1889 = vpack.c.b16 %v1787, %v1785
    %v1890 = vpack.c.b16 %v1788, %v1786
    %v1891 = vpack.c.b16 %v1791, %v1789
    %v1892 = vpack.c.b16 %v1792, %v1790
    %v1893 = vpack.c.b16 %v1795, %v1793
    %v1894 = vpack.c.b16 %v1796, %v1794
    %v1895 = vpack.c.b16 %v1799, %v1797
    %v1896 = vpack.c.b16 %v1800, %v1798
    %v1897 = vpack.c.b16 %v1803, %v1801
    %v1898 = vpack.c.b16 %v1804, %v1802
    %v1899 = vpack.c.b16 %v1807, %v1805
    %v1900 = vpack.c.b16 %v1808, %v1806
    %v1901 = vpack.c.b16 %v1811, %v1809
    %v1902 = vpack.c.b16 %v1812, %v1810
    %v1903 = vpack.c.b16 %v1815, %v1813
    %v1904 = vpack.c.b16 %v1816, %v1814
    %v1905 = vpack.c.b16 %v1819, %v1817
    %v1906 = vpack.c.b16 %v1820, %v1818
    %v1907 = vpack.c.b16 %v1823, %v1821
    %v1908 = vpack.c.b16 %v1824, %v1822
    %v1909 = vpack.c.b16 %v1827, %v1825
    %v1910 = vpack.c.b16 %v1828, %v1826
    %v1911 = vpack.c.b16 %v1831, %v1829
    %v1912 = vpack.c.b16 %v1832, %v1830
    %v1913 = vpack.c.b16 %v1835, %v1833
    %v1914 = vpack.c.b16 %v1836, %v1834
    %v1915 = vpack.c.b16 %v1839, %v1837
    %v1916 = vpack.c.b16 %v1840, %v1838
    %v1917 = vpack.c.b16 %v1843, %v1841
    %v1918 = vpack.c.b16 %v1844, %v1842
    %v1919 = vpack.c.b16 %v1847, %v1845
    %v1920 = vpack.c.b16 %v1848, %v1846
    %v1921 = vpack.c.b16 %v1851, %v1849
    %v1922 = vpack.c.b16 %v1852, %v1850
    %v1923 = vpack.c.b16 %v1855, %v1853
    %v1924 = vpack.c.b16 %v1856, %v1854
    %v1925 = vpack.c.b16 %v1859, %v1857
    %v1926 = vpack.c.b16 %v1860, %v1858
    %v1927 = vpack.c.b16 %v1863, %v1861
    %v1928 = vpack.c.b16 %v1864, %v1862
    %1993 = vmatprep.subr.bf16.mxu0 %v1866
    %1994 = vmatpush1.bf16.msra.mxu0 %v1865
    %1995 = vmatprep.subr.bf16.mxu0 %v1868
    %1996 = vmatpush1.bf16.msra.mxu0 %v1867
    %1997 = vmatprep.subr.bf16.mxu0 %v1870
    %1998 = vmatpush1.bf16.msra.mxu0 %v1869
    %1999 = vmatprep.subr.bf16.mxu0 %v1872
    %2000 = vmatpush1.bf16.msra.mxu0 %v1871
    %2001 = vmatprep.subr.bf16.mxu0 %v1874
    %2002 = vmatpush1.bf16.msra.mxu0 %v1873
    %2003 = vmatprep.subr.bf16.mxu0 %v1876
    %2004 = vmatpush1.bf16.msra.mxu0 %v1875
    %2005 = vmatprep.subr.bf16.mxu0 %v1878
    %2006 = vmatpush1.bf16.msra.mxu0 %v1877
    %2007 = vmatprep.subr.bf16.mxu0 %v1880
    %2008 = vmatpush1.bf16.msra.mxu0 %v1879
    %2009 = vmatprep.subr.bf16.mxu0 %v1882
    %2010 = vmatpush1.bf16.msra.mxu0 %v1881
    %2011 = vmatprep.subr.bf16.mxu0 %v1884
    %2012 = vmatpush1.bf16.msra.mxu0 %v1883
    %2013 = vmatprep.subr.bf16.mxu0 %v1886
    %2014 = vmatpush1.bf16.msra.mxu0 %v1885
    %2015 = vmatprep.subr.bf16.mxu0 %v1888
    %2016 = vmatpush1.bf16.msra.mxu0 %v1887
    %2017 = vmatprep.subr.bf16.mxu0 %v1890
    %2018 = vmatpush1.bf16.msra.mxu0 %v1889
    %2019 = vmatprep.subr.bf16.mxu0 %v1892
    %2020 = vmatpush1.bf16.msra.mxu0 %v1891
    %2021 = vmatprep.subr.bf16.mxu0 %v1894
    %2022 = vmatpush1.bf16.msra.mxu0 %v1893
    %2023 = vmatprep.subr.bf16.mxu0 %v1896
    %2024 = vmatpush1.bf16.msra.mxu0 %v1895
    %2025 = vmatprep.mubr.bf16.mxu0 %v1594
    %2026 = vmatmul.mubr.bf16.gmra.mrb[0].mxu0 %v1593
    %v2027 = vpop.f32.mrb[0].mxu0
    %v2028 = vadd.f32 %v1666, %v2027
    %v2029 = vpop.f32.mrb[0].mxu0
    %v2030 = vadd.f32 %v1670, %v2029
    %v2031 = vpop.f32.mrb[0].mxu0
    %v2032 = vpop.f32.mrb[0].mxu0
    %2033 = vdwg.mxu0
    %2034 = vmatprep.subr.bf16.mxu0 %v1898
    %2035 = vmatpush1.bf16.msra.mxu0 %v1897
    %2036 = vmatprep.subr.bf16.mxu0 %v1900
    %2037 = vmatpush1.bf16.msra.mxu0 %v1899
    %2038 = vmatprep.subr.bf16.mxu0 %v1902
    %2039 = vmatpush1.bf16.msra.mxu0 %v1901
    %2040 = vmatprep.subr.bf16.mxu0 %v1904
    %2041 = vmatpush1.bf16.msra.mxu0 %v1903
    %2042 = vmatprep.subr.bf16.mxu0 %v1906
    %2043 = vmatpush1.bf16.msra.mxu0 %v1905
    %2044 = vmatprep.subr.bf16.mxu0 %v1908
    %2045 = vmatpush1.bf16.msra.mxu0 %v1907
    %2046 = vmatprep.subr.bf16.mxu0 %v1910
    %2047 = vmatpush1.bf16.msra.mxu0 %v1909
    %2048 = vmatprep.subr.bf16.mxu0 %v1912
    %2049 = vmatpush1.bf16.msra.mxu0 %v1911
    %2050 = vmatprep.subr.bf16.mxu0 %v1914
    %2051 = vmatpush1.bf16.msra.mxu0 %v1913
    %2052 = vmatprep.subr.bf16.mxu0 %v1916
    %2053 = vmatpush1.bf16.msra.mxu0 %v1915
    %2054 = vmatprep.subr.bf16.mxu0 %v1918
    %2055 = vmatpush1.bf16.msra.mxu0 %v1917
    %2056 = vmatprep.subr.bf16.mxu0 %v1920
    %2057 = vmatpush1.bf16.msra.mxu0 %v1919
    %2058 = vmatprep.subr.bf16.mxu0 %v1922
    %2059 = vmatpush1.bf16.msra.mxu0 %v1921
    %2060 = vmatprep.subr.bf16.mxu0 %v1924
    %2061 = vmatpush1.bf16.msra.mxu0 %v1923
    %2062 = vmatprep.subr.bf16.mxu0 %v1926
    %2063 = vmatpush1.bf16.msra.mxu0 %v1925
    %2064 = vmatprep.subr.bf16.mxu0 %v1928
    %2065 = vmatpush1.bf16.msra.mxu0 %v1927
    %2066 = vmatprep.mubr.bf16.mxu0 %v1596
    %2067 = vmatmul.mubr.bf16.gmra.mrb[0].mxu0 %v1595
    %v2068 = vpop.f32.mrb[0].mxu0
    %v2069 = vadd.f32 %v2028, %v2068
    %v2070 = vpop.f32.mrb[0].mxu0
    %v2071 = vadd.f32 %v2030, %v2070
    %v2072 = vpop.f32.mrb[0].mxu0
    %v2073 = vpop.f32.mrb[0].mxu0
    %2074 = vdwg.mxu0
    %v2075 = vmul.f32 %v2069, 0.2
    %v2076 = vmul.f32 %v2071, 0.2
    %v2077 = vmax.f32 %v2069, %v2075
    %v2078 = vmax.f32 %v2071, %v2076
    %v2079 = vpack.c.bf16 %v2077, %v2077
    %v2080 = vpack.c.bf16 %v2078, %v2078
    %v2081 = vld [vmem:[#allocation10] sm:$0xf]
    %v2082 = vld [vmem:[#allocation10 + $0x4] sm:$0xf]
    %v2083 = vld [vmem:[#allocation10 + $0x8] sm:$0xf]
    %v2084 = vld [vmem:[#allocation10 + $0xc] sm:$0xf]
    %v2085 = vld [vmem:[#allocation10 + $0x10] sm:$0xf]
    %v2086 = vld [vmem:[#allocation10 + $0x14] sm:$0xf]
    %v2087 = vld [vmem:[#allocation10 + $0x18] sm:$0xf]
    %v2088 = vld [vmem:[#allocation10 + $0x1c] sm:$0xf]
    %v2089 = vld [vmem:[#allocation10 + $0x20] sm:$0xf]
    %v2090 = vld [vmem:[#allocation10 + $0x24] sm:$0xf]
    %v2091 = vld [vmem:[#allocation10 + $0x28] sm:$0xf]
    %v2092 = vld [vmem:[#allocation10 + $0x2c] sm:$0xf]
    %v2093 = vld [vmem:[#allocation10 + $0x30] sm:$0xf]
    %v2094 = vld [vmem:[#allocation10 + $0x34] sm:$0xf]
    %v2095 = vld [vmem:[#allocation10 + $0x38] sm:$0xf]
    %v2096 = vld [vmem:[#allocation10 + $0x3c] sm:$0xf]
    %v2097 = vld [vmem:[#allocation10 + $0x40] sm:$0xf]
    %v2098 = vld [vmem:[#allocation10 + $0x44] sm:$0xf]
    %v2099 = vld [vmem:[#allocation10 + $0x48] sm:$0xf]
    %v2100 = vld [vmem:[#allocation10 + $0x4c] sm:$0xf]
    %v2101 = vld [vmem:[#allocation10 + $0x50] sm:$0xf]
    %v2102 = vld [vmem:[#allocation10 + $0x54] sm:$0xf]
    %v2103 = vld [vmem:[#allocation10 + $0x58] sm:$0xf]
    %v2104 = vld [vmem:[#allocation10 + $0x5c] sm:$0xf]
    %v2105 = vld [vmem:[#allocation10 + $0x60] sm:$0xf]
    %v2106 = vld [vmem:[#allocation10 + $0x64] sm:$0xf]
    %v2107 = vld [vmem:[#allocation10 + $0x68] sm:$0xf]
    %v2108 = vld [vmem:[#allocation10 + $0x6c] sm:$0xf]
    %v2109 = vld [vmem:[#allocation10 + $0x70] sm:$0xf]
    %v2110 = vld [vmem:[#allocation10 + $0x74] sm:$0xf]
    %v2111 = vld [vmem:[#allocation10 + $0x78] sm:$0xf]
    %v2112 = vld [vmem:[#allocation10 + $0x7c] sm:$0xf]
    %v2113 = vld [vmem:[%s7] sm:$0x1]
    %v2115 = vlaneseq
    %v2116 = vshrl.u32 %v2115, 7
    %v2117 = vsub.s32 0, %v2116
    %v2118 = vrot.slane %v2113, %v2117
    %v2152 = vunpack.c.l.b16 %v2081
    %v2153 = vunpack.c.l.b16 %v2082
    %v2154 = vunpack.c.l.b16 %v2083
    %v2155 = vunpack.c.l.b16 %v2084
    %v2156 = vunpack.c.l.b16 %v2085
    %v2157 = vunpack.c.l.b16 %v2086
    %v2158 = vunpack.c.l.b16 %v2087
    %v2159 = vunpack.c.l.b16 %v2088
    %v2160 = vunpack.c.l.b16 %v2089
    %v2161 = vunpack.c.l.b16 %v2090
    %v2162 = vunpack.c.l.b16 %v2091
    %v2163 = vunpack.c.l.b16 %v2092
    %v2164 = vunpack.c.l.b16 %v2093
    %v2165 = vunpack.c.l.b16 %v2094
    %v2166 = vunpack.c.l.b16 %v2095
    %v2167 = vunpack.c.l.b16 %v2096
    %v2168 = vunpack.c.l.b16 %v2097
    %v2169 = vunpack.c.l.b16 %v2098
    %v2170 = vunpack.c.l.b16 %v2099
    %v2171 = vunpack.c.l.b16 %v2100
    %v2172 = vunpack.c.l.b16 %v2101
    %v2173 = vunpack.c.l.b16 %v2102
    %v2174 = vunpack.c.l.b16 %v2103
    %v2175 = vunpack.c.l.b16 %v2104
    %v2176 = vunpack.c.l.b16 %v2105
    %v2177 = vunpack.c.l.b16 %v2106
    %v2178 = vunpack.c.l.b16 %v2107
    %v2179 = vunpack.c.l.b16 %v2108
    %v2180 = vunpack.c.l.b16 %v2109
    %v2181 = vunpack.c.l.b16 %v2110
    %v2182 = vunpack.c.l.b16 %v2111
    %v2183 = vunpack.c.l.b16 %v2112
    %v2184 = vpack.c.b16 %v2153, %v2152
    %v2185 = vpack.c.b16 %v2155, %v2154
    %v2186 = vpack.c.b16 %v2157, %v2156
    %v2187 = vpack.c.b16 %v2159, %v2158
    %v2188 = vpack.c.b16 %v2161, %v2160
    %v2189 = vpack.c.b16 %v2163, %v2162
    %v2190 = vpack.c.b16 %v2165, %v2164
    %v2191 = vpack.c.b16 %v2167, %v2166
    %v2192 = vpack.c.b16 %v2169, %v2168
    %v2193 = vpack.c.b16 %v2171, %v2170
    %v2194 = vpack.c.b16 %v2173, %v2172
    %v2195 = vpack.c.b16 %v2175, %v2174
    %v2196 = vpack.c.b16 %v2177, %v2176
    %v2197 = vpack.c.b16 %v2179, %v2178
    %v2198 = vpack.c.b16 %v2181, %v2180
    %v2199 = vpack.c.b16 %v2183, %v2182
    %2216 = vmatprep.subr.bf16.mxu0 0
    %2217 = vmatpush1.bf16.msra.mxu0 %v2184
    %2218 = vmatprep.subr.bf16.mxu0 0
    %2219 = vmatpush1.bf16.msra.mxu0 %v2185
    %2220 = vmatprep.subr.bf16.mxu0 0
    %2221 = vmatpush1.bf16.msra.mxu0 %v2186
    %2222 = vmatprep.subr.bf16.mxu0 0
    %2223 = vmatpush1.bf16.msra.mxu0 %v2187
    %2224 = vmatprep.subr.bf16.mxu0 0
    %2225 = vmatpush1.bf16.msra.mxu0 %v2188
    %2226 = vmatprep.subr.bf16.mxu0 0
    %2227 = vmatpush1.bf16.msra.mxu0 %v2189
    %2228 = vmatprep.subr.bf16.mxu0 0
    %2229 = vmatpush1.bf16.msra.mxu0 %v2190
    %2230 = vmatprep.subr.bf16.mxu0 0
    %2231 = vmatpush1.bf16.msra.mxu0 %v2191
    %2232 = vmatprep.subr.bf16.mxu0 0
    %2233 = vmatpush1.bf16.msra.mxu0 %v2192
    %2234 = vmatprep.subr.bf16.mxu0 0
    %2235 = vmatpush1.bf16.msra.mxu0 %v2193
    %2236 = vmatprep.subr.bf16.mxu0 0
    %2237 = vmatpush1.bf16.msra.mxu0 %v2194
    %2238 = vmatprep.subr.bf16.mxu0 0
    %2239 = vmatpush1.bf16.msra.mxu0 %v2195
    %2240 = vmatprep.subr.bf16.mxu0 0
    %2241 = vmatpush1.bf16.msra.mxu0 %v2196
    %2242 = vmatprep.subr.bf16.mxu0 0
    %2243 = vmatpush1.bf16.msra.mxu0 %v2197
    %2244 = vmatprep.subr.bf16.mxu0 0
    %2245 = vmatpush1.bf16.msra.mxu0 %v2198
    %2246 = vmatprep.subr.bf16.mxu0 0
    %2247 = vmatpush1.bf16.msra.mxu0 %v2199
    %2248 = vmatprep.mubr.bf16.mxu0 %v2080
    %2249 = vmatmul.mubr.bf16.gmra.mrb[0].mxu0 %v2079
    %v2250 = vpop.f32.mrb[0].mxu0
    %v2251 = vadd.f32 %v2118, %v2250
    %v2252 = vpop.f32.mrb[0].mxu0
    %v2253 = vpop.f32.mrb[0].mxu0
    %v2254 = vpop.f32.mrb[0].mxu0
    %2255 = vdwg.mxu0
    %v2256 = vmul.f32 %v2251, 0.2
    %v2257 = vmax.f32 %v2251, %v2256
    %v2258 = vpack.c.bf16 %v2257, %v2257
    %v2259 = vld [vmem:[%s1] sm:$0x3]
    %v2260 = vpack.c.bf16 %v2259, %v2259
    %v2261 = vld [vmem:[%s8] sm:$0x7]
    %v2262 = vld [vmem:[%s9] sm:$0x1]
    %v2264 = vlaneseq
    %v2265 = vshrl.u32 %v2264, 7
    %v2266 = vsub.s32 0, %v2265
    %v2267 = vrot.slane %v2262, %v2266
    %vm2269 = vcmask 48128
    %v2271 = vsel %vm2269, %v2260, 0
    %vm2273 = vcmask 1042432
    %v2275 = vsel %vm2273, %v2261, 0
    %2277 = vmatprep.subr.bf16.mxu0 0
    %2278 = vmatpush1.bf16.msra.mxu0 %v2275
    %2279 = vmatprep.subr.bf16.mxu0 0
    %2280 = vmatpush1.bf16.msra.mxu0 0
    %2281 = vmatprep.subr.bf16.mxu0 0
    %2282 = vmatpush1.bf16.msra.mxu0 0
    %2283 = vmatprep.subr.bf16.mxu0 0
    %2284 = vmatpush1.bf16.msra.mxu0 0
    %2285 = vmatprep.subr.bf16.mxu0 0
    %2286 = vmatpush1.bf16.msra.mxu0 0
    %2287 = vmatprep.subr.bf16.mxu0 0
    %2288 = vmatpush1.bf16.msra.mxu0 0
    %2289 = vmatprep.subr.bf16.mxu0 0
    %2290 = vmatpush1.bf16.msra.mxu0 0
    %2291 = vmatprep.subr.bf16.mxu0 0
    %2292 = vmatpush1.bf16.msra.mxu0 0
    %2293 = vmatprep.subr.bf16.mxu0 0
    %2294 = vmatpush1.bf16.msra.mxu0 0
    %2295 = vmatprep.subr.bf16.mxu0 0
    %2296 = vmatpush1.bf16.msra.mxu0 0
    %2297 = vmatprep.subr.bf16.mxu0 0
    %2298 = vmatpush1.bf16.msra.mxu0 0
    %2299 = vmatprep.subr.bf16.mxu0 0
    %2300 = vmatpush1.bf16.msra.mxu0 0
    %2301 = vmatprep.subr.bf16.mxu0 0
    %2302 = vmatpush1.bf16.msra.mxu0 0
    %2303 = vmatprep.subr.bf16.mxu0 0
    %2304 = vmatpush1.bf16.msra.mxu0 0
    %2305 = vmatprep.subr.bf16.mxu0 0
    %2306 = vmatpush1.bf16.msra.mxu0 0
    %2307 = vmatprep.subr.bf16.mxu0 0
    %2308 = vmatpush1.bf16.msra.mxu0 0
    %2309 = vmatprep.mubr.bf16.mxu0 0
    %2310 = vmatmul.mubr.bf16.gmra.mrb[0].mxu0 %v2271
    %v2311 = vpop.f32.mrb[0].mxu0
    %v2312 = vadd.f32 %v2267, %v2311
    %v2313 = vpop.f32.mrb[0].mxu0
    %v2314 = vpop.f32.mrb[0].mxu0
    %v2315 = vpop.f32.mrb[0].mxu0
    %2316 = vdwg.mxu0
    %v2317 = vmax.f32 %v2312, 0.0
    %v2318 = vpack.c.bf16 %v2317, %v2317
    %v2319 = vld [vmem:[#allocation11] sm:$0xf]
    %v2320 = vld [vmem:[#allocation11 + $0x4] sm:$0xf]
    %v2321 = vld [vmem:[#allocation11 + $0x8] sm:$0xf]
    %v2322 = vld [vmem:[#allocation11 + $0xc] sm:$0xf]
    %v2323 = vld [vmem:[#allocation11 + $0x10] sm:$0xf]
    %v2324 = vld [vmem:[#allocation11 + $0x14] sm:$0xf]
    %v2325 = vld [vmem:[#allocation11 + $0x18] sm:$0xf]
    %v2326 = vld [vmem:[#allocation11 + $0x1c] sm:$0xf]
    %v2327 = vld [vmem:[#allocation11 + $0x20] sm:$0xf]
    %v2328 = vld [vmem:[#allocation11 + $0x24] sm:$0xf]
    %v2329 = vld [vmem:[#allocation11 + $0x28] sm:$0xf]
    %v2330 = vld [vmem:[#allocation11 + $0x2c] sm:$0xf]
    %v2331 = vld [vmem:[#allocation11 + $0x30] sm:$0xf]
    %v2332 = vld [vmem:[#allocation11 + $0x34] sm:$0xf]
    %v2333 = vld [vmem:[#allocation11 + $0x38] sm:$0xf]
    %v2334 = vld [vmem:[#allocation11 + $0x3c] sm:$0xf]
    %v2335 = vld [vmem:[%s11] sm:$0xf]
    %v2336 = vld [vmem:[%s11 + $0x4] sm:$0xf]
    %v2339 = vunpack.c.l.b16 %v2335
    %v2340 = vunpack.c.l.b16 %v2336
    %v2341 = vpack.c.b16 %v2340, %v2339
    %vm2343 = vcmask 130048
    %v2345 = vsel %vm2343, %v2318, 0
    %2347 = vmatprep.subr.bf16.mxu0 0
    %2348 = vmatpush1.bf16.msra.mxu0 %v2341
    %2349 = vmatprep.subr.bf16.mxu0 0
    %2350 = vmatpush1.bf16.msra.mxu0 0
    %2351 = vmatprep.subr.bf16.mxu0 0
    %2352 = vmatpush1.bf16.msra.mxu0 0
    %2353 = vmatprep.subr.bf16.mxu0 0
    %2354 = vmatpush1.bf16.msra.mxu0 0
    %2355 = vmatprep.subr.bf16.mxu0 0
    %2356 = vmatpush1.bf16.msra.mxu0 0
    %2357 = vmatprep.subr.bf16.mxu0 0
    %2358 = vmatpush1.bf16.msra.mxu0 0
    %2359 = vmatprep.subr.bf16.mxu0 0
    %2360 = vmatpush1.bf16.msra.mxu0 0
    %2361 = vmatprep.subr.bf16.mxu0 0
    %2362 = vmatpush1.bf16.msra.mxu0 0
    %2363 = vmatprep.subr.bf16.mxu0 0
    %2364 = vmatpush1.bf16.msra.mxu0 0
    %2365 = vmatprep.subr.bf16.mxu0 0
    %2366 = vmatpush1.bf16.msra.mxu0 0
    %2367 = vmatprep.subr.bf16.mxu0 0
    %2368 = vmatpush1.bf16.msra.mxu0 0
    %2369 = vmatprep.subr.bf16.mxu0 0
    %2370 = vmatpush1.bf16.msra.mxu0 0
    %2371 = vmatprep.subr.bf16.mxu0 0
    %2372 = vmatpush1.bf16.msra.mxu0 0
    %2373 = vmatprep.subr.bf16.mxu0 0
    %2374 = vmatpush1.bf16.msra.mxu0 0
    %2375 = vmatprep.subr.bf16.mxu0 0
    %2376 = vmatpush1.bf16.msra.mxu0 0
    %2377 = vmatprep.subr.bf16.mxu0 0
    %2378 = vmatpush1.bf16.msra.mxu0 0
    %2379 = vmatprep.mubr.bf16.mxu0 0
    %2380 = vmatmul.mubr.bf16.gmra.mrb[0].mxu0 %v2345
    %v2381 = vpop.f32.mrb[0].mxu0
    %v2382 = vadd.f32 0.0, %v2381
    %v2383 = vpop.f32.mrb[0].mxu0
    %v2384 = vpop.f32.mrb[0].mxu0
    %v2385 = vpop.f32.mrb[0].mxu0
    %2386 = vdwg.mxu0
    %v2403 = vunpack.c.l.b16 %v2319
    %v2404 = vunpack.c.l.b16 %v2320
    %v2405 = vunpack.c.l.b16 %v2321
    %v2406 = vunpack.c.l.b16 %v2322
    %v2407 = vunpack.c.l.b16 %v2323
    %v2408 = vunpack.c.l.b16 %v2324
    %v2409 = vunpack.c.l.b16 %v2325
    %v2410 = vunpack.c.l.b16 %v2326
    %v2411 = vunpack.c.l.b16 %v2327
    %v2412 = vunpack.c.l.b16 %v2328
    %v2413 = vunpack.c.l.b16 %v2329
    %v2414 = vunpack.c.l.b16 %v2330
    %v2415 = vunpack.c.l.b16 %v2331
    %v2416 = vunpack.c.l.b16 %v2332
    %v2417 = vunpack.c.l.b16 %v2333
    %v2418 = vunpack.c.l.b16 %v2334
    %v2419 = vpack.c.b16 %v2404, %v2403
    %v2420 = vpack.c.b16 %v2406, %v2405
    %v2421 = vpack.c.b16 %v2408, %v2407
    %v2422 = vpack.c.b16 %v2410, %v2409
    %v2423 = vpack.c.b16 %v2412, %v2411
    %v2424 = vpack.c.b16 %v2414, %v2413
    %v2425 = vpack.c.b16 %v2416, %v2415
    %v2426 = vpack.c.b16 %v2418, %v2417
    %2435 = vmatprep.subr.bf16.mxu0 0
    %2436 = vmatpush1.bf16.msra.mxu0 %v2419
    %2437 = vmatprep.subr.bf16.mxu0 0
    %2438 = vmatpush1.bf16.msra.mxu0 %v2420
    %2439 = vmatprep.subr.bf16.mxu0 0
    %2440 = vmatpush1.bf16.msra.mxu0 %v2421
    %2441 = vmatprep.subr.bf16.mxu0 0
    %2442 = vmatpush1.bf16.msra.mxu0 %v2422
    %2443 = vmatprep.subr.bf16.mxu0 0
    %2444 = vmatpush1.bf16.msra.mxu0 %v2423
    %2445 = vmatprep.subr.bf16.mxu0 0
    %2446 = vmatpush1.bf16.msra.mxu0 %v2424
    %2447 = vmatprep.subr.bf16.mxu0 0
    %2448 = vmatpush1.bf16.msra.mxu0 %v2425
    %2449 = vmatprep.subr.bf16.mxu0 0
    %2450 = vmatpush1.bf16.msra.mxu0 %v2426
    %2451 = vmatprep.subr.bf16.mxu0 0
    %2452 = vmatpush1.bf16.msra.mxu0 0
    %2453 = vmatprep.subr.bf16.mxu0 0
    %2454 = vmatpush1.bf16.msra.mxu0 0
    %2455 = vmatprep.subr.bf16.mxu0 0
    %2456 = vmatpush1.bf16.msra.mxu0 0
    %2457 = vmatprep.subr.bf16.mxu0 0
    %2458 = vmatpush1.bf16.msra.mxu0 0
    %2459 = vmatprep.subr.bf16.mxu0 0
    %2460 = vmatpush1.bf16.msra.mxu0 0
    %2461 = vmatprep.subr.bf16.mxu0 0
    %2462 = vmatpush1.bf16.msra.mxu0 0
    %2463 = vmatprep.subr.bf16.mxu0 0
    %2464 = vmatpush1.bf16.msra.mxu0 0
    %2465 = vmatprep.subr.bf16.mxu0 0
    %2466 = vmatpush1.bf16.msra.mxu0 0
    %2467 = vmatprep.mubr.bf16.mxu0 0
    %2468 = vmatmul.mubr.bf16.gmra.mrb[0].mxu0 %v2258
    %v2469 = vpop.f32.mrb[0].mxu0
    %v2470 = vadd.f32 %v2382, %v2469
    %v2471 = vpop.f32.mrb[0].mxu0
    %v2472 = vpop.f32.mrb[0].mxu0
    %v2473 = vpop.f32.mrb[0].mxu0
    %2474 = vdwg.mxu0
    %v2475 = vld [vmem:[%s12] sm:$0x1]
    %v2477 = vlaneseq
    %v2478 = vshrl.u32 %v2477, 7
    %v2479 = vsub.s32 0, %v2478
    %v2480 = vrot.slane %v2475, %v2479
    %v2482 = vadd.f32 %v2470, %v2480
    %v2483 = vtanh.pop %v2482
    %2484 = vst [vmem:[#allocation13] sm:$0x3] %v2483
    // Predicated region
    $region78: #{tpu_custom_call.1} parent=1 // pred_check
      _
    $region79: #{tpu_custom_call.1} parent=1 // pred_check_branch
      %2486 = sbr.rel (0) target = $region81
    $region80: #{tpu_custom_call.1} parent=1 // pred_region
      %s2488 = ssub.s32 32, 32
      %2489 = vsyncadd [#allocation4], %s2488
      %s2491 = sshll.u32 [#allocation13], 4
      %s2492 = int_to_ptr.vmem [resolvable:$true] %s2491
      %2494 = dma.vmem_to_hbm [thread:$0]  %s2492, 32, %s13, [#allocation4]
    $region81: #{tpu_custom_call.1} parent=1 // pred_fallthru
      _
    // Predicated region
    $region82: #{tpu_custom_call.1} parent=1 // pred_check
      _
    $region83: #{tpu_custom_call.1} parent=1 // pred_check_branch
      %2496 = sbr.rel (0) target = $region85
    $region84: #{tpu_custom_call.1} parent=1 // pred_region
      %2497 = dma.done [#allocation4], 32
    $region85: #{tpu_custom_call.1} parent=1 // pred_fallthru
      _
    %2498 = vsyncpa [#allocation3], 1
    %2499 = vsyncpa [#allocation6], 1
    %2500 = vsyncpa [#allocation9], 1
    %2501 = vsyncpa [#allocation12], 1
    %2502 = vsyncpa [#allocation4], 1

// kernel: tpu_custom_call.1
$region0: #{tpu_custom_call.1}
  #allocation0 [shape = 'u32[]', space=smem, size = 0x4, offset = 0x4, fixed_abs, tag = 'smem constant byte address 0x4 - core index']
  #allocation1 [shape = 'u32[144,128]{1,0:T(1,128)}', space=vmem, size = 0x12000, scoped, tag = 'internal scratch']
  %s0 = inlined_call_operand.hbm [shape: f32[2,768], index: 0, kind: input, shape index: {}]
  %s1 = inlined_call_operand.vmem [shape: f32[2,6], index: 1, kind: input, shape index: {}]
  %s2 = inlined_call_operand.hbm [shape: bf16[768,512], index: 2, kind: input, shape index: {}]
  %s3 = inlined_call_operand.vmem [shape: f32[1,512], index: 3, kind: input, shape index: {}]
  %s4 = inlined_call_operand.hbm [shape: bf16[512,256], index: 4, kind: input, shape index: {}]
  %s5 = inlined_call_operand.hbm [shape: f32[1,256], index: 5, kind: input, shape index: {}]
  %s6 = inlined_call_operand.hbm [shape: bf16[256,128], index: 6, kind: input, shape index: {}]
  %s7 = inlined_call_operand.vmem [shape: f32[1,128], index: 7, kind: input, shape index: {}]
  %s8 = inlined_call_operand.vmem [shape: bf16[6,16], index: 8, kind: input, shape index: {}]
  %s9 = inlined_call_operand.vmem [shape: f32[1,16], index: 9, kind: input, shape index: {}]
  %s10 = inlined_call_operand.hbm [shape: bf16[128,128], index: 10, kind: input, shape index: {}]
  %s11 = inlined_call_operand.vmem [shape: bf16[16,128], index: 11, kind: input, shape index: {}]
  %s12 = inlined_call_operand.vmem [shape: f32[1,128], index: 12, kind: input, shape index: {}]
  %s13 = inlined_call_operand.hbm [shape: f32[2,128], index: 13, kind: output, shape index: {}]
  %s14 = sld [smem:[#allocation0]]
  $region86: #{tpu_custom_call.1} parent=0
    _
  %s16 = ssub.s32 1, %s14
  %s17 = scalar_select 0, %s16, %s14
  $region1: #{tpu_custom_call.1} parent=0
    #allocation2 [shape = 'u8[6144]{0}', space=vmem, size = 0x1800, scoped, tag = 'input window, operand 0, single buffered']
    #allocation3 [shape = 's32[1]{0}', space=sflag, size = 0x4, scoped, tag = 'scoped memory for tpu_custom_call.1']
    #allocation4 [shape = 's32[1]{0}', space=sflag, size = 0x4, scoped, tag = 'scoped memory for tpu_custom_call.1']
    #allocation5 [shape = 'u8[786432]{0}', space=vmem, size = 0xc0000, scoped, tag = 'input window, operand 2, single buffered']
    #allocation6 [shape = 's32[1]{0}', space=sflag, size = 0x4, scoped, tag = 'scoped memory for tpu_custom_call.1']
    #allocation7 [shape = 'u8[262144]{0}', space=vmem, size = 0x40000, scoped, tag = 'input window, operand 4, single buffered']
    #allocation8 [shape = 'u8[1024]{0}', space=vmem, size = 0x400, scoped, tag = 'input window, operand 5, single buffered']
    #allocation9 [shape = 's32[1]{0}', space=sflag, size = 0x4, scoped, tag = 'scoped memory for tpu_custom_call.1']
    #allocation10 [shape = 'u8[65536]{0}', space=vmem, size = 0x10000, scoped, tag = 'input window, operand 6, single buffered']
    #allocation11 [shape = 'u8[32768]{0}', space=vmem, size = 0x8000, scoped, tag = 'input window, operand 10, single buffered']
    #allocation12 [shape = 's32[1]{0}', space=sflag, size = 0x4, scoped, tag = 'scoped memory for tpu_custom_call.1']
    #allocation13 [shape = 'u8[1024]{0}', space=vmem, size = 0x400, scoped, tag = 'output window, operand 0, single buffered']
    %18 = vsyncpa [#allocation3], 0
    %19 = vsyncpa [#allocation6], 0
    %20 = vsyncpa [#allocation9], 0
    %21 = vsyncpa [#allocation12], 0
    %22 = vsyncpa [#allocation4], 0
    // Predicated region
    $region2: #{tpu_custom_call.1} parent=1 // pred_check
      _
    $region3: #{tpu_custom_call.1} parent=1 // pred_check_branch
      %24 = sbr.rel (0) target = $region5
    $region4: #{tpu_custom_call.1} parent=1 // pred_region
      %s26 = ssub.s32 192, 192
      %27 = vsyncadd [#allocation3], %s26
      %s29 = sshll.u32 [#allocation2], 4
      %s30 = int_to_ptr.vmem [resolvable:$true] %s29
      %32 = dma.hbm_to_vmem [thread:$0]  %s0, 192, %s30, [#allocation3]
    $region5: #{tpu_custom_call.1} parent=1 // pred_fallthru
      _
    // Predicated region
    $region6: #{tpu_custom_call.1} parent=1 // pred_check
      _
    $region7: #{tpu_custom_call.1} parent=1 // pred_check_branch
      %34 = sbr.rel (0) target = $region9
    $region8: #{tpu_custom_call.1} parent=1 // pred_region
      _
    $region9: #{tpu_custom_call.1} parent=1 // pred_fallthru
      _
    // Predicated region
    $region10: #{tpu_custom_call.1} parent=1 // pred_check
      _
    $region11: #{tpu_custom_call.1} parent=1 // pred_check_branch
      %36 = sbr.rel (0) target = $region13
    $region12: #{tpu_custom_call.1} parent=1 // pred_region
      %s38 = ssub.s32 24576, 24576
      %39 = vsyncadd [#allocation6], %s38
      %s40 = sshll.u32 [#allocation5], 4
      %s41 = int_to_ptr.vmem [resolvable:$true] %s40
      %46 = dma.hbm_to_vmem [thread:$0]  %s2, 24576, %s41, [#allocation6], 256, 256, 16
    $region13: #{tpu_custom_call.1} parent=1 // pred_fallthru
      _
    // Predicated region
    $region14: #{tpu_custom_call.1} parent=1 // pred_check
      _
    $region15: #{tpu_custom_call.1} parent=1 // pred_check_branch
      %48 = sbr.rel (0) target = $region17
    $region16: #{tpu_custom_call.1} parent=1 // pred_region
      _
    $region17: #{tpu_custom_call.1} parent=1 // pred_fallthru
      _
    // Predicated region
    $region18: #{tpu_custom_call.1} parent=1 // pred_check
      _
    $region19: #{tpu_custom_call.1} parent=1 // pred_check_branch
      %50 = sbr.rel (0) target = $region21
    $region20: #{tpu_custom_call.1} parent=1 // pred_region
      %s52 = ssub.s32 8192, 8192
      %53 = vsyncadd [#allocation6], %s52
      %s54 = sshll.u32 [#allocation7], 4
      %s55 = int_to_ptr.vmem [resolvable:$true] %s54
      %60 = dma.hbm_to_vmem [thread:$0]  %s4, 8192, %s55, [#allocation6], 128, 128, 8
    $region21: #{tpu_custom_call.1} parent=1 // pred_fallthru
      _
    // Predicated region
    $region22: #{tpu_custom_call.1} parent=1 // pred_check
      _
    $region23: #{tpu_custom_call.1} parent=1 // pred_check_branch
      %62 = sbr.rel (0) target = $region25
    $region24: #{tpu_custom_call.1} parent=1 // pred_region
      %s64 = ssub.s32 32, 32
      %65 = vsyncadd [#allocation9], %s64
      %s67 = sshll.u32 [#allocation8], 4
      %s68 = int_to_ptr.vmem [resolvable:$true] %s67
      %70 = dma.hbm_to_vmem [thread:$0]  %s5, 32, %s68, [#allocation9]
    $region25: #{tpu_custom_call.1} parent=1 // pred_fallthru
      _
    // Predicated region
    $region26: #{tpu_custom_call.1} parent=1 // pred_check
      _
    $region27: #{tpu_custom_call.1} parent=1 // pred_check_branch
      %72 = sbr.rel (0) target = $region29
    $region28: #{tpu_custom_call.1} parent=1 // pred_region
      %s74 = ssub.s32 2048, 2048
      %75 = vsyncadd [#allocation9], %s74
      %s76 = sshll.u32 [#allocation10], 4
      %s77 = int_to_ptr.vmem [resolvable:$true] %s76
      %82 = dma.hbm_to_vmem [thread:$0]  %s6, 2048, %s77, [#allocation9], 64, 64, 4
    $region29: #{tpu_custom_call.1} parent=1 // pred_fallthru
      _
    // Predicated region
    $region30: #{tpu_custom_call.1} parent=1 // pred_check
      _
    $region31: #{tpu_custom_call.1} parent=1 // pred_check_branch
      %84 = sbr.rel (0) target = $region33
    $region32: #{tpu_custom_call.1} parent=1 // pred_region
      _
    $region33: #{tpu_custom_call.1} parent=1 // pred_fallthru
      _
    // Predicated region
    $region34: #{tpu_custom_call.1} parent=1 // pred_check
      _
    $region35: #{tpu_custom_call.1} parent=1 // pred_check_branch
      %86 = sbr.rel (0) target = $region37
    $region36: #{tpu_custom_call.1} parent=1 // pred_region
      _
    $region37: #{tpu_custom_call.1} parent=1 // pred_fallthru
      _
    // Predicated region
    $region38: #{tpu_custom_call.1} parent=1 // pred_check
      _
    $region39: #{tpu_custom_call.1} parent=1 // pred_check_branch
      %88 = sbr.rel (0) target = $region41
    $region40: #{tpu_custom_call.1} parent=1 // pred_region
      _
    $region41: #{tpu_custom_call.1} parent=1 // pred_fallthru
      _
    // Predicated region
    $region42: #{tpu_custom_call.1} parent=1 // pred_check
      _
    $region43: #{tpu_custom_call.1} parent=1 // pred_check_branch
      %90 = sbr.rel (0) target = $region45
    $region44: #{tpu_custom_call.1} parent=1 // pred_region
      %s92 = ssub.s32 1024, 1024
      %93 = vsyncadd [#allocation12], %s92
      %s94 = sshll.u32 [#allocation11], 4
      %s95 = int_to_ptr.vmem [resolvable:$true] %s94
      %100 = dma.hbm_to_vmem [thread:$0]  %s10, 1024, %s95, [#allocation12], 64, 64, 4
    $region45: #{tpu_custom_call.1} parent=1 // pred_fallthru
      _
    // Predicated region
    $region46: #{tpu_custom_call.1} parent=1 // pred_check
      _
    $region47: #{tpu_custom_call.1} parent=1 // pred_check_branch
      %102 = sbr.rel (0) target = $region49
    $region48: #{tpu_custom_call.1} parent=1 // pred_region
      _
    $region49: #{tpu_custom_call.1} parent=1 // pred_fallthru
      _
    // Predicated region
    $region50: #{tpu_custom_call.1} parent=1 // pred_check
      _
    $region51: #{tpu_custom_call.1} parent=1 // pred_check_branch
      %104 = sbr.rel (0) target = $region53
    $region52: #{tpu_custom_call.1} parent=1 // pred_region
      _
    $region53: #{tpu_custom_call.1} parent=1 // pred_fallthru
      _
    // Predicated region
    $region54: #{tpu_custom_call.1} parent=1 // pred_check
      _
    $region55: #{tpu_custom_call.1} parent=1 // pred_check_branch
      %106 = sbr.rel (0) target = $region57
    $region56: #{tpu_custom_call.1} parent=1 // pred_region
      %107 = dma.done [#allocation3], 192
    $region57: #{tpu_custom_call.1} parent=1 // pred_fallthru
      _
    // Predicated region
    $region58: #{tpu_custom_call.1} parent=1 // pred_check
      _
    $region59: #{tpu_custom_call.1} parent=1 // pred_check_branch
      %109 = sbr.rel (0) target = $region61
    $region60: #{tpu_custom_call.1} parent=1 // pred_region
      %110 = dma.done [#allocation6], 24576
    $region61: #{tpu_custom_call.1} parent=1 // pred_fallthru
      _
    // Predicated region
    $region62: #{tpu_custom_call.1} parent=1 // pred_check
      _
    $region63: #{tpu_custom_call.1} parent=1 // pred_check_branch
      %112 = sbr.rel (0) target = $region65
    $region64: #{tpu_custom_call.1} parent=1 // pred_region
      %113 = dma.done [#allocation6], 8192
    $region65: #{tpu_custom_call.1} parent=1 // pred_fallthru
      _
    // Predicated region
    $region66: #{tpu_custom_call.1} parent=1 // pred_check
      _
    $region67: #{tpu_custom_call.1} parent=1 // pred_check_branch
      %115 = sbr.rel (0) target = $region69
    $region68: #{tpu_custom_call.1} parent=1 // pred_region
      %116 = dma.done [#allocation9], 32
    $region69: #{tpu_custom_call.1} parent=1 // pred_fallthru
      _
    // Predicated region
    $region70: #{tpu_custom_call.1} parent=1 // pred_check
      _
    $region71: #{tpu_custom_call.1} parent=1 // pred_check_branch
      %118 = sbr.rel (0) target = $region73
    $region72: #{tpu_custom_call.1} parent=1 // pred_region
      %119 = dma.done [#allocation9], 2048
    $region73: #{tpu_custom_call.1} parent=1 // pred_fallthru
      _
    // Predicated region
    $region74: #{tpu_custom_call.1} parent=1 // pred_check
      _
    $region75: #{tpu_custom_call.1} parent=1 // pred_check_branch
      %121 = sbr.rel (0) target = $region77
    $region76: #{tpu_custom_call.1} parent=1 // pred_region
      %122 = dma.done [#allocation12], 1024
    $region77: #{tpu_custom_call.1} parent=1 // pred_fallthru
      _
    %v124 = vld [vmem:[#allocation2] sm:$0xff]
    %v125 = vld [vmem:[#allocation2 + $0x8] sm:$0xf]
    %v128 = vcombine.high %v124, %v124
    %v130 = vunpack.c.l.s4 1983009808
    %v131 = vunpack.c.0.s8 %v130
    %v132 = vlaneseq
    %v133 = vshrl.u32 %v132, 7
    %v134 = vsub.s32 %v131, %v133
    %v135 = vrot.slane %v124, %v134
    %v137 = vunpack.c.l.s4 1983009808
    %v138 = vunpack.c.0.s8 %v137
    %v139 = vlaneseq
    %v140 = vshrl.u32 %v139, 7
    %v141 = vsub.s32 %v138, %v140
    %v142 = vrot.slane %v128, %v141
    %v143 = vcombine.high %v135, %v135
    %v144 = vcombine.high %v142, %v142
    %v146 = vunpack.c.l.s4 1983009808
    %v147 = vunpack.c.0.s8 %v146
    %v148 = vlaneseq
    %v149 = vshrl.u32 %v148, 7
    %v150 = vsub.s32 %v147, %v149
    %v151 = vrot.slane %v125, %v150
    %v152 = vcombine.high %v151, %v151
    %v159 = vpack.c.bf16 %v135, %v135
    %v160 = vpack.c.bf16 %v143, %v143
    %v161 = vpack.c.bf16 %v142, %v142
    %v162 = vpack.c.bf16 %v144, %v144
    %v163 = vpack.c.bf16 %v151, %v151
    %v164 = vpack.c.bf16 %v152, %v152
    %v165 = vld [vmem:[#allocation5] sm:$0xff]
    %v166 = vld [vmem:[#allocation5 + $0x8] sm:$0xff]
    %v167 = vld [vmem:[#allocation5 + $0x10] sm:$0xff]
    %v168 = vld [vmem:[#allocation5 + $0x18] sm:$0xff]
    %v169 = vld [vmem:[#allocation5 + $0x20] sm:$0xff]
    %v170 = vld [vmem:[#allocation5 + $0x28] sm:$0xff]
    %v171 = vld [vmem:[#allocation5 + $0x30] sm:$0xff]
    %v172 = vld [vmem:[#allocation5 + $0x38] sm:$0xff]
    %v173 = vld [vmem:[#allocation5 + $0x40] sm:$0xff]
    %v174 = vld [vmem:[#allocation5 + $0x48] sm:$0xff]
    %v175 = vld [vmem:[#allocation5 + $0x50] sm:$0xff]
    %v176 = vld [vmem:[#allocation5 + $0x58] sm:$0xff]
    %v177 = vld [vmem:[#allocation5 + $0x60] sm:$0xff]
    %v178 = vld [vmem:[#allocation5 + $0x68] sm:$0xff]
    %v179 = vld [vmem:[#allocation5 + $0x70] sm:$0xff]
    %v180 = vld [vmem:[#allocation5 + $0x78] sm:$0xff]
    %v181 = vld [vmem:[#allocation5 + $0x80] sm:$0xff]
    %v182 = vld [vmem:[#allocation5 + $0x88] sm:$0xff]
    %v183 = vld [vmem:[#allocation5 + $0x90] sm:$0xff]
    %v184 = vld [vmem:[#allocation5 + $0x98] sm:$0xff]
    %v185 = vld [vmem:[#allocation5 + $0xa0] sm:$0xff]
    %v186 = vld [vmem:[#allocation5 + $0xa8] sm:$0xff]
    %v187 = vld [vmem:[#allocation5 + $0xb0] sm:$0xff]
    %v188 = vld [vmem:[#allocation5 + $0xb8] sm:$0xff]
    %v189 = vld [vmem:[#allocation5 + $0xc0] sm:$0xff]
    %v190 = vld [vmem:[#allocation5 + $0xc8] sm:$0xff]
    %v191 = vld [vmem:[#allocation5 + $0xd0] sm:$0xff]
    %v192 = vld [vmem:[#allocation5 + $0xd8] sm:$0xff]
    %v193 = vld [vmem:[#allocation5 + $0xe0] sm:$0xff]
    %v194 = vld [vmem:[#allocation5 + $0xe8] sm:$0xff]
    %v195 = vld [vmem:[#allocation5 + $0xf0] sm:$0xff]
    %v196 = vld [vmem:[#allocation5 + $0xf8] sm:$0xff]
    %v197 = vld [vmem:[#allocation5 + $0x100] sm:$0xff]
    %v198 = vld [vmem:[#allocation5 + $0x108] sm:$0xff]
    %v199 = vld [vmem:[#allocation5 + $0x110] sm:$0xff]
    %v200 = vld [vmem:[#allocation5 + $0x118] sm:$0xff]
    %v201 = vld [vmem:[#allocation5 + $0x120] sm:$0xff]
    %v202 = vld [vmem:[#allocation5 + $0x128] sm:$0xff]
    %v203 = vld [vmem:[#allocation5 + $0x130] sm:$0xff]
    %v204 = vld [vmem:[#allocation5 + $0x138] sm:$0xff]
    %v205 = vld [vmem:[#allocation5 + $0x140] sm:$0xff]
    %v206 = vld [vmem:[#allocation5 + $0x148] sm:$0xff]
    %v207 = vld [vmem:[#allocation5 + $0x150] sm:$0xff]
    %v208 = vld [vmem:[#allocation5 + $0x158] sm:$0xff]
    %v209 = vld [vmem:[#allocation5 + $0x160] sm:$0xff]
    %v210 = vld [vmem:[#allocation5 + $0x168] sm:$0xff]
    %v211 = vld [vmem:[#allocation5 + $0x170] sm:$0xff]
    %v212 = vld [vmem:[#allocation5 + $0x178] sm:$0xff]
    %v213 = vld [vmem:[#allocation5 + $0x180] sm:$0xff]
    %v214 = vld [vmem:[#allocation5 + $0x188] sm:$0xff]
    %v215 = vld [vmem:[#allocation5 + $0x190] sm:$0xff]
    %v216 = vld [vmem:[#allocation5 + $0x198] sm:$0xff]
    %v217 = vld [vmem:[#allocation5 + $0x1a0] sm:$0xff]
    %v218 = vld [vmem:[#allocation5 + $0x1a8] sm:$0xff]
    %v219 = vld [vmem:[#allocation5 + $0x1b0] sm:$0xff]
    %v220 = vld [vmem:[#allocation5 + $0x1b8] sm:$0xff]
    %v221 = vld [vmem:[#allocation5 + $0x1c0] sm:$0xff]
    %v222 = vld [vmem:[#allocation5 + $0x1c8] sm:$0xff]
    %v223 = vld [vmem:[#allocation5 + $0x1d0] sm:$0xff]
    %v224 = vld [vmem:[#allocation5 + $0x1d8] sm:$0xff]
    %v225 = vld [vmem:[#allocation5 + $0x1e0] sm:$0xff]
    %v226 = vld [vmem:[#allocation5 + $0x1e8] sm:$0xff]
    %v227 = vld [vmem:[#allocation5 + $0x1f0] sm:$0xff]
    %v228 = vld [vmem:[#allocation5 + $0x1f8] sm:$0xff]
    %v229 = vld [vmem:[#allocation5 + $0x200] sm:$0xff]
    %v230 = vld [vmem:[#allocation5 + $0x208] sm:$0xff]
    %v231 = vld [vmem:[#allocation5 + $0x210] sm:$0xff]
    %v232 = vld [vmem:[#allocation5 + $0x218] sm:$0xff]
    %v233 = vld [vmem:[#allocation5 + $0x220] sm:$0xff]
    %v234 = vld [vmem:[#allocation5 + $0x228] sm:$0xff]
    %v235 = vld [vmem:[#allocation5 + $0x230] sm:$0xff]
    %v236 = vld [vmem:[#allocation5 + $0x238] sm:$0xff]
    %v237 = vld [vmem:[#allocation5 + $0x240] sm:$0xff]
    %v238 = vld [vmem:[#allocation5 + $0x248] sm:$0xff]
    %v239 = vld [vmem:[#allocation5 + $0x250] sm:$0xff]
    %v240 = vld [vmem:[#allocation5 + $0x258] sm:$0xff]
    %v241 = vld [vmem:[#allocation5 + $0x260] sm:$0xff]
    %v242 = vld [vmem:[#allocation5 + $0x268] sm:$0xff]
    %v243 = vld [vmem:[#allocation5 + $0x270] sm:$0xff]
    %v244 = vld [vmem:[#allocation5 + $0x278] sm:$0xff]
    %v245 = vld [vmem:[#allocation5 + $0x280] sm:$0xff]
    %v246 = vld [vmem:[#allocation5 + $0x288] sm:$0xff]
    %v247 = vld [vmem:[#allocation5 + $0x290] sm:$0xff]
    %v248 = vld [vmem:[#allocation5 + $0x298] sm:$0xff]
    %v249 = vld [vmem:[#allocation5 + $0x2a0] sm:$0xff]
    %v250 = vld [vmem:[#allocation5 + $0x2a8] sm:$0xff]
    %v251 = vld [vmem:[#allocation5 + $0x2b0] sm:$0xff]
    %v252 = vld [vmem:[#allocation5 + $0x2b8] sm:$0xff]
    %v253 = vld [vmem:[#allocation5 + $0x2c0] sm:$0xff]
    %v254 = vld [vmem:[#allocation5 + $0x2c8] sm:$0xff]
    %v255 = vld [vmem:[#allocation5 + $0x2d0] sm:$0xff]
    %v256 = vld [vmem:[#allocation5 + $0x2d8] sm:$0xff]
    %v257 = vld [vmem:[#allocation5 + $0x2e0] sm:$0xff]
    %v258 = vld [vmem:[#allocation5 + $0x2e8] sm:$0xff]
    %v259 = vld [vmem:[#allocation5 + $0x2f0] sm:$0xff]
    %v260 = vld [vmem:[#allocation5 + $0x2f8] sm:$0xff]
    %v261 = vld [vmem:[#allocation5 + $0x300] sm:$0xff]
    %v262 = vld [vmem:[#allocation5 + $0x308] sm:$0xff]
    %v263 = vld [vmem:[#allocation5 + $0x310] sm:$0xff]
    %v264 = vld [vmem:[#allocation5 + $0x318] sm:$0xff]
    %v265 = vld [vmem:[#allocation5 + $0x320] sm:$0xff]
    %v266 = vld [vmem:[#allocation5 + $0x328] sm:$0xff]
    %v267 = vld [vmem:[#allocation5 + $0x330] sm:$0xff]
    %v268 = vld [vmem:[#allocation5 + $0x338] sm:$0xff]
    %v269 = vld [vmem:[#allocation5 + $0x340] sm:$0xff]
    %v270 = vld [vmem:[#allocation5 + $0x348] sm:$0xff]
    %v271 = vld [vmem:[#allocation5 + $0x350] sm:$0xff]
    %v272 = vld [vmem:[#allocation5 + $0x358] sm:$0xff]
    %v273 = vld [vmem:[#allocation5 + $0x360] sm:$0xff]
    %v274 = vld [vmem:[#allocation5 + $0x368] sm:$0xff]
    %v275 = vld [vmem:[#allocation5 + $0x370] sm:$0xff]
    %v276 = vld [vmem:[#allocation5 + $0x378] sm:$0xff]
    %v277 = vld [vmem:[#allocation5 + $0x380] sm:$0xff]
    %v278 = vld [vmem:[#allocation5 + $0x388] sm:$0xff]
    %v279 = vld [vmem:[#allocation5 + $0x390] sm:$0xff]
    %v280 = vld [vmem:[#allocation5 + $0x398] sm:$0xff]
    %v281 = vld [vmem:[#allocation5 + $0x3a0] sm:$0xff]
    %v282 = vld [vmem:[#allocation5 + $0x3a8] sm:$0xff]
    %v283 = vld [vmem:[#allocation5 + $0x3b0] sm:$0xff]
    %v284 = vld [vmem:[#allocation5 + $0x3b8] sm:$0xff]
    %v285 = vld [vmem:[#allocation5 + $0x3c0] sm:$0xff]
    %v286 = vld [vmem:[#allocation5 + $0x3c8] sm:$0xff]
    %v287 = vld [vmem:[#allocation5 + $0x3d0] sm:$0xff]
    %v288 = vld [vmem:[#allocation5 + $0x3d8] sm:$0xff]
    %v289 = vld [vmem:[#allocation5 + $0x3e0] sm:$0xff]
    %v290 = vld [vmem:[#allocation5 + $0x3e8] sm:$0xff]
    %v291 = vld [vmem:[#allocation5 + $0x3f0] sm:$0xff]
    %v292 = vld [vmem:[#allocation5 + $0x3f8] sm:$0xff]
    %v293 = vld [vmem:[#allocation5 + $0x400] sm:$0xff]
    %v294 = vld [vmem:[#allocation5 + $0x408] sm:$0xff]
    %v295 = vld [vmem:[#allocation5 + $0x410] sm:$0xff]
    %v296 = vld [vmem:[#allocation5 + $0x418] sm:$0xff]
    %v297 = vld [vmem:[#allocation5 + $0x420] sm:$0xff]
    %v298 = vld [vmem:[#allocation5 + $0x428] sm:$0xff]
    %v299 = vld [vmem:[#allocation5 + $0x430] sm:$0xff]
    %v300 = vld [vmem:[#allocation5 + $0x438] sm:$0xff]
    %v301 = vld [vmem:[#allocation5 + $0x440] sm:$0xff]
    %v302 = vld [vmem:[#allocation5 + $0x448] sm:$0xff]
    %v303 = vld [vmem:[#allocation5 + $0x450] sm:$0xff]
    %v304 = vld [vmem:[#allocation5 + $0x458] sm:$0xff]
    %v305 = vld [vmem:[#allocation5 + $0x460] sm:$0xff]
    %v306 = vld [vmem:[#allocation5 + $0x468] sm:$0xff]
    %v307 = vld [vmem:[#allocation5 + $0x470] sm:$0xff]
    %v308 = vld [vmem:[#allocation5 + $0x478] sm:$0xff]
    %v309 = vld [vmem:[#allocation5 + $0x480] sm:$0xff]
    %v310 = vld [vmem:[#allocation5 + $0x488] sm:$0xff]
    %v311 = vld [vmem:[#allocation5 + $0x490] sm:$0xff]
    %v312 = vld [vmem:[#allocation5 + $0x498] sm:$0xff]
    %v313 = vld [vmem:[#allocation5 + $0x4a0] sm:$0xff]
    %v314 = vld [vmem:[#allocation5 + $0x4a8] sm:$0xff]
    %v315 = vld [vmem:[#allocation5 + $0x4b0] sm:$0xff]
    %v316 = vld [vmem:[#allocation5 + $0x4b8] sm:$0xff]
    %v317 = vld [vmem:[#allocation5 + $0x4c0] sm:$0xff]
    %v318 = vld [vmem:[#allocation5 + $0x4c8] sm:$0xff]
    %v319 = vld [vmem:[#allocation5 + $0x4d0] sm:$0xff]
    %v320 = vld [vmem:[#allocation5 + $0x4d8] sm:$0xff]
    %v321 = vld [vmem:[#allocation5 + $0x4e0] sm:$0xff]
    %v322 = vld [vmem:[#allocation5 + $0x4e8] sm:$0xff]
    %v323 = vld [vmem:[#allocation5 + $0x4f0] sm:$0xff]
    %v324 = vld [vmem:[#allocation5 + $0x4f8] sm:$0xff]
    %v325 = vld [vmem:[#allocation5 + $0x500] sm:$0xff]
    %v326 = vld [vmem:[#allocation5 + $0x508] sm:$0xff]
    %v327 = vld [vmem:[#allocation5 + $0x510] sm:$0xff]
    %v328 = vld [vmem:[#allocation5 + $0x518] sm:$0xff]
    %v329 = vld [vmem:[#allocation5 + $0x520] sm:$0xff]
    %v330 = vld [vmem:[#allocation5 + $0x528] sm:$0xff]
    %v331 = vld [vmem:[#allocation5 + $0x530] sm:$0xff]
    %v332 = vld [vmem:[#allocation5 + $0x538] sm:$0xff]
    %v333 = vld [vmem:[#allocation5 + $0x540] sm:$0xff]
    %v334 = vld [vmem:[#allocation5 + $0x548] sm:$0xff]
    %v335 = vld [vmem:[#allocation5 + $0x550] sm:$0xff]
    %v336 = vld [vmem:[#allocation5 + $0x558] sm:$0xff]
    %v337 = vld [vmem:[#allocation5 + $0x560] sm:$0xff]
    %v338 = vld [vmem:[#allocation5 + $0x568] sm:$0xff]
    %v339 = vld [vmem:[#allocation5 + $0x570] sm:$0xff]
    %v340 = vld [vmem:[#allocation5 + $0x578] sm:$0xff]
    %v341 = vld [vmem:[#allocation5 + $0x580] sm:$0xff]
    %v342 = vld [vmem:[#allocation5 + $0x588] sm:$0xff]
    %v343 = vld [vmem:[#allocation5 + $0x590] sm:$0xff]
    %v344 = vld [vmem:[#allocation5 + $0x598] sm:$0xff]
    %v345 = vld [vmem:[#allocation5 + $0x5a0] sm:$0xff]
    %v346 = vld [vmem:[#allocation5 + $0x5a8] sm:$0xff]
    %v347 = vld [vmem:[#allocation5 + $0x5b0] sm:$0xff]
    %v348 = vld [vmem:[#allocation5 + $0x5b8] sm:$0xff]
    %v349 = vld [vmem:[#allocation5 + $0x5c0] sm:$0xff]
    %v350 = vld [vmem:[#allocation5 + $0x5c8] sm:$0xff]
    %v351 = vld [vmem:[#allocation5 + $0x5d0] sm:$0xff]
    %v352 = vld [vmem:[#allocation5 + $0x5d8] sm:$0xff]
    %v353 = vld [vmem:[#allocation5 + $0x5e0] sm:$0xff]
    %v354 = vld [vmem:[#allocation5 + $0x5e8] sm:$0xff]
    %v355 = vld [vmem:[#allocation5 + $0x5f0] sm:$0xff]
    %v356 = vld [vmem:[#allocation5 + $0x5f8] sm:$0xff]
    %v357 = vld [vmem:[%s3] sm:$0xf]
    %v359 = vlaneseq
    %v360 = vshrl.u32 %v359, 7
    %v361 = vsub.s32 0, %v360
    %v362 = vrot.slane %v357, %v361
    %v363 = vlaneseq
    %v364 = vshrl.u32 %v363, 7
    %v365 = vsub.s32 1, %v364
    %v366 = vrot.slane %v357, %v365
    %v367 = vlaneseq
    %v368 = vshrl.u32 %v367, 7
    %v369 = vsub.s32 2, %v368
    %v370 = vrot.slane %v357, %v369
    %v371 = vlaneseq
    %v372 = vshrl.u32 %v371, 7
    %v373 = vsub.s32 3, %v372
    %v374 = vrot.slane %v357, %v373
    %v571 = vunpack.c.l.b16 %v165
    %v572 = vunpack.c.h.b16 %v165
    %v573 = vunpack.c.l.b16 %v166
    %v574 = vunpack.c.h.b16 %v166
    %v575 = vunpack.c.l.b16 %v167
    %v576 = vunpack.c.h.b16 %v167
    %v577 = vunpack.c.l.b16 %v168
    %v578 = vunpack.c.h.b16 %v168
    %v579 = vunpack.c.l.b16 %v169
    %v580 = vunpack.c.h.b16 %v169
    %v581 = vunpack.c.l.b16 %v170
    %v582 = vunpack.c.h.b16 %v170
    %v583 = vunpack.c.l.b16 %v171
    %v584 = vunpack.c.h.b16 %v171
    %v585 = vunpack.c.l.b16 %v172
    %v586 = vunpack.c.h.b16 %v172
    %v587 = vunpack.c.l.b16 %v173
    %v588 = vunpack.c.h.b16 %v173
    %v589 = vunpack.c.l.b16 %v174
    %v590 = vunpack.c.h.b16 %v174
    %v591 = vunpack.c.l.b16 %v175
    %v592 = vunpack.c.h.b16 %v175
    %v593 = vunpack.c.l.b16 %v176
    %v594 = vunpack.c.h.b16 %v176
    %v595 = vunpack.c.l.b16 %v177
    %v596 = vunpack.c.h.b16 %v177
    %v597 = vunpack.c.l.b16 %v178
    %v598 = vunpack.c.h.b16 %v178
    %v599 = vunpack.c.l.b16 %v179
    %v600 = vunpack.c.h.b16 %v179
    %v601 = vunpack.c.l.b16 %v180
    %v602 = vunpack.c.h.b16 %v180
    %v603 = vunpack.c.l.b16 %v181
    %v604 = vunpack.c.h.b16 %v181
    %v605 = vunpack.c.l.b16 %v182
    %v606 = vunpack.c.h.b16 %v182
    %v607 = vunpack.c.l.b16 %v183
    %v608 = vunpack.c.h.b16 %v183
    %v609 = vunpack.c.l.b16 %v184
    %v610 = vunpack.c.h.b16 %v184
    %v611 = vunpack.c.l.b16 %v185
    %v612 = vunpack.c.h.b16 %v185
    %v613 = vunpack.c.l.b16 %v186
    %v614 = vunpack.c.h.b16 %v186
    %v615 = vunpack.c.l.b16 %v187
    %v616 = vunpack.c.h.b16 %v187
    %v617 = vunpack.c.l.b16 %v188
    %v618 = vunpack.c.h.b16 %v188
    %v619 = vunpack.c.l.b16 %v189
    %v620 = vunpack.c.h.b16 %v189
    %v621 = vunpack.c.l.b16 %v190
    %v622 = vunpack.c.h.b16 %v190
    %v623 = vunpack.c.l.b16 %v191
    %v624 = vunpack.c.h.b16 %v191
    %v625 = vunpack.c.l.b16 %v192
    %v626 = vunpack.c.h.b16 %v192
    %v627 = vunpack.c.l.b16 %v193
    %v628 = vunpack.c.h.b16 %v193
    %v629 = vunpack.c.l.b16 %v194
    %v630 = vunpack.c.h.b16 %v194
    %v631 = vunpack.c.l.b16 %v195
    %v632 = vunpack.c.h.b16 %v195
    %v633 = vunpack.c.l.b16 %v196
    %v634 = vunpack.c.h.b16 %v196
    %v635 = vunpack.c.l.b16 %v197
    %v636 = vunpack.c.h.b16 %v197
    %v637 = vunpack.c.l.b16 %v198
    %v638 = vunpack.c.h.b16 %v198
    %v639 = vunpack.c.l.b16 %v199
    %v640 = vunpack.c.h.b16 %v199
    %v641 = vunpack.c.l.b16 %v200
    %v642 = vunpack.c.h.b16 %v200
    %v643 = vunpack.c.l.b16 %v201
    %v644 = vunpack.c.h.b16 %v201
    %v645 = vunpack.c.l.b16 %v202
    %v646 = vunpack.c.h.b16 %v202
    %v647 = vunpack.c.l.b16 %v203
    %v648 = vunpack.c.h.b16 %v203
    %v649 = vunpack.c.l.b16 %v204
    %v650 = vunpack.c.h.b16 %v204
    %v651 = vunpack.c.l.b16 %v205
    %v652 = vunpack.c.h.b16 %v205
    %v653 = vunpack.c.l.b16 %v206
    %v654 = vunpack.c.h.b16 %v206
    %v655 = vunpack.c.l.b16 %v207
    %v656 = vunpack.c.h.b16 %v207
    %v657 = vunpack.c.l.b16 %v208
    %v658 = vunpack.c.h.b16 %v208
    %v659 = vunpack.c.l.b16 %v209
    %v660 = vunpack.c.h.b16 %v209
    %v661 = vunpack.c.l.b16 %v210
    %v662 = vunpack.c.h.b16 %v210
    %v663 = vunpack.c.l.b16 %v211
    %v664 = vunpack.c.h.b16 %v211
    %v665 = vunpack.c.l.b16 %v212
    %v666 = vunpack.c.h.b16 %v212
    %v667 = vunpack.c.l.b16 %v213
    %v668 = vunpack.c.h.b16 %v213
    %v669 = vunpack.c.l.b16 %v214
    %v670 = vunpack.c.h.b16 %v214
    %v671 = vunpack.c.l.b16 %v215
    %v672 = vunpack.c.h.b16 %v215
    %v673 = vunpack.c.l.b16 %v216
    %v674 = vunpack.c.h.b16 %v216
    %v675 = vunpack.c.l.b16 %v217
    %v676 = vunpack.c.h.b16 %v217
    %v677 = vunpack.c.l.b16 %v218
    %v678 = vunpack.c.h.b16 %v218
    %v679 = vunpack.c.l.b16 %v219
    %v680 = vunpack.c.h.b16 %v219
    %v681 = vunpack.c.l.b16 %v220
    %v682 = vunpack.c.h.b16 %v220
    %v683 = vunpack.c.l.b16 %v221
    %v684 = vunpack.c.h.b16 %v221
    %v685 = vunpack.c.l.b16 %v222
    %v686 = vunpack.c.h.b16 %v222
    %v687 = vunpack.c.l.b16 %v223
    %v688 = vunpack.c.h.b16 %v223
    %v689 = vunpack.c.l.b16 %v224
    %v690 = vunpack.c.h.b16 %v224
    %v691 = vunpack.c.l.b16 %v225
    %v692 = vunpack.c.h.b16 %v225
    %v693 = vunpack.c.l.b16 %v226
    %v694 = vunpack.c.h.b16 %v226
    %v695 = vunpack.c.l.b16 %v227
    %v696 = vunpack.c.h.b16 %v227
    %v697 = vunpack.c.l.b16 %v228
    %v698 = vunpack.c.h.b16 %v228
    %v699 = vunpack.c.l.b16 %v229
    %v700 = vunpack.c.h.b16 %v229
    %v701 = vunpack.c.l.b16 %v230
    %v702 = vunpack.c.h.b16 %v230
    %v703 = vunpack.c.l.b16 %v231
    %v704 = vunpack.c.h.b16 %v231
    %v705 = vunpack.c.l.b16 %v232
    %v706 = vunpack.c.h.b16 %v232
    %v707 = vunpack.c.l.b16 %v233
    %v708 = vunpack.c.h.b16 %v233
    %v709 = vunpack.c.l.b16 %v234
    %v710 = vunpack.c.h.b16 %v234
    %v711 = vunpack.c.l.b16 %v235
    %v712 = vunpack.c.h.b16 %v235
    %v713 = vunpack.c.l.b16 %v236
    %v714 = vunpack.c.h.b16 %v236
    %v715 = vunpack.c.l.b16 %v237
    %v716 = vunpack.c.h.b16 %v237
    %v717 = vunpack.c.l.b16 %v238
    %v718 = vunpack.c.h.b16 %v238
    %v719 = vunpack.c.l.b16 %v239
    %v720 = vunpack.c.h.b16 %v239
    %v721 = vunpack.c.l.b16 %v240
    %v722 = vunpack.c.h.b16 %v240
    %v723 = vunpack.c.l.b16 %v241
    %v724 = vunpack.c.h.b16 %v241
    %v725 = vunpack.c.l.b16 %v242
    %v726 = vunpack.c.h.b16 %v242
    %v727 = vunpack.c.l.b16 %v243
    %v728 = vunpack.c.h.b16 %v243
    %v729 = vunpack.c.l.b16 %v244
    %v730 = vunpack.c.h.b16 %v244
    %v731 = vunpack.c.l.b16 %v245
    %v732 = vunpack.c.h.b16 %v245
    %v733 = vunpack.c.l.b16 %v246
    %v734 = vunpack.c.h.b16 %v246
    %v735 = vunpack.c.l.b16 %v247
    %v736 = vunpack.c.h.b16 %v247
    %v737 = vunpack.c.l.b16 %v248
    %v738 = vunpack.c.h.b16 %v248
    %v739 = vunpack.c.l.b16 %v249
    %v740 = vunpack.c.h.b16 %v249
    %v741 = vunpack.c.l.b16 %v250
    %v742 = vunpack.c.h.b16 %v250
    %v743 = vunpack.c.l.b16 %v251
    %v744 = vunpack.c.h.b16 %v251
    %v745 = vunpack.c.l.b16 %v252
    %v746 = vunpack.c.h.b16 %v252
    %v747 = vunpack.c.l.b16 %v253
    %v748 = vunpack.c.h.b16 %v253
    %v749 = vunpack.c.l.b16 %v254
    %v750 = vunpack.c.h.b16 %v254
    %v751 = vunpack.c.l.b16 %v255
    %v752 = vunpack.c.h.b16 %v255
    %v753 = vunpack.c.l.b16 %v256
    %v754 = vunpack.c.h.b16 %v256
    %v755 = vunpack.c.l.b16 %v257
    %v756 = vunpack.c.h.b16 %v257
    %v757 = vunpack.c.l.b16 %v258
    %v758 = vunpack.c.h.b16 %v258
    %v759 = vunpack.c.l.b16 %v259
    %v760 = vunpack.c.h.b16 %v259
    %v761 = vunpack.c.l.b16 %v260
    %v762 = vunpack.c.h.b16 %v260
    %v763 = vunpack.c.l.b16 %v261
    %v764 = vunpack.c.h.b16 %v261
    %v765 = vunpack.c.l.b16 %v262
    %v766 = vunpack.c.h.b16 %v262
    %v767 = vunpack.c.l.b16 %v263
    %v768 = vunpack.c.h.b16 %v263
    %v769 = vunpack.c.l.b16 %v264
    %v770 = vunpack.c.h.b16 %v264
    %v771 = vunpack.c.l.b16 %v265
    %v772 = vunpack.c.h.b16 %v265
    %v773 = vunpack.c.l.b16 %v266
    %v774 = vunpack.c.h.b16 %v266
    %v775 = vunpack.c.l.b16 %v267
    %v776 = vunpack.c.h.b16 %v267
    %v777 = vunpack.c.l.b16 %v268
    %v778 = vunpack.c.h.b16 %v268
    %v779 = vunpack.c.l.b16 %v269
    %v780 = vunpack.c.h.b16 %v269
    %v781 = vunpack.c.l.b16 %v270
    %v782 = vunpack.c.h.b16 %v270
    %v783 = vunpack.c.l.b16 %v271
    %v784 = vunpack.c.h.b16 %v271
    %v785 = vunpack.c.l.b16 %v272
    %v786 = vunpack.c.h.b16 %v272
    %v787 = vunpack.c.l.b16 %v273
    %v788 = vunpack.c.h.b16 %v273
    %v789 = vunpack.c.l.b16 %v274
    %v790 = vunpack.c.h.b16 %v274
    %v791 = vunpack.c.l.b16 %v275
    %v792 = vunpack.c.h.b16 %v275
    %v793 = vunpack.c.l.b16 %v276
    %v794 = vunpack.c.h.b16 %v276
    %v795 = vunpack.c.l.b16 %v277
    %v796 = vunpack.c.h.b16 %v277
    %v797 = vunpack.c.l.b16 %v278
    %v798 = vunpack.c.h.b16 %v278
    %v799 = vunpack.c.l.b16 %v279
    %v800 = vunpack.c.h.b16 %v279
    %v801 = vunpack.c.l.b16 %v280
    %v802 = vunpack.c.h.b16 %v280
    %v803 = vunpack.c.l.b16 %v281
    %v804 = vunpack.c.h.b16 %v281
    %v805 = vunpack.c.l.b16 %v282
    %v806 = vunpack.c.h.b16 %v282
    %v807 = vunpack.c.l.b16 %v283
    %v808 = vunpack.c.h.b16 %v283
    %v809 = vunpack.c.l.b16 %v284
    %v810 = vunpack.c.h.b16 %v284
    %v811 = vunpack.c.l.b16 %v285
    %v812 = vunpack.c.h.b16 %v285
    %v813 = vunpack.c.l.b16 %v286
    %v814 = vunpack.c.h.b16 %v286
    %v815 = vunpack.c.l.b16 %v287
    %v816 = vunpack.c.h.b16 %v287
    %v817 = vunpack.c.l.b16 %v288
    %v818 = vunpack.c.h.b16 %v288
    %v819 = vunpack.c.l.b16 %v289
    %v820 = vunpack.c.h.b16 %v289
    %v821 = vunpack.c.l.b16 %v290
    %v822 = vunpack.c.h.b16 %v290
    %v823 = vunpack.c.l.b16 %v291
    %v824 = vunpack.c.h.b16 %v291
    %v825 = vunpack.c.l.b16 %v292
    %v826 = vunpack.c.h.b16 %v292
    %v827 = vunpack.c.l.b16 %v293
    %v828 = vunpack.c.h.b16 %v293
    %v829 = vunpack.c.l.b16 %v294
    %v830 = vunpack.c.h.b16 %v294
    %v831 = vunpack.c.l.b16 %v295
    %v832 = vunpack.c.h.b16 %v295
    %v833 = vunpack.c.l.b16 %v296
    %v834 = vunpack.c.h.b16 %v296
    %v835 = vunpack.c.l.b16 %v297
    %v836 = vunpack.c.h.b16 %v297
    %v837 = vunpack.c.l.b16 %v298
    %v838 = vunpack.c.h.b16 %v298
    %v839 = vunpack.c.l.b16 %v299
    %v840 = vunpack.c.h.b16 %v299
    %v841 = vunpack.c.l.b16 %v300
    %v842 = vunpack.c.h.b16 %v300
    %v843 = vunpack.c.l.b16 %v301
    %v844 = vunpack.c.h.b16 %v301
    %v845 = vunpack.c.l.b16 %v302
    %v846 = vunpack.c.h.b16 %v302
    %v847 = vunpack.c.l.b16 %v303
    %v848 = vunpack.c.h.b16 %v303
    %v849 = vunpack.c.l.b16 %v304
    %v850 = vunpack.c.h.b16 %v304
    %v851 = vunpack.c.l.b16 %v305
    %v852 = vunpack.c.h.b16 %v305
    %v853 = vunpack.c.l.b16 %v306
    %v854 = vunpack.c.h.b16 %v306
    %v855 = vunpack.c.l.b16 %v307
    %v856 = vunpack.c.h.b16 %v307
    %v857 = vunpack.c.l.b16 %v308
    %v858 = vunpack.c.h.b16 %v308
    %v859 = vunpack.c.l.b16 %v309
    %v860 = vunpack.c.h.b16 %v309
    %v861 = vunpack.c.l.b16 %v310
    %v862 = vunpack.c.h.b16 %v310
    %v863 = vunpack.c.l.b16 %v311
    %v864 = vunpack.c.h.b16 %v311
    %v865 = vunpack.c.l.b16 %v312
    %v866 = vunpack.c.h.b16 %v312
    %v867 = vunpack.c.l.b16 %v313
    %v868 = vunpack.c.h.b16 %v313
    %v869 = vunpack.c.l.b16 %v314
    %v870 = vunpack.c.h.b16 %v314
    %v871 = vunpack.c.l.b16 %v315
    %v872 = vunpack.c.h.b16 %v315
    %v873 = vunpack.c.l.b16 %v316
    %v874 = vunpack.c.h.b16 %v316
    %v875 = vunpack.c.l.b16 %v317
    %v876 = vunpack.c.h.b16 %v317
    %v877 = vunpack.c.l.b16 %v318
    %v878 = vunpack.c.h.b16 %v318
    %v879 = vunpack.c.l.b16 %v319
    %v880 = vunpack.c.h.b16 %v319
    %v881 = vunpack.c.l.b16 %v320
    %v882 = vunpack.c.h.b16 %v320
    %v883 = vunpack.c.l.b16 %v321
    %v884 = vunpack.c.h.b16 %v321
    %v885 = vunpack.c.l.b16 %v322
    %v886 = vunpack.c.h.b16 %v322
    %v887 = vunpack.c.l.b16 %v323
    %v888 = vunpack.c.h.b16 %v323
    %v889 = vunpack.c.l.b16 %v324
    %v890 = vunpack.c.h.b16 %v324
    %v891 = vunpack.c.l.b16 %v325
    %v892 = vunpack.c.h.b16 %v325
    %v893 = vunpack.c.l.b16 %v326
    %v894 = vunpack.c.h.b16 %v326
    %v895 = vunpack.c.l.b16 %v327
    %v896 = vunpack.c.h.b16 %v327
    %v897 = vunpack.c.l.b16 %v328
    %v898 = vunpack.c.h.b16 %v328
    %v899 = vunpack.c.l.b16 %v329
    %v900 = vunpack.c.h.b16 %v329
    %v901 = vunpack.c.l.b16 %v330
    %v902 = vunpack.c.h.b16 %v330
    %v903 = vunpack.c.l.b16 %v331
    %v904 = vunpack.c.h.b16 %v331
    %v905 = vunpack.c.l.b16 %v332
    %v906 = vunpack.c.h.b16 %v332
    %v907 = vunpack.c.l.b16 %v333
    %v908 = vunpack.c.h.b16 %v333
    %v909 = vunpack.c.l.b16 %v334
    %v910 = vunpack.c.h.b16 %v334
    %v911 = vunpack.c.l.b16 %v335
    %v912 = vunpack.c.h.b16 %v335
    %v913 = vunpack.c.l.b16 %v336
    %v914 = vunpack.c.h.b16 %v336
    %v915 = vunpack.c.l.b16 %v337
    %v916 = vunpack.c.h.b16 %v337
    %v917 = vunpack.c.l.b16 %v338
    %v918 = vunpack.c.h.b16 %v338
    %v919 = vunpack.c.l.b16 %v339
    %v920 = vunpack.c.h.b16 %v339
    %v921 = vunpack.c.l.b16 %v340
    %v922 = vunpack.c.h.b16 %v340
    %v923 = vunpack.c.l.b16 %v341
    %v924 = vunpack.c.h.b16 %v341
    %v925 = vunpack.c.l.b16 %v342
    %v926 = vunpack.c.h.b16 %v342
    %v927 = vunpack.c.l.b16 %v343
    %v928 = vunpack.c.h.b16 %v343
    %v929 = vunpack.c.l.b16 %v344
    %v930 = vunpack.c.h.b16 %v344
    %v931 = vunpack.c.l.b16 %v345
    %v932 = vunpack.c.h.b16 %v345
    %v933 = vunpack.c.l.b16 %v346
    %v934 = vunpack.c.h.b16 %v346
    %v935 = vunpack.c.l.b16 %v347
    %v936 = vunpack.c.h.b16 %v347
    %v937 = vunpack.c.l.b16 %v348
    %v938 = vunpack.c.h.b16 %v348
    %v939 = vunpack.c.l.b16 %v349
    %v940 = vunpack.c.h.b16 %v349
    %v941 = vunpack.c.l.b16 %v350
    %v942 = vunpack.c.h.b16 %v350
    %v943 = vunpack.c.l.b16 %v351
    %v944 = vunpack.c.h.b16 %v351
    %v945 = vunpack.c.l.b16 %v352
    %v946 = vunpack.c.h.b16 %v352
    %v947 = vunpack.c.l.b16 %v353
    %v948 = vunpack.c.h.b16 %v353
    %v949 = vunpack.c.l.b16 %v354
    %v950 = vunpack.c.h.b16 %v354
    %v951 = vunpack.c.l.b16 %v355
    %v952 = vunpack.c.h.b16 %v355
    %v953 = vunpack.c.l.b16 %v356
    %v954 = vunpack.c.h.b16 %v356
    %v955 = vpack.c.b16 %v575, %v571
    %v956 = vpack.c.b16 %v576, %v572
    %v957 = vpack.c.b16 %v577, %v573
    %v958 = vpack.c.b16 %v578, %v574
    %v959 = vpack.c.b16 %v583, %v579
    %v960 = vpack.c.b16 %v584, %v580
    %v961 = vpack.c.b16 %v585, %v581
    %v962 = vpack.c.b16 %v586, %v582
    %v963 = vpack.c.b16 %v591, %v587
    %v964 = vpack.c.b16 %v592, %v588
    %v965 = vpack.c.b16 %v593, %v589
    %v966 = vpack.c.b16 %v594, %v590
    %v967 = vpack.c.b16 %v599, %v595
    %v968 = vpack.c.b16 %v600, %v596
    %v969 = vpack.c.b16 %v601, %v597
    %v970 = vpack.c.b16 %v602, %v598
    %v971 = vpack.c.b16 %v607, %v603
    %v972 = vpack.c.b16 %v608, %v604
    %v973 = vpack.c.b16 %v609, %v605
    %v974 = vpack.c.b16 %v610, %v606
    %v975 = vpack.c.b16 %v615, %v611
    %v976 = vpack.c.b16 %v616, %v612
    %v977 = vpack.c.b16 %v617, %v613
    %v978 = vpack.c.b16 %v618, %v614
    %v979 = vpack.c.b16 %v623, %v619
    %v980 = vpack.c.b16 %v624, %v620
    %v981 = vpack.c.b16 %v625, %v621
    %v982 = vpack.c.b16 %v626, %v622
    %v983 = vpack.c.b16 %v631, %v627
    %v984 = vpack.c.b16 %v632, %v628
    %v985 = vpack.c.b16 %v633, %v629
    %v986 = vpack.c.b16 %v634, %v630
    %v987 = vpack.c.b16 %v639, %v635
    %v988 = vpack.c.b16 %v640, %v636
    %v989 = vpack.c.b16 %v641, %v637
    %v990 = vpack.c.b16 %v642, %v638
    %v991 = vpack.c.b16 %v647, %v643
    %v992 = vpack.c.b16 %v648, %v644
    %v993 = vpack.c.b16 %v649, %v645
    %v994 = vpack.c.b16 %v650, %v646
    %v995 = vpack.c.b16 %v655, %v651
    %v996 = vpack.c.b16 %v656, %v652
    %v997 = vpack.c.b16 %v657, %v653
    %v998 = vpack.c.b16 %v658, %v654
    %v999 = vpack.c.b16 %v663, %v659
    %v1000 = vpack.c.b16 %v664, %v660
    %v1001 = vpack.c.b16 %v665, %v661
    %v1002 = vpack.c.b16 %v666, %v662
    %v1003 = vpack.c.b16 %v671, %v667
    %v1004 = vpack.c.b16 %v672, %v668
    %v1005 = vpack.c.b16 %v673, %v669
    %v1006 = vpack.c.b16 %v674, %v670
    %v1007 = vpack.c.b16 %v679, %v675
    %v1008 = vpack.c.b16 %v680, %v676
    %v1009 = vpack.c.b16 %v681, %v677
    %v1010 = vpack.c.b16 %v682, %v678
    %v1011 = vpack.c.b16 %v687, %v683
    %v1012 = vpack.c.b16 %v688, %v684
    %v1013 = vpack.c.b16 %v689, %v685
    %v1014 = vpack.c.b16 %v690, %v686
    %v1015 = vpack.c.b16 %v695, %v691
    %v1016 = vpack.c.b16 %v696, %v692
    %v1017 = vpack.c.b16 %v697, %v693
    %v1018 = vpack.c.b16 %v698, %v694
    %v1019 = vpack.c.b16 %v703, %v699
    %v1020 = vpack.c.b16 %v704, %v700
    %v1021 = vpack.c.b16 %v705, %v701
    %v1022 = vpack.c.b16 %v706, %v702
    %v1023 = vpack.c.b16 %v711, %v707
    %v1024 = vpack.c.b16 %v712, %v708
    %v1025 = vpack.c.b16 %v713, %v709
    %v1026 = vpack.c.b16 %v714, %v710
    %v1027 = vpack.c.b16 %v719, %v715
    %v1028 = vpack.c.b16 %v720, %v716
    %v1029 = vpack.c.b16 %v721, %v717
    %v1030 = vpack.c.b16 %v722, %v718
    %v1031 = vpack.c.b16 %v727, %v723
    %v1032 = vpack.c.b16 %v728, %v724
    %v1033 = vpack.c.b16 %v729, %v725
    %v1034 = vpack.c.b16 %v730, %v726
    %v1035 = vpack.c.b16 %v735, %v731
    %v1036 = vpack.c.b16 %v736, %v732
    %v1037 = vpack.c.b16 %v737, %v733
    %v1038 = vpack.c.b16 %v738, %v734
    %v1039 = vpack.c.b16 %v743, %v739
    %v1040 = vpack.c.b16 %v744, %v740
    %v1041 = vpack.c.b16 %v745, %v741
    %v1042 = vpack.c.b16 %v746, %v742
    %v1043 = vpack.c.b16 %v751, %v747
    %v1044 = vpack.c.b16 %v752, %v748
    %v1045 = vpack.c.b16 %v753, %v749
    %v1046 = vpack.c.b16 %v754, %v750
    %v1047 = vpack.c.b16 %v759, %v755
    %v1048 = vpack.c.b16 %v760, %v756
    %v1049 = vpack.c.b16 %v761, %v757
    %v1050 = vpack.c.b16 %v762, %v758
    %v1051 = vpack.c.b16 %v767, %v763
    %v1052 = vpack.c.b16 %v768, %v764
    %v1053 = vpack.c.b16 %v769, %v765
    %v1054 = vpack.c.b16 %v770, %v766
    %v1055 = vpack.c.b16 %v775, %v771
    %v1056 = vpack.c.b16 %v776, %v772
    %v1057 = vpack.c.b16 %v777, %v773
    %v1058 = vpack.c.b16 %v778, %v774
    %v1059 = vpack.c.b16 %v783, %v779
    %v1060 = vpack.c.b16 %v784, %v780
    %v1061 = vpack.c.b16 %v785, %v781
    %v1062 = vpack.c.b16 %v786, %v782
    %v1063 = vpack.c.b16 %v791, %v787
    %v1064 = vpack.c.b16 %v792, %v788
    %v1065 = vpack.c.b16 %v793, %v789
    %v1066 = vpack.c.b16 %v794, %v790
    %v1067 = vpack.c.b16 %v799, %v795
    %v1068 = vpack.c.b16 %v800, %v796
    %v1069 = vpack.c.b16 %v801, %v797
    %v1070 = vpack.c.b16 %v802, %v798
    %v1071 = vpack.c.b16 %v807, %v803
    %v1072 = vpack.c.b16 %v808, %v804
    %v1073 = vpack.c.b16 %v809, %v805
    %v1074 = vpack.c.b16 %v810, %v806
    %v1075 = vpack.c.b16 %v815, %v811
    %v1076 = vpack.c.b16 %v816, %v812
    %v1077 = vpack.c.b16 %v817, %v813
    %v1078 = vpack.c.b16 %v818, %v814
    %v1079 = vpack.c.b16 %v823, %v819
    %v1080 = vpack.c.b16 %v824, %v820
    %v1081 = vpack.c.b16 %v825, %v821
    %v1082 = vpack.c.b16 %v826, %v822
    %v1083 = vpack.c.b16 %v831, %v827
    %v1084 = vpack.c.b16 %v832, %v828
    %v1085 = vpack.c.b16 %v833, %v829
    %v1086 = vpack.c.b16 %v834, %v830
    %v1087 = vpack.c.b16 %v839, %v835
    %v1088 = vpack.c.b16 %v840, %v836
    %v1089 = vpack.c.b16 %v841, %v837
    %v1090 = vpack.c.b16 %v842, %v838
    %v1091 = vpack.c.b16 %v847, %v843
    %v1092 = vpack.c.b16 %v848, %v844
    %v1093 = vpack.c.b16 %v849, %v845
    %v1094 = vpack.c.b16 %v850, %v846
    %v1095 = vpack.c.b16 %v855, %v851
    %v1096 = vpack.c.b16 %v856, %v852
    %v1097 = vpack.c.b16 %v857, %v853
    %v1098 = vpack.c.b16 %v858, %v854
    %v1099 = vpack.c.b16 %v863, %v859
    %v1100 = vpack.c.b16 %v864, %v860
    %v1101 = vpack.c.b16 %v865, %v861
    %v1102 = vpack.c.b16 %v866, %v862
    %v1103 = vpack.c.b16 %v871, %v867
    %v1104 = vpack.c.b16 %v872, %v868
    %v1105 = vpack.c.b16 %v873, %v869
    %v1106 = vpack.c.b16 %v874, %v870
    %v1107 = vpack.c.b16 %v879, %v875
    %v1108 = vpack.c.b16 %v880, %v876
    %v1109 = vpack.c.b16 %v881, %v877
    %v1110 = vpack.c.b16 %v882, %v878
    %v1111 = vpack.c.b16 %v887, %v883
    %v1112 = vpack.c.b16 %v888, %v884
    %v1113 = vpack.c.b16 %v889, %v885
    %v1114 = vpack.c.b16 %v890, %v886
    %v1115 = vpack.c.b16 %v895, %v891
    %v1116 = vpack.c.b16 %v896, %v892
    %v1117 = vpack.c.b16 %v897, %v893
    %v1118 = vpack.c.b16 %v898, %v894
    %v1119 = vpack.c.b16 %v903, %v899
    %v1120 = vpack.c.b16 %v904, %v900
    %v1121 = vpack.c.b16 %v905, %v901
    %v1122 = vpack.c.b16 %v906, %v902
    %v1123 = vpack.c.b16 %v911, %v907
    %v1124 = vpack.c.b16 %v912, %v908
    %v1125 = vpack.c.b16 %v913, %v909
    %v1126 = vpack.c.b16 %v914, %v910
    %v1127 = vpack.c.b16 %v919, %v915
    %v1128 = vpack.c.b16 %v920, %v916
    %v1129 = vpack.c.b16 %v921, %v917
    %v1130 = vpack.c.b16 %v922, %v918
    %v1131 = vpack.c.b16 %v927, %v923
    %v1132 = vpack.c.b16 %v928, %v924
    %v1133 = vpack.c.b16 %v929, %v925
    %v1134 = vpack.c.b16 %v930, %v926
    %v1135 = vpack.c.b16 %v935, %v931
    %v1136 = vpack.c.b16 %v936, %v932
    %v1137 = vpack.c.b16 %v937, %v933
    %v1138 = vpack.c.b16 %v938, %v934
    %v1139 = vpack.c.b16 %v943, %v939
    %v1140 = vpack.c.b16 %v944, %v940
    %v1141 = vpack.c.b16 %v945, %v941
    %v1142 = vpack.c.b16 %v946, %v942
    %v1143 = vpack.c.b16 %v951, %v947
    %v1144 = vpack.c.b16 %v952, %v948
    %v1145 = vpack.c.b16 %v953, %v949
    %v1146 = vpack.c.b16 %v954, %v950
    %1339 = vmatprep.subr.bf16.mxu0 %v956
    %1340 = vmatpush1.bf16.msra.mxu0 %v955
    %1341 = vmatprep.subr.bf16.mxu0 %v960
    %1342 = vmatpush1.bf16.msra.mxu0 %v959
    %1343 = vmatprep.subr.bf16.mxu0 %v964
    %1344 = vmatpush1.bf16.msra.mxu0 %v963
    %1345 = vmatprep.subr.bf16.mxu0 %v968
    %1346 = vmatpush1.bf16.msra.mxu0 %v967
    %1347 = vmatprep.subr.bf16.mxu0 %v972
    %1348 = vmatpush1.bf16.msra.mxu0 %v971
    %1349 = vmatprep.subr.bf16.mxu0 %v976
    %1350 = vmatpush1.bf16.msra.mxu0 %v975
    %1351 = vmatprep.subr.bf16.mxu0 %v980
    %1352 = vmatpush1.bf16.msra.mxu0 %v979
    %1353 = vmatprep.subr.bf16.mxu0 %v984
    %1354 = vmatpush1.bf16.msra.mxu0 %v983
    %1355 = vmatprep.subr.bf16.mxu0 %v988
    %1356 = vmatpush1.bf16.msra.mxu0 %v987
    %1357 = vmatprep.subr.bf16.mxu0 %v992
    %1358 = vmatpush1.bf16.msra.mxu0 %v991
    %1359 = vmatprep.subr.bf16.mxu0 %v996
    %1360 = vmatpush1.bf16.msra.mxu0 %v995
    %1361 = vmatprep.subr.bf16.mxu0 %v1000
    %1362 = vmatpush1.bf16.msra.mxu0 %v999
    %1363 = vmatprep.subr.bf16.mxu0 %v1004
    %1364 = vmatpush1.bf16.msra.mxu0 %v1003
    %1365 = vmatprep.subr.bf16.mxu0 %v1008
    %1366 = vmatpush1.bf16.msra.mxu0 %v1007
    %1367 = vmatprep.subr.bf16.mxu0 %v1012
    %1368 = vmatpush1.bf16.msra.mxu0 %v1011
    %1369 = vmatprep.subr.bf16.mxu0 %v1016
    %1370 = vmatpush1.bf16.msra.mxu0 %v1015
    %1371 = vmatprep.mubr.bf16.mxu0 %v160
    %1372 = vmatmul.mubr.bf16.gmra.mrb[0].mxu0 %v159
    %v1373 = vpop.f32.mrb[0].mxu0
    %v1374 = vadd.f32 %v362, %v1373
    %v1375 = vpop.f32.mrb[0].mxu0
    %v1376 = vadd.f32 %v366, %v1375
    %v1377 = vpop.f32.mrb[0].mxu0
    %v1378 = vpop.f32.mrb[0].mxu0
    %1379 = vdwg.mxu0
    %1380 = vmatprep.subr.bf16.mxu0 %v1020
    %1381 = vmatpush1.bf16.msra.mxu0 %v1019
    %1382 = vmatprep.subr.bf16.mxu0 %v1024
    %1383 = vmatpush1.bf16.msra.mxu0 %v1023
    %1384 = vmatprep.subr.bf16.mxu0 %v1028
    %1385 = vmatpush1.bf16.msra.mxu0 %v1027
    %1386 = vmatprep.subr.bf16.mxu0 %v1032
    %1387 = vmatpush1.bf16.msra.mxu0 %v1031
    %1388 = vmatprep.subr.bf16.mxu0 %v1036
    %1389 = vmatpush1.bf16.msra.mxu0 %v1035
    %1390 = vmatprep.subr.bf16.mxu0 %v1040
    %1391 = vmatpush1.bf16.msra.mxu0 %v1039
    %1392 = vmatprep.subr.bf16.mxu0 %v1044
    %1393 = vmatpush1.bf16.msra.mxu0 %v1043
    %1394 = vmatprep.subr.bf16.mxu0 %v1048
    %1395 = vmatpush1.bf16.msra.mxu0 %v1047
    %1396 = vmatprep.subr.bf16.mxu0 %v1052
    %1397 = vmatpush1.bf16.msra.mxu0 %v1051
    %1398 = vmatprep.subr.bf16.mxu0 %v1056
    %1399 = vmatpush1.bf16.msra.mxu0 %v1055
    %1400 = vmatprep.subr.bf16.mxu0 %v1060
    %1401 = vmatpush1.bf16.msra.mxu0 %v1059
    %1402 = vmatprep.subr.bf16.mxu0 %v1064
    %1403 = vmatpush1.bf16.msra.mxu0 %v1063
    %1404 = vmatprep.subr.bf16.mxu0 %v1068
    %1405 = vmatpush1.bf16.msra.mxu0 %v1067
    %1406 = vmatprep.subr.bf16.mxu0 %v1072
    %1407 = vmatpush1.bf16.msra.mxu0 %v1071
    %1408 = vmatprep.subr.bf16.mxu0 %v1076
    %1409 = vmatpush1.bf16.msra.mxu0 %v1075
    %1410 = vmatprep.subr.bf16.mxu0 %v1080
    %1411 = vmatpush1.bf16.msra.mxu0 %v1079
    %1412 = vmatprep.mubr.bf16.mxu0 %v162
    %1413 = vmatmul.mubr.bf16.gmra.mrb[0].mxu0 %v161
    %v1414 = vpop.f32.mrb[0].mxu0
    %v1415 = vadd.f32 %v1374, %v1414
    %v1416 = vpop.f32.mrb[0].mxu0
    %v1417 = vadd.f32 %v1376, %v1416
    %v1418 = vpop.f32.mrb[0].mxu0
    %v1419 = vpop.f32.mrb[0].mxu0
    %1420 = vdwg.mxu0
    %1421 = vmatprep.subr.bf16.mxu0 %v1084
    %1422 = vmatpush1.bf16.msra.mxu0 %v1083
    %1423 = vmatprep.subr.bf16.mxu0 %v1088
    %1424 = vmatpush1.bf16.msra.mxu0 %v1087
    %1425 = vmatprep.subr.bf16.mxu0 %v1092
    %1426 = vmatpush1.bf16.msra.mxu0 %v1091
    %1427 = vmatprep.subr.bf16.mxu0 %v1096
    %1428 = vmatpush1.bf16.msra.mxu0 %v1095
    %1429 = vmatprep.subr.bf16.mxu0 %v1100
    %1430 = vmatpush1.bf16.msra.mxu0 %v1099
    %1431 = vmatprep.subr.bf16.mxu0 %v1104
    %1432 = vmatpush1.bf16.msra.mxu0 %v1103
    %1433 = vmatprep.subr.bf16.mxu0 %v1108
    %1434 = vmatpush1.bf16.msra.mxu0 %v1107
    %1435 = vmatprep.subr.bf16.mxu0 %v1112
    %1436 = vmatpush1.bf16.msra.mxu0 %v1111
    %1437 = vmatprep.subr.bf16.mxu0 %v1116
    %1438 = vmatpush1.bf16.msra.mxu0 %v1115
    %1439 = vmatprep.subr.bf16.mxu0 %v1120
    %1440 = vmatpush1.bf16.msra.mxu0 %v1119
    %1441 = vmatprep.subr.bf16.mxu0 %v1124
    %1442 = vmatpush1.bf16.msra.mxu0 %v1123
    %1443 = vmatprep.subr.bf16.mxu0 %v1128
    %1444 = vmatpush1.bf16.msra.mxu0 %v1127
    %1445 = vmatprep.subr.bf16.mxu0 %v1132
    %1446 = vmatpush1.bf16.msra.mxu0 %v1131
    %1447 = vmatprep.subr.bf16.mxu0 %v1136
    %1448 = vmatpush1.bf16.msra.mxu0 %v1135
    %1449 = vmatprep.subr.bf16.mxu0 %v1140
    %1450 = vmatpush1.bf16.msra.mxu0 %v1139
    %1451 = vmatprep.subr.bf16.mxu0 %v1144
    %1452 = vmatpush1.bf16.msra.mxu0 %v1143
    %1453 = vmatprep.mubr.bf16.mxu0 %v164
    %1454 = vmatmul.mubr.bf16.gmra.mrb[0].mxu0 %v163
    %v1455 = vpop.f32.mrb[0].mxu0
    %v1456 = vadd.f32 %v1415, %v1455
    %v1457 = vpop.f32.mrb[0].mxu0
    %v1458 = vadd.f32 %v1417, %v1457
    %v1459 = vpop.f32.mrb[0].mxu0
    %v1460 = vpop.f32.mrb[0].mxu0
    %1461 = vdwg.mxu0
    %1462 = vmatprep.subr.bf16.mxu0 %v958
    %1463 = vmatpush1.bf16.msra.mxu0 %v957
    %1464 = vmatprep.subr.bf16.mxu0 %v962
    %1465 = vmatpush1.bf16.msra.mxu0 %v961
    %1466 = vmatprep.subr.bf16.mxu0 %v966
    %1467 = vmatpush1.bf16.msra.mxu0 %v965
    %1468 = vmatprep.subr.bf16.mxu0 %v970
    %1469 = vmatpush1.bf16.msra.mxu0 %v969
    %1470 = vmatprep.subr.bf16.mxu0 %v974
    %1471 = vmatpush1.bf16.msra.mxu0 %v973
    %1472 = vmatprep.subr.bf16.mxu0 %v978
    %1473 = vmatpush1.bf16.msra.mxu0 %v977
    %1474 = vmatprep.subr.bf16.mxu0 %v982
    %1475 = vmatpush1.bf16.msra.mxu0 %v981
    %1476 = vmatprep.subr.bf16.mxu0 %v986
    %1477 = vmatpush1.bf16.msra.mxu0 %v985
    %1478 = vmatprep.subr.bf16.mxu0 %v990
    %1479 = vmatpush1.bf16.msra.mxu0 %v989
    %1480 = vmatprep.subr.bf16.mxu0 %v994
    %1481 = vmatpush1.bf16.msra.mxu0 %v993
    %1482 = vmatprep.subr.bf16.mxu0 %v998
    %1483 = vmatpush1.bf16.msra.mxu0 %v997
    %1484 = vmatprep.subr.bf16.mxu0 %v1002
    %1485 = vmatpush1.bf16.msra.mxu0 %v1001
    %1486 = vmatprep.subr.bf16.mxu0 %v1006
    %1487 = vmatpush1.bf16.msra.mxu0 %v1005
    %1488 = vmatprep.subr.bf16.mxu0 %v1010
    %1489 = vmatpush1.bf16.msra.mxu0 %v1009
    %1490 = vmatprep.subr.bf16.mxu0 %v1014
    %1491 = vmatpush1.bf16.msra.mxu0 %v1013
    %1492 = vmatprep.subr.bf16.mxu0 %v1018
    %1493 = vmatpush1.bf16.msra.mxu0 %v1017
    %1494 = vmatprep.mubr.bf16.mxu0 %v160
    %1495 = vmatmul.mubr.bf16.gmra.mrb[0].mxu0 %v159
    %v1496 = vpop.f32.mrb[0].mxu0
    %v1497 = vadd.f32 %v370, %v1496
    %v1498 = vpop.f32.mrb[0].mxu0
    %v1499 = vadd.f32 %v374, %v1498
    %v1500 = vpop.f32.mrb[0].mxu0
    %v1501 = vpop.f32.mrb[0].mxu0
    %1502 = vdwg.mxu0
    %1503 = vmatprep.subr.bf16.mxu0 %v1022
    %1504 = vmatpush1.bf16.msra.mxu0 %v1021
    %1505 = vmatprep.subr.bf16.mxu0 %v1026
    %1506 = vmatpush1.bf16.msra.mxu0 %v1025
    %1507 = vmatprep.subr.bf16.mxu0 %v1030
    %1508 = vmatpush1.bf16.msra.mxu0 %v1029
    %1509 = vmatprep.subr.bf16.mxu0 %v1034
    %1510 = vmatpush1.bf16.msra.mxu0 %v1033
    %1511 = vmatprep.subr.bf16.mxu0 %v1038
    %1512 = vmatpush1.bf16.msra.mxu0 %v1037
    %1513 = vmatprep.subr.bf16.mxu0 %v1042
    %1514 = vmatpush1.bf16.msra.mxu0 %v1041
    %1515 = vmatprep.subr.bf16.mxu0 %v1046
    %1516 = vmatpush1.bf16.msra.mxu0 %v1045
    %1517 = vmatprep.subr.bf16.mxu0 %v1050
    %1518 = vmatpush1.bf16.msra.mxu0 %v1049
    %1519 = vmatprep.subr.bf16.mxu0 %v1054
    %1520 = vmatpush1.bf16.msra.mxu0 %v1053
    %1521 = vmatprep.subr.bf16.mxu0 %v1058
    %1522 = vmatpush1.bf16.msra.mxu0 %v1057
    %1523 = vmatprep.subr.bf16.mxu0 %v1062
    %1524 = vmatpush1.bf16.msra.mxu0 %v1061
    %1525 = vmatprep.subr.bf16.mxu0 %v1066
    %1526 = vmatpush1.bf16.msra.mxu0 %v1065
    %1527 = vmatprep.subr.bf16.mxu0 %v1070
    %1528 = vmatpush1.bf16.msra.mxu0 %v1069
    %1529 = vmatprep.subr.bf16.mxu0 %v1074
    %1530 = vmatpush1.bf16.msra.mxu0 %v1073
    %1531 = vmatprep.subr.bf16.mxu0 %v1078
    %1532 = vmatpush1.bf16.msra.mxu0 %v1077
    %1533 = vmatprep.subr.bf16.mxu0 %v1082
    %1534 = vmatpush1.bf16.msra.mxu0 %v1081
    %1535 = vmatprep.mubr.bf16.mxu0 %v162
    %1536 = vmatmul.mubr.bf16.gmra.mrb[0].mxu0 %v161
    %v1537 = vpop.f32.mrb[0].mxu0
    %v1538 = vadd.f32 %v1497, %v1537
    %v1539 = vpop.f32.mrb[0].mxu0
    %v1540 = vadd.f32 %v1499, %v1539
    %v1541 = vpop.f32.mrb[0].mxu0
    %v1542 = vpop.f32.mrb[0].mxu0
    %1543 = vdwg.mxu0
    %1544 = vmatprep.subr.bf16.mxu0 %v1086
    %1545 = vmatpush1.bf16.msra.mxu0 %v1085
    %1546 = vmatprep.subr.bf16.mxu0 %v1090
    %1547 = vmatpush1.bf16.msra.mxu0 %v1089
    %1548 = vmatprep.subr.bf16.mxu0 %v1094
    %1549 = vmatpush1.bf16.msra.mxu0 %v1093
    %1550 = vmatprep.subr.bf16.mxu0 %v1098
    %1551 = vmatpush1.bf16.msra.mxu0 %v1097
    %1552 = vmatprep.subr.bf16.mxu0 %v1102
    %1553 = vmatpush1.bf16.msra.mxu0 %v1101
    %1554 = vmatprep.subr.bf16.mxu0 %v1106
    %1555 = vmatpush1.bf16.msra.mxu0 %v1105
    %1556 = vmatprep.subr.bf16.mxu0 %v1110
    %1557 = vmatpush1.bf16.msra.mxu0 %v1109
    %1558 = vmatprep.subr.bf16.mxu0 %v1114
    %1559 = vmatpush1.bf16.msra.mxu0 %v1113
    %1560 = vmatprep.subr.bf16.mxu0 %v1118
    %1561 = vmatpush1.bf16.msra.mxu0 %v1117
    %1562 = vmatprep.subr.bf16.mxu0 %v1122
    %1563 = vmatpush1.bf16.msra.mxu0 %v1121
    %1564 = vmatprep.subr.bf16.mxu0 %v1126
    %1565 = vmatpush1.bf16.msra.mxu0 %v1125
    %1566 = vmatprep.subr.bf16.mxu0 %v1130
    %1567 = vmatpush1.bf16.msra.mxu0 %v1129
    %1568 = vmatprep.subr.bf16.mxu0 %v1134
    %1569 = vmatpush1.bf16.msra.mxu0 %v1133
    %1570 = vmatprep.subr.bf16.mxu0 %v1138
    %1571 = vmatpush1.bf16.msra.mxu0 %v1137
    %1572 = vmatprep.subr.bf16.mxu0 %v1142
    %1573 = vmatpush1.bf16.msra.mxu0 %v1141
    %1574 = vmatprep.subr.bf16.mxu0 %v1146
    %1575 = vmatpush1.bf16.msra.mxu0 %v1145
    %1576 = vmatprep.mubr.bf16.mxu0 %v164
    %1577 = vmatmul.mubr.bf16.gmra.mrb[0].mxu0 %v163
    %v1578 = vpop.f32.mrb[0].mxu0
    %v1579 = vadd.f32 %v1538, %v1578
    %v1580 = vpop.f32.mrb[0].mxu0
    %v1581 = vadd.f32 %v1540, %v1580
    %v1582 = vpop.f32.mrb[0].mxu0
    %v1583 = vpop.f32.mrb[0].mxu0
    %1584 = vdwg.mxu0
    %v1585 = vmul.f32 %v1456, 0.2
    %v1586 = vmul.f32 %v1458, 0.2
    %v1587 = vmul.f32 %v1579, 0.2
    %v1588 = vmul.f32 %v1581, 0.2
    %v1589 = vmax.f32 %v1456, %v1585
    %v1590 = vmax.f32 %v1458, %v1586
    %v1591 = vmax.f32 %v1579, %v1587
    %v1592 = vmax.f32 %v1581, %v1588
    %v1593 = vpack.c.bf16 %v1589, %v1589
    %v1594 = vpack.c.bf16 %v1590, %v1590
    %v1595 = vpack.c.bf16 %v1591, %v1591
    %v1596 = vpack.c.bf16 %v1592, %v1592
    %v1597 = vld [vmem:[#allocation7] sm:$0xff]
    %v1598 = vld [vmem:[#allocation7 + $0x8] sm:$0xff]
    %v1599 = vld [vmem:[#allocation7 + $0x10] sm:$0xff]
    %v1600 = vld [vmem:[#allocation7 + $0x18] sm:$0xff]
    %v1601 = vld [vmem:[#allocation7 + $0x20] sm:$0xff]
    %v1602 = vld [vmem:[#allocation7 + $0x28] sm:$0xff]
    %v1603 = vld [vmem:[#allocation7 + $0x30] sm:$0xff]
    %v1604 = vld [vmem:[#allocation7 + $0x38] sm:$0xff]
    %v1605 = vld [vmem:[#allocation7 + $0x40] sm:$0xff]
    %v1606 = vld [vmem:[#allocation7 + $0x48] sm:$0xff]
    %v1607 = vld [vmem:[#allocation7 + $0x50] sm:$0xff]
    %v1608 = vld [vmem:[#allocation7 + $0x58] sm:$0xff]
    %v1609 = vld [vmem:[#allocation7 + $0x60] sm:$0xff]
    %v1610 = vld [vmem:[#allocation7 + $0x68] sm:$0xff]
    %v1611 = vld [vmem:[#allocation7 + $0x70] sm:$0xff]
    %v1612 = vld [vmem:[#allocation7 + $0x78] sm:$0xff]
    %v1613 = vld [vmem:[#allocation7 + $0x80] sm:$0xff]
    %v1614 = vld [vmem:[#allocation7 + $0x88] sm:$0xff]
    %v1615 = vld [vmem:[#allocation7 + $0x90] sm:$0xff]
    %v1616 = vld [vmem:[#allocation7 + $0x98] sm:$0xff]
    %v1617 = vld [vmem:[#allocation7 + $0xa0] sm:$0xff]
    %v1618 = vld [vmem:[#allocation7 + $0xa8] sm:$0xff]
    %v1619 = vld [vmem:[#allocation7 + $0xb0] sm:$0xff]
    %v1620 = vld [vmem:[#allocation7 + $0xb8] sm:$0xff]
    %v1621 = vld [vmem:[#allocation7 + $0xc0] sm:$0xff]
    %v1622 = vld [vmem:[#allocation7 + $0xc8] sm:$0xff]
    %v1623 = vld [vmem:[#allocation7 + $0xd0] sm:$0xff]
    %v1624 = vld [vmem:[#allocation7 + $0xd8] sm:$0xff]
    %v1625 = vld [vmem:[#allocation7 + $0xe0] sm:$0xff]
    %v1626 = vld [vmem:[#allocation7 + $0xe8] sm:$0xff]
    %v1627 = vld [vmem:[#allocation7 + $0xf0] sm:$0xff]
    %v1628 = vld [vmem:[#allocation7 + $0xf8] sm:$0xff]
    %v1629 = vld [vmem:[#allocation7 + $0x100] sm:$0xff]
    %v1630 = vld [vmem:[#allocation7 + $0x108] sm:$0xff]
    %v1631 = vld [vmem:[#allocation7 + $0x110] sm:$0xff]
    %v1632 = vld [vmem:[#allocation7 + $0x118] sm:$0xff]
    %v1633 = vld [vmem:[#allocation7 + $0x120] sm:$0xff]
    %v1634 = vld [vmem:[#allocation7 + $0x128] sm:$0xff]
    %v1635 = vld [vmem:[#allocation7 + $0x130] sm:$0xff]
    %v1636 = vld [vmem:[#allocation7 + $0x138] sm:$0xff]
    %v1637 = vld [vmem:[#allocation7 + $0x140] sm:$0xff]
    %v1638 = vld [vmem:[#allocation7 + $0x148] sm:$0xff]
    %v1639 = vld [vmem:[#allocation7 + $0x150] sm:$0xff]
    %v1640 = vld [vmem:[#allocation7 + $0x158] sm:$0xff]
    %v1641 = vld [vmem:[#allocation7 + $0x160] sm:$0xff]
    %v1642 = vld [vmem:[#allocation7 + $0x168] sm:$0xff]
    %v1643 = vld [vmem:[#allocation7 + $0x170] sm:$0xff]
    %v1644 = vld [vmem:[#allocation7 + $0x178] sm:$0xff]
    %v1645 = vld [vmem:[#allocation7 + $0x180] sm:$0xff]
    %v1646 = vld [vmem:[#allocation7 + $0x188] sm:$0xff]
    %v1647 = vld [vmem:[#allocation7 + $0x190] sm:$0xff]
    %v1648 = vld [vmem:[#allocation7 + $0x198] sm:$0xff]
    %v1649 = vld [vmem:[#allocation7 + $0x1a0] sm:$0xff]
    %v1650 = vld [vmem:[#allocation7 + $0x1a8] sm:$0xff]
    %v1651 = vld [vmem:[#allocation7 + $0x1b0] sm:$0xff]
    %v1652 = vld [vmem:[#allocation7 + $0x1b8] sm:$0xff]
    %v1653 = vld [vmem:[#allocation7 + $0x1c0] sm:$0xff]
    %v1654 = vld [vmem:[#allocation7 + $0x1c8] sm:$0xff]
    %v1655 = vld [vmem:[#allocation7 + $0x1d0] sm:$0xff]
    %v1656 = vld [vmem:[#allocation7 + $0x1d8] sm:$0xff]
    %v1657 = vld [vmem:[#allocation7 + $0x1e0] sm:$0xff]
    %v1658 = vld [vmem:[#allocation7 + $0x1e8] sm:$0xff]
    %v1659 = vld [vmem:[#allocation7 + $0x1f0] sm:$0xff]
    %v1660 = vld [vmem:[#allocation7 + $0x1f8] sm:$0xff]
    %v1661 = vld [vmem:[#allocation8] sm:$0x3]
    %v1663 = vlaneseq
    %v1664 = vshrl.u32 %v1663, 7
    %v1665 = vsub.s32 0, %v1664
    %v1666 = vrot.slane %v1661, %v1665
    %v1667 = vlaneseq
    %v1668 = vshrl.u32 %v1667, 7
    %v1669 = vsub.s32 1, %v1668
    %v1670 = vrot.slane %v1661, %v1669
    %v1737 = vunpack.c.l.b16 %v1597
    %v1738 = vunpack.c.h.b16 %v1597
    %v1739 = vunpack.c.l.b16 %v1598
    %v1740 = vunpack.c.h.b16 %v1598
    %v1741 = vunpack.c.l.b16 %v1599
    %v1742 = vunpack.c.h.b16 %v1599
    %v1743 = vunpack.c.l.b16 %v1600
    %v1744 = vunpack.c.h.b16 %v1600
    %v1745 = vunpack.c.l.b16 %v1601
    %v1746 = vunpack.c.h.b16 %v1601
    %v1747 = vunpack.c.l.b16 %v1602
    %v1748 = vunpack.c.h.b16 %v1602
    %v1749 = vunpack.c.l.b16 %v1603
    %v1750 = vunpack.c.h.b16 %v1603
    %v1751 = vunpack.c.l.b16 %v1604
    %v1752 = vunpack.c.h.b16 %v1604
    %v1753 = vunpack.c.l.b16 %v1605
    %v1754 = vunpack.c.h.b16 %v1605
    %v1755 = vunpack.c.l.b16 %v1606
    %v1756 = vunpack.c.h.b16 %v1606
    %v1757 = vunpack.c.l.b16 %v1607
    %v1758 = vunpack.c.h.b16 %v1607
    %v1759 = vunpack.c.l.b16 %v1608
    %v1760 = vunpack.c.h.b16 %v1608
    %v1761 = vunpack.c.l.b16 %v1609
    %v1762 = vunpack.c.h.b16 %v1609
    %v1763 = vunpack.c.l.b16 %v1610
    %v1764 = vunpack.c.h.b16 %v1610
    %v1765 = vunpack.c.l.b16 %v1611
    %v1766 = vunpack.c.h.b16 %v1611
    %v1767 = vunpack.c.l.b16 %v1612
    %v1768 = vunpack.c.h.b16 %v1612
    %v1769 = vunpack.c.l.b16 %v1613
    %v1770 = vunpack.c.h.b16 %v1613
    %v1771 = vunpack.c.l.b16 %v1614
    %v1772 = vunpack.c.h.b16 %v1614
    %v1773 = vunpack.c.l.b16 %v1615
    %v1774 = vunpack.c.h.b16 %v1615
    %v1775 = vunpack.c.l.b16 %v1616
    %v1776 = vunpack.c.h.b16 %v1616
    %v1777 = vunpack.c.l.b16 %v1617
    %v1778 = vunpack.c.h.b16 %v1617
    %v1779 = vunpack.c.l.b16 %v1618
    %v1780 = vunpack.c.h.b16 %v1618
    %v1781 = vunpack.c.l.b16 %v1619
    %v1782 = vunpack.c.h.b16 %v1619
    %v1783 = vunpack.c.l.b16 %v1620
    %v1784 = vunpack.c.h.b16 %v1620
    %v1785 = vunpack.c.l.b16 %v1621
    %v1786 = vunpack.c.h.b16 %v1621
    %v1787 = vunpack.c.l.b16 %v1622
    %v1788 = vunpack.c.h.b16 %v1622
    %v1789 = vunpack.c.l.b16 %v1623
    %v1790 = vunpack.c.h.b16 %v1623
    %v1791 = vunpack.c.l.b16 %v1624
    %v1792 = vunpack.c.h.b16 %v1624
    %v1793 = vunpack.c.l.b16 %v1625
    %v1794 = vunpack.c.h.b16 %v1625
    %v1795 = vunpack.c.l.b16 %v1626
    %v1796 = vunpack.c.h.b16 %v1626
    %v1797 = vunpack.c.l.b16 %v1627
    %v1798 = vunpack.c.h.b16 %v1627
    %v1799 = vunpack.c.l.b16 %v1628
    %v1800 = vunpack.c.h.b16 %v1628
    %v1801 = vunpack.c.l.b16 %v1629
    %v1802 = vunpack.c.h.b16 %v1629
    %v1803 = vunpack.c.l.b16 %v1630
    %v1804 = vunpack.c.h.b16 %v1630
    %v1805 = vunpack.c.l.b16 %v1631
    %v1806 = vunpack.c.h.b16 %v1631
    %v1807 = vunpack.c.l.b16 %v1632
    %v1808 = vunpack.c.h.b16 %v1632
    %v1809 = vunpack.c.l.b16 %v1633
    %v1810 = vunpack.c.h.b16 %v1633
    %v1811 = vunpack.c.l.b16 %v1634
    %v1812 = vunpack.c.h.b16 %v1634
    %v1813 = vunpack.c.l.b16 %v1635
    %v1814 = vunpack.c.h.b16 %v1635
    %v1815 = vunpack.c.l.b16 %v1636
    %v1816 = vunpack.c.h.b16 %v1636
    %v1817 = vunpack.c.l.b16 %v1637
    %v1818 = vunpack.c.h.b16 %v1637
    %v1819 = vunpack.c.l.b16 %v1638
    %v1820 = vunpack.c.h.b16 %v1638
    %v1821 = vunpack.c.l.b16 %v1639
    %v1822 = vunpack.c.h.b16 %v1639
    %v1823 = vunpack.c.l.b16 %v1640
    %v1824 = vunpack.c.h.b16 %v1640
    %v1825 = vunpack.c.l.b16 %v1641
    %v1826 = vunpack.c.h.b16 %v1641
    %v1827 = vunpack.c.l.b16 %v1642
    %v1828 = vunpack.c.h.b16 %v1642
    %v1829 = vunpack.c.l.b16 %v1643
    %v1830 = vunpack.c.h.b16 %v1643
    %v1831 = vunpack.c.l.b16 %v1644
    %v1832 = vunpack.c.h.b16 %v1644
    %v1833 = vunpack.c.l.b16 %v1645
    %v1834 = vunpack.c.h.b16 %v1645
    %v1835 = vunpack.c.l.b16 %v1646
    %v1836 = vunpack.c.h.b16 %v1646
    %v1837 = vunpack.c.l.b16 %v1647
    %v1838 = vunpack.c.h.b16 %v1647
    %v1839 = vunpack.c.l.b16 %v1648
    %v1840 = vunpack.c.h.b16 %v1648
    %v1841 = vunpack.c.l.b16 %v1649
    %v1842 = vunpack.c.h.b16 %v1649
    %v1843 = vunpack.c.l.b16 %v1650
    %v1844 = vunpack.c.h.b16 %v1650
    %v1845 = vunpack.c.l.b16 %v1651
    %v1846 = vunpack.c.h.b16 %v1651
    %v1847 = vunpack.c.l.b16 %v1652
    %v1848 = vunpack.c.h.b16 %v1652
    %v1849 = vunpack.c.l.b16 %v1653
    %v1850 = vunpack.c.h.b16 %v1653
    %v1851 = vunpack.c.l.b16 %v1654
    %v1852 = vunpack.c.h.b16 %v1654
    %v1853 = vunpack.c.l.b16 %v1655
    %v1854 = vunpack.c.h.b16 %v1655
    %v1855 = vunpack.c.l.b16 %v1656
    %v1856 = vunpack.c.h.b16 %v1656
    %v1857 = vunpack.c.l.b16 %v1657
    %v1858 = vunpack.c.h.b16 %v1657
    %v1859 = vunpack.c.l.b16 %v1658
    %v1860 = vunpack.c.h.b16 %v1658
    %v1861 = vunpack.c.l.b16 %v1659
    %v1862 = vunpack.c.h.b16 %v1659
    %v1863 = vunpack.c.l.b16 %v1660
    %v1864 = vunpack.c.h.b16 %v1660
    %v1865 = vpack.c.b16 %v1739, %v1737
    %v1866 = vpack.c.b16 %v1740, %v1738
    %v1867 = vpack.c.b16 %v1743, %v1741
    %v1868 = vpack.c.b16 %v1744, %v1742
    %v1869 = vpack.c.b16 %v1747, %v1745
    %v1870 = vpack.c.b16 %v1748, %v1746
    %v1871 = vpack.c.b16 %v1751, %v1749
    %v1872 = vpack.c.b16 %v1752, %v1750
    %v1873 = vpack.c.b16 %v1755, %v1753
    %v1874 = vpack.c.b16 %v1756, %v1754
    %v1875 = vpack.c.b16 %v1759, %v1757
    %v1876 = vpack.c.b16 %v1760, %v1758
    %v1877 = vpack.c.b16 %v1763, %v1761
    %v1878 = vpack.c.b16 %v1764, %v1762
    %v1879 = vpack.c.b16 %v1767, %v1765
    %v1880 = vpack.c.b16 %v1768, %v1766
    %v1881 = vpack.c.b16 %v1771, %v1769
    %v1882 = vpack.c.b16 %v1772, %v1770
    %v1883 = vpack.c.b16 %v1775, %v1773
    %v1884 = vpack.c.b16 %v1776, %v1774
    %v1885 = vpack.c.b16 %v1779, %v1777
    %v1886 = vpack.c.b16 %v1780, %v1778
    %v1887 = vpack.c.b16 %v1783, %v1781
    %v1888 = vpack.c.b16 %v1784, %v1782
    %v1889 = vpack.c.b16 %v1787, %v1785
    %v1890 = vpack.c.b16 %v1788, %v1786
    %v1891 = vpack.c.b16 %v1791, %v1789
    %v1892 = vpack.c.b16 %v1792, %v1790
    %v1893 = vpack.c.b16 %v1795, %v1793
    %v1894 = vpack.c.b16 %v1796, %v1794
    %v1895 = vpack.c.b16 %v1799, %v1797
    %v1896 = vpack.c.b16 %v1800, %v1798
    %v1897 = vpack.c.b16 %v1803, %v1801
    %v1898 = vpack.c.b16 %v1804, %v1802
    %v1899 = vpack.c.b16 %v1807, %v1805
    %v1900 = vpack.c.b16 %v1808, %v1806
    %v1901 = vpack.c.b16 %v1811, %v1809
    %v1902 = vpack.c.b16 %v1812, %v1810
    %v1903 = vpack.c.b16 %v1815, %v1813
    %v1904 = vpack.c.b16 %v1816, %v1814
    %v1905 = vpack.c.b16 %v1819, %v1817
    %v1906 = vpack.c.b16 %v1820, %v1818
    %v1907 = vpack.c.b16 %v1823, %v1821
    %v1908 = vpack.c.b16 %v1824, %v1822
    %v1909 = vpack.c.b16 %v1827, %v1825
    %v1910 = vpack.c.b16 %v1828, %v1826
    %v1911 = vpack.c.b16 %v1831, %v1829
    %v1912 = vpack.c.b16 %v1832, %v1830
    %v1913 = vpack.c.b16 %v1835, %v1833
    %v1914 = vpack.c.b16 %v1836, %v1834
    %v1915 = vpack.c.b16 %v1839, %v1837
    %v1916 = vpack.c.b16 %v1840, %v1838
    %v1917 = vpack.c.b16 %v1843, %v1841
    %v1918 = vpack.c.b16 %v1844, %v1842
    %v1919 = vpack.c.b16 %v1847, %v1845
    %v1920 = vpack.c.b16 %v1848, %v1846
    %v1921 = vpack.c.b16 %v1851, %v1849
    %v1922 = vpack.c.b16 %v1852, %v1850
    %v1923 = vpack.c.b16 %v1855, %v1853
    %v1924 = vpack.c.b16 %v1856, %v1854
    %v1925 = vpack.c.b16 %v1859, %v1857
    %v1926 = vpack.c.b16 %v1860, %v1858
    %v1927 = vpack.c.b16 %v1863, %v1861
    %v1928 = vpack.c.b16 %v1864, %v1862
    %1993 = vmatprep.subr.bf16.mxu0 %v1866
    %1994 = vmatpush1.bf16.msra.mxu0 %v1865
    %1995 = vmatprep.subr.bf16.mxu0 %v1868
    %1996 = vmatpush1.bf16.msra.mxu0 %v1867
    %1997 = vmatprep.subr.bf16.mxu0 %v1870
    %1998 = vmatpush1.bf16.msra.mxu0 %v1869
    %1999 = vmatprep.subr.bf16.mxu0 %v1872
    %2000 = vmatpush1.bf16.msra.mxu0 %v1871
    %2001 = vmatprep.subr.bf16.mxu0 %v1874
    %2002 = vmatpush1.bf16.msra.mxu0 %v1873
    %2003 = vmatprep.subr.bf16.mxu0 %v1876
    %2004 = vmatpush1.bf16.msra.mxu0 %v1875
    %2005 = vmatprep.subr.bf16.mxu0 %v1878
    %2006 = vmatpush1.bf16.msra.mxu0 %v1877
    %2007 = vmatprep.subr.bf16.mxu0 %v1880
    %2008 = vmatpush1.bf16.msra.mxu0 %v1879
    %2009 = vmatprep.subr.bf16.mxu0 %v1882
    %2010 = vmatpush1.bf16.msra.mxu0 %v1881
    %2011 = vmatprep.subr.bf16.mxu0 %v1884
    %2012 = vmatpush1.bf16.msra.mxu0 %v1883
    %2013 = vmatprep.subr.bf16.mxu0 %v1886
    %2014 = vmatpush1.bf16.msra.mxu0 %v1885
    %2015 = vmatprep.subr.bf16.mxu0 %v1888
    %2016 = vmatpush1.bf16.msra.mxu0 %v1887
    %2017 = vmatprep.subr.bf16.mxu0 %v1890
    %2018 = vmatpush1.bf16.msra.mxu0 %v1889
    %2019 = vmatprep.subr.bf16.mxu0 %v1892
    %2020 = vmatpush1.bf16.msra.mxu0 %v1891
    %2021 = vmatprep.subr.bf16.mxu0 %v1894
    %2022 = vmatpush1.bf16.msra.mxu0 %v1893
    %2023 = vmatprep.subr.bf16.mxu0 %v1896
    %2024 = vmatpush1.bf16.msra.mxu0 %v1895
    %2025 = vmatprep.mubr.bf16.mxu0 %v1594
    %2026 = vmatmul.mubr.bf16.gmra.mrb[0].mxu0 %v1593
    %v2027 = vpop.f32.mrb[0].mxu0
    %v2028 = vadd.f32 %v1666, %v2027
    %v2029 = vpop.f32.mrb[0].mxu0
    %v2030 = vadd.f32 %v1670, %v2029
    %v2031 = vpop.f32.mrb[0].mxu0
    %v2032 = vpop.f32.mrb[0].mxu0
    %2033 = vdwg.mxu0
    %2034 = vmatprep.subr.bf16.mxu0 %v1898
    %2035 = vmatpush1.bf16.msra.mxu0 %v1897
    %2036 = vmatprep.subr.bf16.mxu0 %v1900
    %2037 = vmatpush1.bf16.msra.mxu0 %v1899
    %2038 = vmatprep.subr.bf16.mxu0 %v1902
    %2039 = vmatpush1.bf16.msra.mxu0 %v1901
    %2040 = vmatprep.subr.bf16.mxu0 %v1904
    %2041 = vmatpush1.bf16.msra.mxu0 %v1903
    %2042 = vmatprep.subr.bf16.mxu0 %v1906
    %2043 = vmatpush1.bf16.msra.mxu0 %v1905
    %2044 = vmatprep.subr.bf16.mxu0 %v1908
    %2045 = vmatpush1.bf16.msra.mxu0 %v1907
    %2046 = vmatprep.subr.bf16.mxu0 %v1910
    %2047 = vmatpush1.bf16.msra.mxu0 %v1909
    %2048 = vmatprep.subr.bf16.mxu0 %v1912
    %2049 = vmatpush1.bf16.msra.mxu0 %v1911
    %2050 = vmatprep.subr.bf16.mxu0 %v1914
    %2051 = vmatpush1.bf16.msra.mxu0 %v1913
    %2052 = vmatprep.subr.bf16.mxu0 %v1916
    %2053 = vmatpush1.bf16.msra.mxu0 %v1915
    %2054 = vmatprep.subr.bf16.mxu0 %v1918
    %2055 = vmatpush1.bf16.msra.mxu0 %v1917
    %2056 = vmatprep.subr.bf16.mxu0 %v1920
    %2057 = vmatpush1.bf16.msra.mxu0 %v1919
    %2058 = vmatprep.subr.bf16.mxu0 %v1922
    %2059 = vmatpush1.bf16.msra.mxu0 %v1921
    %2060 = vmatprep.subr.bf16.mxu0 %v1924
    %2061 = vmatpush1.bf16.msra.mxu0 %v1923
    %2062 = vmatprep.subr.bf16.mxu0 %v1926
    %2063 = vmatpush1.bf16.msra.mxu0 %v1925
    %2064 = vmatprep.subr.bf16.mxu0 %v1928
    %2065 = vmatpush1.bf16.msra.mxu0 %v1927
    %2066 = vmatprep.mubr.bf16.mxu0 %v1596
    %2067 = vmatmul.mubr.bf16.gmra.mrb[0].mxu0 %v1595
    %v2068 = vpop.f32.mrb[0].mxu0
    %v2069 = vadd.f32 %v2028, %v2068
    %v2070 = vpop.f32.mrb[0].mxu0
    %v2071 = vadd.f32 %v2030, %v2070
    %v2072 = vpop.f32.mrb[0].mxu0
    %v2073 = vpop.f32.mrb[0].mxu0
    %2074 = vdwg.mxu0
    %v2075 = vmul.f32 %v2069, 0.2
    %v2076 = vmul.f32 %v2071, 0.2
    %v2077 = vmax.f32 %v2069, %v2075
    %v2078 = vmax.f32 %v2071, %v2076
    %v2079 = vpack.c.bf16 %v2077, %v2077
    %v2080 = vpack.c.bf16 %v2078, %v2078
    %v2081 = vld [vmem:[#allocation10] sm:$0xf]
    %v2082 = vld [vmem:[#allocation10 + $0x4] sm:$0xf]
    %v2083 = vld [vmem:[#allocation10 + $0x8] sm:$0xf]
    %v2084 = vld [vmem:[#allocation10 + $0xc] sm:$0xf]
    %v2085 = vld [vmem:[#allocation10 + $0x10] sm:$0xf]
    %v2086 = vld [vmem:[#allocation10 + $0x14] sm:$0xf]
    %v2087 = vld [vmem:[#allocation10 + $0x18] sm:$0xf]
    %v2088 = vld [vmem:[#allocation10 + $0x1c] sm:$0xf]
    %v2089 = vld [vmem:[#allocation10 + $0x20] sm:$0xf]
    %v2090 = vld [vmem:[#allocation10 + $0x24] sm:$0xf]
    %v2091 = vld [vmem:[#allocation10 + $0x28] sm:$0xf]
    %v2092 = vld [vmem:[#allocation10 + $0x2c] sm:$0xf]
    %v2093 = vld [vmem:[#allocation10 + $0x30] sm:$0xf]
    %v2094 = vld [vmem:[#allocation10 + $0x34] sm:$0xf]
    %v2095 = vld [vmem:[#allocation10 + $0x38] sm:$0xf]
    %v2096 = vld [vmem:[#allocation10 + $0x3c] sm:$0xf]
    %v2097 = vld [vmem:[#allocation10 + $0x40] sm:$0xf]
    %v2098 = vld [vmem:[#allocation10 + $0x44] sm:$0xf]
    %v2099 = vld [vmem:[#allocation10 + $0x48] sm:$0xf]
    %v2100 = vld [vmem:[#allocation10 + $0x4c] sm:$0xf]
    %v2101 = vld [vmem:[#allocation10 + $0x50] sm:$0xf]
    %v2102 = vld [vmem:[#allocation10 + $0x54] sm:$0xf]
    %v2103 = vld [vmem:[#allocation10 + $0x58] sm:$0xf]
    %v2104 = vld [vmem:[#allocation10 + $0x5c] sm:$0xf]
    %v2105 = vld [vmem:[#allocation10 + $0x60] sm:$0xf]
    %v2106 = vld [vmem:[#allocation10 + $0x64] sm:$0xf]
    %v2107 = vld [vmem:[#allocation10 + $0x68] sm:$0xf]
    %v2108 = vld [vmem:[#allocation10 + $0x6c] sm:$0xf]
    %v2109 = vld [vmem:[#allocation10 + $0x70] sm:$0xf]
    %v2110 = vld [vmem:[#allocation10 + $0x74] sm:$0xf]
    %v2111 = vld [vmem:[#allocation10 + $0x78] sm:$0xf]
    %v2112 = vld [vmem:[#allocation10 + $0x7c] sm:$0xf]
    %v2113 = vld [vmem:[%s7] sm:$0x1]
    %v2115 = vlaneseq
    %v2116 = vshrl.u32 %v2115, 7
    %v2117 = vsub.s32 0, %v2116
    %v2118 = vrot.slane %v2113, %v2117
    %v2152 = vunpack.c.l.b16 %v2081
    %v2153 = vunpack.c.l.b16 %v2082
    %v2154 = vunpack.c.l.b16 %v2083
    %v2155 = vunpack.c.l.b16 %v2084
    %v2156 = vunpack.c.l.b16 %v2085
    %v2157 = vunpack.c.l.b16 %v2086
    %v2158 = vunpack.c.l.b16 %v2087
    %v2159 = vunpack.c.l.b16 %v2088
    %v2160 = vunpack.c.l.b16 %v2089
    %v2161 = vunpack.c.l.b16 %v2090
    %v2162 = vunpack.c.l.b16 %v2091
    %v2163 = vunpack.c.l.b16 %v2092
    %v2164 = vunpack.c.l.b16 %v2093
    %v2165 = vunpack.c.l.b16 %v2094
    %v2166 = vunpack.c.l.b16 %v2095
    %v2167 = vunpack.c.l.b16 %v2096
    %v2168 = vunpack.c.l.b16 %v2097
    %v2169 = vunpack.c.l.b16 %v2098
    %v2170 = vunpack.c.l.b16 %v2099
    %v2171 = vunpack.c.l.b16 %v2100
    %v2172 = vunpack.c.l.b16 %v2101
    %v2173 = vunpack.c.l.b16 %v2102
    %v2174 = vunpack.c.l.b16 %v2103
    %v2175 = vunpack.c.l.b16 %v2104
    %v2176 = vunpack.c.l.b16 %v2105
    %v2177 = vunpack.c.l.b16 %v2106
    %v2178 = vunpack.c.l.b16 %v2107
    %v2179 = vunpack.c.l.b16 %v2108
    %v2180 = vunpack.c.l.b16 %v2109
    %v2181 = vunpack.c.l.b16 %v2110
    %v2182 = vunpack.c.l.b16 %v2111
    %v2183 = vunpack.c.l.b16 %v2112
    %v2184 = vpack.c.b16 %v2153, %v2152
    %v2185 = vpack.c.b16 %v2155, %v2154
    %v2186 = vpack.c.b16 %v2157, %v2156
    %v2187 = vpack.c.b16 %v2159, %v2158
    %v2188 = vpack.c.b16 %v2161, %v2160
    %v2189 = vpack.c.b16 %v2163, %v2162
    %v2190 = vpack.c.b16 %v2165, %v2164
    %v2191 = vpack.c.b16 %v2167, %v2166
    %v2192 = vpack.c.b16 %v2169, %v2168
    %v2193 = vpack.c.b16 %v2171, %v2170
    %v2194 = vpack.c.b16 %v2173, %v2172
    %v2195 = vpack.c.b16 %v2175, %v2174
    %v2196 = vpack.c.b16 %v2177, %v2176
    %v2197 = vpack.c.b16 %v2179, %v2178
    %v2198 = vpack.c.b16 %v2181, %v2180
    %v2199 = vpack.c.b16 %v2183, %v2182
    %2216 = vmatprep.subr.bf16.mxu0 0
    %2217 = vmatpush1.bf16.msra.mxu0 %v2184
    %2218 = vmatprep.subr.bf16.mxu0 0
    %2219 = vmatpush1.bf16.msra.mxu0 %v2185
    %2220 = vmatprep.subr.bf16.mxu0 0
    %2221 = vmatpush1.bf16.msra.mxu0 %v2186
    %2222 = vmatprep.subr.bf16.mxu0 0
    %2223 = vmatpush1.bf16.msra.mxu0 %v2187
    %2224 = vmatprep.subr.bf16.mxu0 0
    %2225 = vmatpush1.bf16.msra.mxu0 %v2188
    %2226 = vmatprep.subr.bf16.mxu0 0
    %2227 = vmatpush1.bf16.msra.mxu0 %v2189
    %2228 = vmatprep.subr.bf16.mxu0 0
    %2229 = vmatpush1.bf16.msra.mxu0 %v2190
    %2230 = vmatprep.subr.bf16.mxu0 0
    %2231 = vmatpush1.bf16.msra.mxu0 %v2191
    %2232 = vmatprep.subr.bf16.mxu0 0
    %2233 = vmatpush1.bf16.msra.mxu0 %v2192
    %2234 = vmatprep.subr.bf16.mxu0 0
    %2235 = vmatpush1.bf16.msra.mxu0 %v2193
    %2236 = vmatprep.subr.bf16.mxu0 0
    %2237 = vmatpush1.bf16.msra.mxu0 %v2194
    %2238 = vmatprep.subr.bf16.mxu0 0
    %2239 = vmatpush1.bf16.msra.mxu0 %v2195
    %2240 = vmatprep.subr.bf16.mxu0 0
    %2241 = vmatpush1.bf16.msra.mxu0 %v2196
    %2242 = vmatprep.subr.bf16.mxu0 0
    %2243 = vmatpush1.bf16.msra.mxu0 %v2197
    %2244 = vmatprep.subr.bf16.mxu0 0
    %2245 = vmatpush1.bf16.msra.mxu0 %v2198
    %2246 = vmatprep.subr.bf16.mxu0 0
    %2247 = vmatpush1.bf16.msra.mxu0 %v2199
    %2248 = vmatprep.mubr.bf16.mxu0 %v2080
    %2249 = vmatmul.mubr.bf16.gmra.mrb[0].mxu0 %v2079
    %v2250 = vpop.f32.mrb[0].mxu0
    %v2251 = vadd.f32 %v2118, %v2250
    %v2252 = vpop.f32.mrb[0].mxu0
    %v2253 = vpop.f32.mrb[0].mxu0
    %v2254 = vpop.f32.mrb[0].mxu0
    %2255 = vdwg.mxu0
    %v2256 = vmul.f32 %v2251, 0.2
    %v2257 = vmax.f32 %v2251, %v2256
    %v2258 = vpack.c.bf16 %v2257, %v2257
    %v2259 = vld [vmem:[%s1] sm:$0x3]
    %v2260 = vpack.c.bf16 %v2259, %v2259
    %v2261 = vld [vmem:[%s8] sm:$0x7]
    %v2262 = vld [vmem:[%s9] sm:$0x1]
    %v2264 = vlaneseq
    %v2265 = vshrl.u32 %v2264, 7
    %v2266 = vsub.s32 0, %v2265
    %v2267 = vrot.slane %v2262, %v2266
    %vm2269 = vcmask 48128
    %v2271 = vsel %vm2269, %v2260, 0
    %vm2273 = vcmask 1042432
    %v2275 = vsel %vm2273, %v2261, 0
    %2277 = vmatprep.subr.bf16.mxu0 0
    %2278 = vmatpush1.bf16.msra.mxu0 %v2275
    %2279 = vmatprep.subr.bf16.mxu0 0
    %2280 = vmatpush1.bf16.msra.mxu0 0
    %2281 = vmatprep.subr.bf16.mxu0 0
    %2282 = vmatpush1.bf16.msra.mxu0 0
    %2283 = vmatprep.subr.bf16.mxu0 0
    %2284 = vmatpush1.bf16.msra.mxu0 0
    %2285 = vmatprep.subr.bf16.mxu0 0
    %2286 = vmatpush1.bf16.msra.mxu0 0
    %2287 = vmatprep.subr.bf16.mxu0 0
    %2288 = vmatpush1.bf16.msra.mxu0 0
    %2289 = vmatprep.subr.bf16.mxu0 0
    %2290 = vmatpush1.bf16.msra.mxu0 0
    %2291 = vmatprep.subr.bf16.mxu0 0
    %2292 = vmatpush1.bf16.msra.mxu0 0
    %2293 = vmatprep.subr.bf16.mxu0 0
    %2294 = vmatpush1.bf16.msra.mxu0 0
    %2295 = vmatprep.subr.bf16.mxu0 0
    %2296 = vmatpush1.bf16.msra.mxu0 0
    %2297 = vmatprep.subr.bf16.mxu0 0
    %2298 = vmatpush1.bf16.msra.mxu0 0
    %2299 = vmatprep.subr.bf16.mxu0 0
    %2300 = vmatpush1.bf16.msra.mxu0 0
    %2301 = vmatprep.subr.bf16.mxu0 0
    %2302 = vmatpush1.bf16.msra.mxu0 0
    %2303 = vmatprep.subr.bf16.mxu0 0
    %2304 = vmatpush1.bf16.msra.mxu0 0
    %2305 = vmatprep.subr.bf16.mxu0 0
    %2306 = vmatpush1.bf16.msra.mxu0 0
    %2307 = vmatprep.subr.bf16.mxu0 0
    %2308 = vmatpush1.bf16.msra.mxu0 0
    %2309 = vmatprep.mubr.bf16.mxu0 0
    %2310 = vmatmul.mubr.bf16.gmra.mrb[0].mxu0 %v2271
    %v2311 = vpop.f32.mrb[0].mxu0
    %v2312 = vadd.f32 %v2267, %v2311
    %v2313 = vpop.f32.mrb[0].mxu0
    %v2314 = vpop.f32.mrb[0].mxu0
    %v2315 = vpop.f32.mrb[0].mxu0
    %2316 = vdwg.mxu0
    %v2317 = vmax.f32 %v2312, 0.0
    %v2318 = vpack.c.bf16 %v2317, %v2317
    %v2319 = vld [vmem:[#allocation11] sm:$0xf]
    %v2320 = vld [vmem:[#allocation11 + $0x4] sm:$0xf]
    %v2321 = vld [vmem:[#allocation11 + $0x8] sm:$0xf]
    %v2322 = vld [vmem:[#allocation11 + $0xc] sm:$0xf]
    %v2323 = vld [vmem:[#allocation11 + $0x10] sm:$0xf]
    %v2324 = vld [vmem:[#allocation11 + $0x14] sm:$0xf]
    %v2325 = vld [vmem:[#allocation11 + $0x18] sm:$0xf]
    %v2326 = vld [vmem:[#allocation11 + $0x1c] sm:$0xf]
    %v2327 = vld [vmem:[#allocation11 + $0x20] sm:$0xf]
    %v2328 = vld [vmem:[#allocation11 + $0x24] sm:$0xf]
    %v2329 = vld [vmem:[#allocation11 + $0x28] sm:$0xf]
    %v2330 = vld [vmem:[#allocation11 + $0x2c] sm:$0xf]
    %v2331 = vld [vmem:[#allocation11 + $0x30] sm:$0xf]
    %v2332 = vld [vmem:[#allocation11 + $0x34] sm:$0xf]
    %v2333 = vld [vmem:[#allocation11 + $0x38] sm:$0xf]
    %v2334 = vld [vmem:[#allocation11 + $0x3c] sm:$0xf]
    %v2335 = vld [vmem:[%s11] sm:$0xf]
    %v2336 = vld [vmem:[%s11 + $0x4] sm:$0xf]
    %v2339 = vunpack.c.l.b16 %v2335
    %v2340 = vunpack.c.l.b16 %v2336
    %v2341 = vpack.c.b16 %v2340, %v2339
    %vm2343 = vcmask 130048
    %v2345 = vsel %vm2343, %v2318, 0
    %2347 = vmatprep.subr.bf16.mxu0 0
    %2348 = vmatpush1.bf16.msra.mxu0 %v2341
    %2349 = vmatprep.subr.bf16.mxu0 0
    %2350 = vmatpush1.bf16.msra.mxu0 0
    %2351 = vmatprep.subr.bf16.mxu0 0
    %2352 = vmatpush1.bf16.msra.mxu0 0
    %2353 = vmatprep.subr.bf16.mxu0 0
    %2354 = vmatpush1.bf16.msra.mxu0 0
    %2355 = vmatprep.subr.bf16.mxu0 0
    %2356 = vmatpush1.bf16.msra.mxu0 0
    %2357 = vmatprep.subr.bf16.mxu0 0
    %2358 = vmatpush1.bf16.msra.mxu0 0
    %2359 = vmatprep.subr.bf16.mxu0 0
    %2360 = vmatpush1.bf16.msra.mxu0 0
    %2361 = vmatprep.subr.bf16.mxu0 0
    %2362 = vmatpush1.bf16.msra.mxu0 0
    %2363 = vmatprep.subr.bf16.mxu0 0
    %2364 = vmatpush1.bf16.msra.mxu0 0
    %2365 = vmatprep.subr.bf16.mxu0 0
    %2366 = vmatpush1.bf16.msra.mxu0 0
    %2367 = vmatprep.subr.bf16.mxu0 0
    %2368 = vmatpush1.bf16.msra.mxu0 0
    %2369 = vmatprep.subr.bf16.mxu0 0
    %2370 = vmatpush1.bf16.msra.mxu0 0
    %2371 = vmatprep.subr.bf16.mxu0 0
    %2372 = vmatpush1.bf16.msra.mxu0 0
    %2373 = vmatprep.subr.bf16.mxu0 0
    %2374 = vmatpush1.bf16.msra.mxu0 0
    %2375 = vmatprep.subr.bf16.mxu0 0
    %2376 = vmatpush1.bf16.msra.mxu0 0
    %2377 = vmatprep.subr.bf16.mxu0 0
    %2378 = vmatpush1.bf16.msra.mxu0 0
    %2379 = vmatprep.mubr.bf16.mxu0 0
    %2380 = vmatmul.mubr.bf16.gmra.mrb[0].mxu0 %v2345
    %v2381 = vpop.f32.mrb[0].mxu0
    %v2382 = vadd.f32 0.0, %v2381
    %v2383 = vpop.f32.mrb[0].mxu0
    %v2384 = vpop.f32.mrb[0].mxu0
    %v2385 = vpop.f32.mrb[0].mxu0
    %2386 = vdwg.mxu0
    %v2403 = vunpack.c.l.b16 %v2319
    %v2404 = vunpack.c.l.b16 %v2320
    %v2405 = vunpack.c.l.b16 %v2321
    %v2406 = vunpack.c.l.b16 %v2322
    %v2407 = vunpack.c.l.b16 %v2323
    %v2408 = vunpack.c.l.b16 %v2324
    %v2409 = vunpack.c.l.b16 %v2325
    %v2410 = vunpack.c.l.b16 %v2326
    %v2411 = vunpack.c.l.b16 %v2327
    %v2412 = vunpack.c.l.b16 %v2328
    %v2413 = vunpack.c.l.b16 %v2329
    %v2414 = vunpack.c.l.b16 %v2330
    %v2415 = vunpack.c.l.b16 %v2331
    %v2416 = vunpack.c.l.b16 %v2332
    %v2417 = vunpack.c.l.b16 %v2333
    %v2418 = vunpack.c.l.b16 %v2334
    %v2419 = vpack.c.b16 %v2404, %v2403
    %v2420 = vpack.c.b16 %v2406, %v2405
    %v2421 = vpack.c.b16 %v2408, %v2407
    %v2422 = vpack.c.b16 %v2410, %v2409
    %v2423 = vpack.c.b16 %v2412, %v2411
    %v2424 = vpack.c.b16 %v2414, %v2413
    %v2425 = vpack.c.b16 %v2416, %v2415
    %v2426 = vpack.c.b16 %v2418, %v2417
    %2435 = vmatprep.subr.bf16.mxu0 0
    %2436 = vmatpush1.bf16.msra.mxu0 %v2419
    %2437 = vmatprep.subr.bf16.mxu0 0
    %2438 = vmatpush1.bf16.msra.mxu0 %v2420
    %2439 = vmatprep.subr.bf16.mxu0 0
    %2440 = vmatpush1.bf16.msra.mxu0 %v2421
    %2441 = vmatprep.subr.bf16.mxu0 0
    %2442 = vmatpush1.bf16.msra.mxu0 %v2422
    %2443 = vmatprep.subr.bf16.mxu0 0
    %2444 = vmatpush1.bf16.msra.mxu0 %v2423
    %2445 = vmatprep.subr.bf16.mxu0 0
    %2446 = vmatpush1.bf16.msra.mxu0 %v2424
    %2447 = vmatprep.subr.bf16.mxu0 0
    %2448 = vmatpush1.bf16.msra.mxu0 %v2425
    %2449 = vmatprep.subr.bf16.mxu0 0
    %2450 = vmatpush1.bf16.msra.mxu0 %v2426
    %2451 = vmatprep.subr.bf16.mxu0 0
    %2452 = vmatpush1.bf16.msra.mxu0 0
    %2453 = vmatprep.subr.bf16.mxu0 0
    %2454 = vmatpush1.bf16.msra.mxu0 0
    %2455 = vmatprep.subr.bf16.mxu0 0
    %2456 = vmatpush1.bf16.msra.mxu0 0
    %2457 = vmatprep.subr.bf16.mxu0 0
    %2458 = vmatpush1.bf16.msra.mxu0 0
    %2459 = vmatprep.subr.bf16.mxu0 0
    %2460 = vmatpush1.bf16.msra.mxu0 0
    %2461 = vmatprep.subr.bf16.mxu0 0
    %2462 = vmatpush1.bf16.msra.mxu0 0
    %2463 = vmatprep.subr.bf16.mxu0 0
    %2464 = vmatpush1.bf16.msra.mxu0 0
    %2465 = vmatprep.subr.bf16.mxu0 0
    %2466 = vmatpush1.bf16.msra.mxu0 0
    %2467 = vmatprep.mubr.bf16.mxu0 0
    %2468 = vmatmul.mubr.bf16.gmra.mrb[0].mxu0 %v2258
    %v2469 = vpop.f32.mrb[0].mxu0
    %v2470 = vadd.f32 %v2382, %v2469
    %v2471 = vpop.f32.mrb[0].mxu0
    %v2472 = vpop.f32.mrb[0].mxu0
    %v2473 = vpop.f32.mrb[0].mxu0
    %2474 = vdwg.mxu0
    %v2475 = vld [vmem:[%s12] sm:$0x1]
    %v2477 = vlaneseq
    %v2478 = vshrl.u32 %v2477, 7
    %v2479 = vsub.s32 0, %v2478
    %v2480 = vrot.slane %v2475, %v2479
    %v2482 = vadd.f32 %v2470, %v2480
    %v2483 = vtanh.pop %v2482
    %2484 = vst [vmem:[#allocation13] sm:$0x3] %v2483
    // Predicated region
    $region78: #{tpu_custom_call.1} parent=1 // pred_check
      _
    $region79: #{tpu_custom_call.1} parent=1 // pred_check_branch
      %2486 = sbr.rel (0) target = $region81
    $region80: #{tpu_custom_call.1} parent=1 // pred_region
      %s2488 = ssub.s32 32, 32
      %2489 = vsyncadd [#allocation4], %s2488
      %s2491 = sshll.u32 [#allocation13], 4
      %s2492 = int_to_ptr.vmem [resolvable:$true] %s2491
      %2494 = dma.vmem_to_hbm [thread:$0]  %s2492, 32, %s13, [#allocation4]
    $region81: #{tpu_custom_call.1} parent=1 // pred_fallthru
      _
    // Predicated region
    $region82: #{tpu_custom_call.1} parent=1 // pred_check
      _
    $region83: #{tpu_custom_call.1} parent=1 // pred_check_branch
      %2496 = sbr.rel (0) target = $region85
    $region84: #{tpu_custom_call.1} parent=1 // pred_region
      %2497 = dma.done [#allocation4], 32
    $region85: #{tpu_custom_call.1} parent=1 // pred_fallthru
      _
    %2498 = vsyncpa [#allocation3], 1
    %2499 = vsyncpa [#allocation6], 1
    %2500 = vsyncpa [#allocation9], 1
    %2501 = vsyncpa [#allocation12], 1
    %2502 = vsyncpa [#allocation4], 1

</llo_original>
